<compile_context>
chip_gen: v7x
topology: tpu7x:2x2x1
jax: 0.10.0
libtpu: 0.0.40
codegen_flags: <defaults>
</compile_context>

<pallas_src>
import functools
import math

import numpy as np
import jax
import jax.numpy as jnp
from jax import lax
from jax.experimental import pallas as pl
from jax.experimental.pallas import tpu as pltpu  # noqa: F401  (kept for TPU-specific extensions)


# ----------------------------------------------------------------------------
# Pallas kernels
# ----------------------------------------------------------------------------
def _mha_fused_kernel(*refs, n_head, self_attn, eps):
    """Fused multi-head attention sublayer: proj -> attention -> out proj -> add&norm."""
    if self_attn:
        (q_ref, m_ref, wq_ref, wk_ref, wo_ref, g_ref, b_ref, o_ref) = refs
    else:
        (q_ref, kv_ref, m_ref, wq_ref, wk_ref, wo_ref, g_ref, b_ref, o_ref) = refs

    B, Sq, D = q_ref.shape
    dk = D // n_head
    scale = 1.0 / math.sqrt(dk)

    q2 = q_ref[...].reshape(B * Sq, D)                # residual / projection input
    if self_attn:
        Sk = Sq
        kv2 = q2
    else:
        Sk = kv_ref.shape[1]
        kv2 = kv_ref[...].reshape(B * Sk, D)

    mask = m_ref[...]                                 # (B, Sq, Sk) float, 1 == masked

    acc = None                                        # (B*Sq, D) output-projection accumulator
    for h in range(n_head):                           # static unroll over heads
        wq_h = wq_ref[h]                              # (D, dk)
        wk_h = wk_ref[h]                              # (D, dk)
        Qh = jnp.dot(q2, wq_h, preferred_element_type=jnp.float32).reshape(B, Sq, dk)
        Kh = jnp.dot(kv2, wk_h, preferred_element_type=jnp.float32).reshape(B, Sk, dk)
        # Reference bug: V is projected with W_Q. For self-attention V == Q exactly.
        if self_attn:
            Vh = Qh
        else:
            Vh = jnp.dot(kv2, wq_h, preferred_element_type=jnp.float32).reshape(B, Sk, dk)

        s = jnp.einsum("bqd,bkd->bqk", Qh, Kh,
                       preferred_element_type=jnp.float32) * scale      # (B, Sq, Sk)
        s = jnp.where(mask > 0.5, jnp.float32(-1e30), s)
        s = s - jnp.max(s, axis=-1, keepdims=True)
        e = jnp.exp(s)
        p = e * pl.reciprocal(jnp.sum(e, axis=-1, keepdims=True), approx=True)
        ctx = jnp.einsum("bqk,bkd->bqd", p, Vh,
                         preferred_element_type=jnp.float32)            # (B, Sq, dk)
        part = jnp.dot(ctx.reshape(B * Sq, dk), wo_ref[h],
                       preferred_element_type=jnp.float32)              # (B*Sq, D)
        acc = part if acc is None else acc + part

    # add & LayerNorm (post-norm, biased variance like torch LayerNorm)
    x = acc + q2
    mean = jnp.mean(x, axis=-1, keepdims=True)
    var = jnp.mean((x - mean) ** 2, axis=-1, keepdims=True)
    xn = (x - mean) * lax.rsqrt(var + eps)
    o_ref[...] = (xn * g_ref[...] + b_ref[...]).reshape(B, Sq, D)


def _ffn_fused_kernel(x_ref, w1_ref, b1_ref, w2_ref, b2_ref, g_ref, b_ref, o_ref, *, eps):
    """Fused feedforward sublayer: w1 + ReLU + w2 + add&LayerNorm."""
    B, S, D = x_ref.shape
    x2 = x_ref[...].reshape(B * S, D)
    h = jnp.dot(x2, w1_ref[...], preferred_element_type=jnp.float32) + b1_ref[...]
    h = jnp.maximum(h, 0.0)
    y = jnp.dot(h, w2_ref[...], preferred_element_type=jnp.float32) + b2_ref[...]
    x = y + x2
    mean = jnp.mean(x, axis=-1, keepdims=True)
    var = jnp.mean((x - mean) ** 2, axis=-1, keepdims=True)
    xn = (x - mean) * lax.rsqrt(var + eps)
    o_ref[...] = (xn * g_ref[...] + b_ref[...]).reshape(B, S, D)


def _generator_kernel(x_ref, w_ref, b_ref, o_ref):
    """Final linear projection to the (lane-padded) vocabulary."""
    o_ref[...] = jnp.dot(x_ref[...], w_ref[...],
                         preferred_element_type=jnp.float32) + b_ref[...]


# ----------------------------------------------------------------------------
# Kernel wrappers
# ----------------------------------------------------------------------------
def mha_block(p, q_in, kv_in, mask, n_head, self_attn):
    """q_in: (B, Sq, D); kv_in: (B, Sk, D) or None for self-attention."""
    B, Sq, D = q_in.shape
    Sk = Sq if self_attn else kv_in.shape[1]
    if mask is None:
        mask_f = jnp.zeros((B, Sq, Sk), jnp.float32)
    else:
        mask_f = jnp.broadcast_to(mask, (B, Sq, Sk)).astype(jnp.float32)

    args = [q_in] if self_attn else [q_in, kv_in]
    args += [mask_f, p["W_Q_h"], p["W_K_h"], p["W_O_h"], p["norm_g"], p["norm_b"]]

    return pl.pallas_call(
        functools.partial(_mha_fused_kernel, n_head=n_head,
                          self_attn=self_attn, eps=1e-5),
        out_shape=jax.ShapeDtypeStruct((B, Sq, D), jnp.float32),
    )(*args)


def ffn_block(p, x):
    B, S, D = x.shape
    return pl.pallas_call(
        functools.partial(_ffn_fused_kernel, eps=1e-5),
        out_shape=jax.ShapeDtypeStruct((B, S, D), jnp.float32),
    )(x, p["w1"], p["b1"], p["w2"], p["b2"], p["norm_g"], p["norm_b"])


def generator_block(x2d, w, b):
    M, D = x2d.shape
    Vp = w.shape[1]
    return pl.pallas_call(
        _generator_kernel,
        out_shape=jax.ShapeDtypeStruct((M, Vp), jnp.float32),
    )(x2d, w, b)


# ----------------------------------------------------------------------------
# Model glue (plain JAX)
# ----------------------------------------------------------------------------
def positional_encoding(d_model, max_len):
    position = np.arange(max_len)[:, None].astype(np.float64)
    div_term = np.exp(np.arange(0, d_model, 2).astype(np.float64) * -(np.log(10000.0) / d_model))
    pe = np.zeros((max_len, d_model), np.float32)
    pe[:, 0::2] = np.sin(position * div_term)
    pe[:, 1::2] = np.cos(position * div_term)
    return jnp.asarray(pe)


def embed(lut, ids, d_model, pe):
    x = jnp.take(lut, ids, axis=0) * math.sqrt(d_model)
    return x + pe[: ids.shape[1]][None]


@functools.partial(jax.jit, static_argnames=("n_head", "tgt_vocab"))
def transformer_forward(params, src_x, src_mask, tgt_x, tgt_mask, *, n_head, tgt_vocab):
    # TODO(synk): nn.Dropout layers are treated as identity (deterministic eval-mode forward).
    d_model = params["enc_emb"].shape[1]

    # ---- encoder ----
    x = embed(params["enc_emb"], src_x, d_model, params["pe"])
    for lp in params["enc_layers"]:
        x = mha_block(lp["mha"], x, None, src_mask, n_head, self_attn=True)
        x = ffn_block(lp["fnn"], x)
    memory = x

    # ---- decoder ----
    y = embed(params["dec_emb"], tgt_x, d_model, params["pe"])
    for lp in params["dec_layers"]:
        y = mha_block(lp["self_mha"], y, None, tgt_mask, n_head, self_attn=True)
        y = mha_block(lp["mha"], y, memory, src_mask, n_head, self_attn=False)
        y = ffn_block(lp["fnn"], y)

    # ---- generator (lane-padded vocab, sliced back) ----
    B, St, D = y.shape
    logits_p = generator_block(y.reshape(B * St, D), params["gen_w"], params["gen_b"])
    return logits_p[:, :tgt_vocab].reshape(B, St, tgt_vocab)


# ----------------------------------------------------------------------------
# Deterministic parameter initialization (layouts pre-transposed / per-head split)
# ----------------------------------------------------------------------------
def _uniform(key, shape, bound):
    return jax.random.uniform(key, shape, jnp.float32, -bound, bound)


def init_mha_params(key, d_model, n_head):
    dk = d_model // n_head
    ks = jax.random.split(key, 4)
    bnd = 1.0 / math.sqrt(d_model)
    wq = _uniform(ks[0], (d_model, d_model), bnd)           # stored (in, out)
    wk = _uniform(ks[1], (d_model, d_model), bnd)
    wv = _uniform(ks[2], (d_model, d_model), bnd)           # present for parity; unused (ref bug)
    wo = _uniform(ks[3], (d_model, d_model), bnd)
    return {
        "W_Q_h": wq.reshape(d_model, n_head, dk).transpose(1, 0, 2),   # (H, D, dk)
        "W_K_h": wk.reshape(d_model, n_head, dk).transpose(1, 0, 2),   # (H, D, dk)
        "W_V": wv,
        "W_O_h": wo.reshape(n_head, dk, d_model),                      # (H, dk, D)
        "norm_g": jnp.ones((1, d_model), jnp.float32),
        "norm_b": jnp.zeros((1, d_model), jnp.float32),
    }


def init_ffn_params(key, d_model, d_ff):
    ks = jax.random.split(key, 4)
    b1 = 1.0 / math.sqrt(d_model)
    b2 = 1.0 / math.sqrt(d_ff)
    return {"w1": _uniform(ks[0], (d_model, d_ff), b1),     # (in, out)
            "b1": _uniform(ks[1], (1, d_ff), b1),
            "w2": _uniform(ks[2], (d_ff, d_model), b2),     # (in, out)
            "b2": _uniform(ks[3], (1, d_model), b2),
            "norm_g": jnp.ones((1, d_model), jnp.float32),
            "norm_b": jnp.zeros((1, d_model), jnp.float32)}


def init_transformer(key, src_vocab, tgt_vocab, d_model, n_head, d_ff, N, max_len=64):
    keys = jax.random.split(key, 4 + 5 * N)
    ki = iter(keys)
    bnd = 1.0 / math.sqrt(d_model)

    # generator weights, padded to a lane-dense multiple of 128 along the vocab axis
    v_pad = ((tgt_vocab + 127) // 128) * 128
    gw = _uniform(next(ki), (d_model, tgt_vocab), bnd)
    gb = _uniform(next(ki), (tgt_vocab,), bnd)
    gen_w = jnp.zeros((d_model, v_pad), jnp.float32).at[:, :tgt_vocab].set(gw)
    gen_b = jnp.zeros((1, v_pad), jnp.float32).at[0, :tgt_vocab].set(gb)

    params = {
        "pe": positional_encoding(d_model, max_len),
        "enc_emb": jax.random.normal(next(ki), (src_vocab, d_model), jnp.float32),
        "dec_emb": jax.random.normal(next(ki), (tgt_vocab, d_model), jnp.float32),
        "gen_w": gen_w,
        "gen_b": gen_b,
    }
    params["enc_layers"] = [{"mha": init_mha_params(next(ki), d_model, n_head),
                             "fnn": init_ffn_params(next(ki), d_model, d_ff)}
                            for _ in range(N)]
    params["dec_layers"] = [{"self_mha": init_mha_params(next(ki), d_model, n_head),
                             "mha": init_mha_params(next(ki), d_model, n_head),
                             "fnn": init_ffn_params(next(ki), d_model, d_ff)}
                            for _ in range(N)]
    return params


# ----------------------------------------------------------------------------
# Main
# ----------------------------------------------------------------------------
if __name__ == "__main__":
    key = jax.random.PRNGKey(0)
    k_param, k_src, k_tgt = jax.random.split(key, 3)

    src_vocab, tgt_vocab = 50, 60
    d_model, n_head, d_ff, N = 32, 4, 64, 2
    B, Ss, St = 2, 8, 8

    params = init_transformer(k_param, src_vocab, tgt_vocab, d_model, n_head, d_ff, N)

    src_x = jax.random.randint(k_src, (B, Ss), 0, src_vocab)
    tgt_x = jax.random.randint(k_tgt, (B, St), 0, tgt_vocab)

    # src padding mask: (B, 1, Ss); 1 == masked (mask last src position of batch 1)
    src_mask = jnp.zeros((B, 1, Ss), jnp.float32).at[1, 0, Ss - 1].set(1.0)
    # tgt causal mask: (B, St, St); 1 above the diagonal == masked
    tgt_mask = jnp.broadcast_to(jnp.triu(jnp.ones((St, St), jnp.float32), k=1), (B, St, St))

    out = transformer_forward(params, src_x, src_mask, tgt_x, tgt_mask,
                              n_head=n_head, tgt_vocab=tgt_vocab)
    out = jax.block_until_ready(out)

    assert out.shape == (B, St, tgt_vocab), out.shape
    assert bool(jnp.all(jnp.isfinite(out)))
    print("KERNEL_OK")
</pallas_src>

<mosaic_0001>
module attributes {stable_mosaic.version = 11 : i64} {
  func.func @_mha_fused_kernel(%arg0: memref<2x8x32xf32, #tpu.memory_space<vmem>>, %arg1: memref<2x8x8xf32, #tpu.memory_space<vmem>>, %arg2: memref<4x32x8xf32, #tpu.memory_space<vmem>>, %arg3: memref<4x32x8xf32, #tpu.memory_space<vmem>>, %arg4: memref<4x8x32xf32, #tpu.memory_space<vmem>>, %arg5: memref<1x32xf32, #tpu.memory_space<vmem>>, %arg6: memref<1x32xf32, #tpu.memory_space<vmem>>, %arg7: memref<2x8x32xf32, #tpu.memory_space<vmem>>) attributes {dimension_semantics = [], scalar_prefetch = 0 : i64, scratch_operands = 0 : i64, tpu.core_type = #tpu.core_type<tc>} {
    %c0 = arith.constant 0 : index
    %c0_0 = arith.constant 0 : index
    %c0_1 = arith.constant 0 : index
    %0 = vector.load %arg0[%c0, %c0_0, %c0_1] : memref<2x8x32xf32, #tpu.memory_space<vmem>>, vector<2x8x32xf32>
    %1 = vector.shape_cast %0 : vector<2x8x32xf32> to vector<16x32xf32>
    %c0_2 = arith.constant 0 : index
    %c0_3 = arith.constant 0 : index
    %c0_4 = arith.constant 0 : index
    %2 = vector.load %arg1[%c0_2, %c0_3, %c0_4] : memref<2x8x8xf32, #tpu.memory_space<vmem>>, vector<2x8x8xf32>
    %c0_5 = arith.constant 0 : index
    %c0_6 = arith.constant 0 : index
    %c0_7 = arith.constant 0 : index
    %3 = vector.load %arg2[%c0_5, %c0_6, %c0_7] : memref<4x32x8xf32, #tpu.memory_space<vmem>>, vector<1x32x8xf32>
    %4 = vector.shape_cast %3 : vector<1x32x8xf32> to vector<32x8xf32>
    %c0_8 = arith.constant 0 : index
    %c0_9 = arith.constant 0 : index
    %c0_10 = arith.constant 0 : index
    %5 = vector.load %arg3[%c0_8, %c0_9, %c0_10] : memref<4x32x8xf32, #tpu.memory_space<vmem>>, vector<1x32x8xf32>
    %6 = vector.shape_cast %5 : vector<1x32x8xf32> to vector<32x8xf32>
    %cst = arith.constant dense<0.000000e+00> : vector<16x8xf32>
    %7 = tpu.matmul %1, %4, %cst {dimension_numbers = #tpu.dot_dimension_numbers<[1], [0], [0], [1], [0, 0, 1, 1], [], []>} : vector<16x32xf32>, vector<32x8xf32>, vector<16x8xf32> -> vector<16x8xf32>
    %8 = vector.shape_cast %7 : vector<16x8xf32> to vector<2x8x8xf32>
    %cst_11 = arith.constant dense<0.000000e+00> : vector<16x8xf32>
    %9 = tpu.matmul %1, %6, %cst_11 {dimension_numbers = #tpu.dot_dimension_numbers<[1], [0], [0], [1], [0, 0, 1, 1], [], []>} : vector<16x32xf32>, vector<32x8xf32>, vector<16x8xf32> -> vector<16x8xf32>
    %10 = vector.shape_cast %9 : vector<16x8xf32> to vector<2x8x8xf32>
    "tpu.trace_start"() <{level = 10 : i32, message = "bqd,bkd->bqk"}> : () -> ()
    %cst_12 = arith.constant dense<0.000000e+00> : vector<2x8x8xf32>
    %11 = tpu.matmul %8, %10, %cst_12 {dimension_numbers = #tpu.dot_dimension_numbers<[2], [2], [1], [1], [0, 0, 0, 1, 1, 1], [0], [0]>} : vector<2x8x8xf32>, vector<2x8x8xf32>, vector<2x8x8xf32> -> vector<2x8x8xf32>
    "tpu.trace_stop"() : () -> ()
    %cst_13 = arith.constant 0.353553385 : f32
    %12 = vector.broadcast %cst_13 : f32 to vector<2x8x8xf32>
    %13 = arith.mulf %11, %12 : vector<2x8x8xf32>
    %cst_14 = arith.constant 5.000000e-01 : f32
    %14 = vector.broadcast %cst_14 : f32 to vector<2x8x8xf32>
    %15 = arith.cmpf ogt, %2, %14 : vector<2x8x8xf32>
    %cst_15 = arith.constant -1.000000e+30 : f32
    %16 = vector.broadcast %cst_15 : f32 to vector<2x8x8xf32>
    %17 = arith.select %15, %16, %13 : vector<2x8x8xi1>, vector<2x8x8xf32>
    %cst_16 = arith.constant dense<0xFF800000> : vector<2x8xf32>
    %18 = vector.multi_reduction <maximumf>, %17, %cst_16 [2] : vector<2x8x8xf32> to vector<2x8xf32>
    %19 = vector.shape_cast %18 : vector<2x8xf32> to vector<2x8x1xf32>
    %20 = vector.broadcast %19 : vector<2x8x1xf32> to vector<2x8x8xf32>
    %21 = arith.subf %17, %20 : vector<2x8x8xf32>
    %22 = math.exp %21 : vector<2x8x8xf32>
    %cst_17 = arith.constant dense<0.000000e+00> : vector<2x8xf32>
    %23 = vector.multi_reduction <add>, %22, %cst_17 [2] : vector<2x8x8xf32> to vector<2x8xf32>
    %24 = vector.shape_cast %23 : vector<2x8xf32> to vector<2x8x1xf32>
    %25 = tpu.reciprocal %24 {approx = true} : vector<2x8x1xf32> -> vector<2x8x1xf32>
    %26 = vector.broadcast %25 : vector<2x8x1xf32> to vector<2x8x8xf32>
    %27 = arith.mulf %22, %26 : vector<2x8x8xf32>
    "tpu.trace_start"() <{level = 10 : i32, message = "bqk,bkd->bqd"}> : () -> ()
    %cst_18 = arith.constant dense<0.000000e+00> : vector<2x8x8xf32>
    %28 = tpu.matmul %27, %8, %cst_18 {dimension_numbers = #tpu.dot_dimension_numbers<[2], [1], [1], [2], [0, 0, 0, 1, 1, 2], [0], [0]>} : vector<2x8x8xf32>, vector<2x8x8xf32>, vector<2x8x8xf32> -> vector<2x8x8xf32>
    "tpu.trace_stop"() : () -> ()
    %29 = vector.shape_cast %28 : vector<2x8x8xf32> to vector<16x8xf32>
    %c0_19 = arith.constant 0 : index
    %c0_20 = arith.constant 0 : index
    %c0_21 = arith.constant 0 : index
    %30 = vector.load %arg4[%c0_19, %c0_20, %c0_21] : memref<4x8x32xf32, #tpu.memory_space<vmem>>, vector<1x8x32xf32>
    %31 = vector.shape_cast %30 : vector<1x8x32xf32> to vector<8x32xf32>
    %cst_22 = arith.constant dense<0.000000e+00> : vector<16x32xf32>
    %32 = tpu.matmul %29, %31, %cst_22 {dimension_numbers = #tpu.dot_dimension_numbers<[1], [0], [0], [1], [0, 0, 1, 1], [], []>} : vector<16x8xf32>, vector<8x32xf32>, vector<16x32xf32> -> vector<16x32xf32>
    %c1 = arith.constant 1 : index
    %c0_23 = arith.constant 0 : index
    %c0_24 = arith.constant 0 : index
    %33 = vector.load %arg2[%c1, %c0_23, %c0_24] : memref<4x32x8xf32, #tpu.memory_space<vmem>>, vector<1x32x8xf32>
    %34 = vector.shape_cast %33 : vector<1x32x8xf32> to vector<32x8xf32>
    %c1_25 = arith.constant 1 : index
    %c0_26 = arith.constant 0 : index
    %c0_27 = arith.constant 0 : index
    %35 = vector.load %arg3[%c1_25, %c0_26, %c0_27] : memref<4x32x8xf32, #tpu.memory_space<vmem>>, vector<1x32x8xf32>
    %36 = vector.shape_cast %35 : vector<1x32x8xf32> to vector<32x8xf32>
    %cst_28 = arith.constant dense<0.000000e+00> : vector<16x8xf32>
    %37 = tpu.matmul %1, %34, %cst_28 {dimension_numbers = #tpu.dot_dimension_numbers<[1], [0], [0], [1], [0, 0, 1, 1], [], []>} : vector<16x32xf32>, vector<32x8xf32>, vector<16x8xf32> -> vector<16x8xf32>
    %38 = vector.shape_cast %37 : vector<16x8xf32> to vector<2x8x8xf32>
    %cst_29 = arith.constant dense<0.000000e+00> : vector<16x8xf32>
    %39 = tpu.matmul %1, %36, %cst_29 {dimension_numbers = #tpu.dot_dimension_numbers<[1], [0], [0], [1], [0, 0, 1, 1], [], []>} : vector<16x32xf32>, vector<32x8xf32>, vector<16x8xf32> -> vector<16x8xf32>
    %40 = vector.shape_cast %39 : vector<16x8xf32> to vector<2x8x8xf32>
    "tpu.trace_start"() <{level = 10 : i32, message = "bqd,bkd->bqk"}> : () -> ()
    %cst_30 = arith.constant dense<0.000000e+00> : vector<2x8x8xf32>
    %41 = tpu.matmul %38, %40, %cst_30 {dimension_numbers = #tpu.dot_dimension_numbers<[2], [2], [1], [1], [0, 0, 0, 1, 1, 1], [0], [0]>} : vector<2x8x8xf32>, vector<2x8x8xf32>, vector<2x8x8xf32> -> vector<2x8x8xf32>
    "tpu.trace_stop"() : () -> ()
    %cst_31 = arith.constant 0.353553385 : f32
    %42 = vector.broadcast %cst_31 : f32 to vector<2x8x8xf32>
    %43 = arith.mulf %41, %42 : vector<2x8x8xf32>
    %cst_32 = arith.constant 5.000000e-01 : f32
    %44 = vector.broadcast %cst_32 : f32 to vector<2x8x8xf32>
    %45 = arith.cmpf ogt, %2, %44 : vector<2x8x8xf32>
    %cst_33 = arith.constant -1.000000e+30 : f32
    %46 = vector.broadcast %cst_33 : f32 to vector<2x8x8xf32>
    %47 = arith.select %45, %46, %43 : vector<2x8x8xi1>, vector<2x8x8xf32>
    %cst_34 = arith.constant dense<0xFF800000> : vector<2x8xf32>
    %48 = vector.multi_reduction <maximumf>, %47, %cst_34 [2] : vector<2x8x8xf32> to vector<2x8xf32>
    %49 = vector.shape_cast %48 : vector<2x8xf32> to vector<2x8x1xf32>
    %50 = vector.broadcast %49 : vector<2x8x1xf32> to vector<2x8x8xf32>
    %51 = arith.subf %47, %50 : vector<2x8x8xf32>
    %52 = math.exp %51 : vector<2x8x8xf32>
    %cst_35 = arith.constant dense<0.000000e+00> : vector<2x8xf32>
    %53 = vector.multi_reduction <add>, %52, %cst_35 [2] : vector<2x8x8xf32> to vector<2x8xf32>
    %54 = vector.shape_cast %53 : vector<2x8xf32> to vector<2x8x1xf32>
    %55 = tpu.reciprocal %54 {approx = true} : vector<2x8x1xf32> -> vector<2x8x1xf32>
    %56 = vector.broadcast %55 : vector<2x8x1xf32> to vector<2x8x8xf32>
    %57 = arith.mulf %52, %56 : vector<2x8x8xf32>
    "tpu.trace_start"() <{level = 10 : i32, message = "bqk,bkd->bqd"}> : () -> ()
    %cst_36 = arith.constant dense<0.000000e+00> : vector<2x8x8xf32>
    %58 = tpu.matmul %57, %38, %cst_36 {dimension_numbers = #tpu.dot_dimension_numbers<[2], [1], [1], [2], [0, 0, 0, 1, 1, 2], [0], [0]>} : vector<2x8x8xf32>, vector<2x8x8xf32>, vector<2x8x8xf32> -> vector<2x8x8xf32>
    "tpu.trace_stop"() : () -> ()
    %59 = vector.shape_cast %58 : vector<2x8x8xf32> to vector<16x8xf32>
    %c1_37 = arith.constant 1 : index
    %c0_38 = arith.constant 0 : index
    %c0_39 = arith.constant 0 : index
    %60 = vector.load %arg4[%c1_37, %c0_38, %c0_39] : memref<4x8x32xf32, #tpu.memory_space<vmem>>, vector<1x8x32xf32>
    %61 = vector.shape_cast %60 : vector<1x8x32xf32> to vector<8x32xf32>
    %cst_40 = arith.constant dense<0.000000e+00> : vector<16x32xf32>
    %62 = tpu.matmul %59, %61, %cst_40 {dimension_numbers = #tpu.dot_dimension_numbers<[1], [0], [0], [1], [0, 0, 1, 1], [], []>} : vector<16x8xf32>, vector<8x32xf32>, vector<16x32xf32> -> vector<16x32xf32>
    %63 = arith.addf %32, %62 : vector<16x32xf32>
    %c2 = arith.constant 2 : index
    %c0_41 = arith.constant 0 : index
    %c0_42 = arith.constant 0 : index
    %64 = vector.load %arg2[%c2, %c0_41, %c0_42] : memref<4x32x8xf32, #tpu.memory_space<vmem>>, vector<1x32x8xf32>
    %65 = vector.shape_cast %64 : vector<1x32x8xf32> to vector<32x8xf32>
    %c2_43 = arith.constant 2 : index
    %c0_44 = arith.constant 0 : index
    %c0_45 = arith.constant 0 : index
    %66 = vector.load %arg3[%c2_43, %c0_44, %c0_45] : memref<4x32x8xf32, #tpu.memory_space<vmem>>, vector<1x32x8xf32>
    %67 = vector.shape_cast %66 : vector<1x32x8xf32> to vector<32x8xf32>
    %cst_46 = arith.constant dense<0.000000e+00> : vector<16x8xf32>
    %68 = tpu.matmul %1, %65, %cst_46 {dimension_numbers = #tpu.dot_dimension_numbers<[1], [0], [0], [1], [0, 0, 1, 1], [], []>} : vector<16x32xf32>, vector<32x8xf32>, vector<16x8xf32> -> vector<16x8xf32>
    %69 = vector.shape_cast %68 : vector<16x8xf32> to vector<2x8x8xf32>
    %cst_47 = arith.constant dense<0.000000e+00> : vector<16x8xf32>
    %70 = tpu.matmul %1, %67, %cst_47 {dimension_numbers = #tpu.dot_dimension_numbers<[1], [0], [0], [1], [0, 0, 1, 1], [], []>} : vector<16x32xf32>, vector<32x8xf32>, vector<16x8xf32> -> vector<16x8xf32>
    %71 = vector.shape_cast %70 : vector<16x8xf32> to vector<2x8x8xf32>
    "tpu.trace_start"() <{level = 10 : i32, message = "bqd,bkd->bqk"}> : () -> ()
    %cst_48 = arith.constant dense<0.000000e+00> : vector<2x8x8xf32>
    %72 = tpu.matmul %69, %71, %cst_48 {dimension_numbers = #tpu.dot_dimension_numbers<[2], [2], [1], [1], [0, 0, 0, 1, 1, 1], [0], [0]>} : vector<2x8x8xf32>, vector<2x8x8xf32>, vector<2x8x8xf32> -> vector<2x8x8xf32>
    "tpu.trace_stop"() : () -> ()
    %cst_49 = arith.constant 0.353553385 : f32
    %73 = vector.broadcast %cst_49 : f32 to vector<2x8x8xf32>
    %74 = arith.mulf %72, %73 : vector<2x8x8xf32>
    %cst_50 = arith.constant 5.000000e-01 : f32
    %75 = vector.broadcast %cst_50 : f32 to vector<2x8x8xf32>
    %76 = arith.cmpf ogt, %2, %75 : vector<2x8x8xf32>
    %cst_51 = arith.constant -1.000000e+30 : f32
    %77 = vector.broadcast %cst_51 : f32 to vector<2x8x8xf32>
    %78 = arith.select %76, %77, %74 : vector<2x8x8xi1>, vector<2x8x8xf32>
    %cst_52 = arith.constant dense<0xFF800000> : vector<2x8xf32>
    %79 = vector.multi_reduction <maximumf>, %78, %cst_52 [2] : vector<2x8x8xf32> to vector<2x8xf32>
    %80 = vector.shape_cast %79 : vector<2x8xf32> to vector<2x8x1xf32>
    %81 = vector.broadcast %80 : vector<2x8x1xf32> to vector<2x8x8xf32>
    %82 = arith.subf %78, %81 : vector<2x8x8xf32>
    %83 = math.exp %82 : vector<2x8x8xf32>
    %cst_53 = arith.constant dense<0.000000e+00> : vector<2x8xf32>
    %84 = vector.multi_reduction <add>, %83, %cst_53 [2] : vector<2x8x8xf32> to vector<2x8xf32>
    %85 = vector.shape_cast %84 : vector<2x8xf32> to vector<2x8x1xf32>
    %86 = tpu.reciprocal %85 {approx = true} : vector<2x8x1xf32> -> vector<2x8x1xf32>
    %87 = vector.broadcast %86 : vector<2x8x1xf32> to vector<2x8x8xf32>
    %88 = arith.mulf %83, %87 : vector<2x8x8xf32>
    "tpu.trace_start"() <{level = 10 : i32, message = "bqk,bkd->bqd"}> : () -> ()
    %cst_54 = arith.constant dense<0.000000e+00> : vector<2x8x8xf32>
    %89 = tpu.matmul %88, %69, %cst_54 {dimension_numbers = #tpu.dot_dimension_numbers<[2], [1], [1], [2], [0, 0, 0, 1, 1, 2], [0], [0]>} : vector<2x8x8xf32>, vector<2x8x8xf32>, vector<2x8x8xf32> -> vector<2x8x8xf32>
    "tpu.trace_stop"() : () -> ()
    %90 = vector.shape_cast %89 : vector<2x8x8xf32> to vector<16x8xf32>
    %c2_55 = arith.constant 2 : index
    %c0_56 = arith.constant 0 : index
    %c0_57 = arith.constant 0 : index
    %91 = vector.load %arg4[%c2_55, %c0_56, %c0_57] : memref<4x8x32xf32, #tpu.memory_space<vmem>>, vector<1x8x32xf32>
    %92 = vector.shape_cast %91 : vector<1x8x32xf32> to vector<8x32xf32>
    %cst_58 = arith.constant dense<0.000000e+00> : vector<16x32xf32>
    %93 = tpu.matmul %90, %92, %cst_58 {dimension_numbers = #tpu.dot_dimension_numbers<[1], [0], [0], [1], [0, 0, 1, 1], [], []>} : vector<16x8xf32>, vector<8x32xf32>, vector<16x32xf32> -> vector<16x32xf32>
    %94 = arith.addf %63, %93 : vector<16x32xf32>
    %c3 = arith.constant 3 : index
    %c0_59 = arith.constant 0 : index
    %c0_60 = arith.constant 0 : index
    %95 = vector.load %arg2[%c3, %c0_59, %c0_60] : memref<4x32x8xf32, #tpu.memory_space<vmem>>, vector<1x32x8xf32>
    %96 = vector.shape_cast %95 : vector<1x32x8xf32> to vector<32x8xf32>
    %c3_61 = arith.constant 3 : index
    %c0_62 = arith.constant 0 : index
    %c0_63 = arith.constant 0 : index
    %97 = vector.load %arg3[%c3_61, %c0_62, %c0_63] : memref<4x32x8xf32, #tpu.memory_space<vmem>>, vector<1x32x8xf32>
    %98 = vector.shape_cast %97 : vector<1x32x8xf32> to vector<32x8xf32>
    %cst_64 = arith.constant dense<0.000000e+00> : vector<16x8xf32>
    %99 = tpu.matmul %1, %96, %cst_64 {dimension_numbers = #tpu.dot_dimension_numbers<[1], [0], [0], [1], [0, 0, 1, 1], [], []>} : vector<16x32xf32>, vector<32x8xf32>, vector<16x8xf32> -> vector<16x8xf32>
    %100 = vector.shape_cast %99 : vector<16x8xf32> to vector<2x8x8xf32>
    %cst_65 = arith.constant dense<0.000000e+00> : vector<16x8xf32>
    %101 = tpu.matmul %1, %98, %cst_65 {dimension_numbers = #tpu.dot_dimension_numbers<[1], [0], [0], [1], [0, 0, 1, 1], [], []>} : vector<16x32xf32>, vector<32x8xf32>, vector<16x8xf32> -> vector<16x8xf32>
    %102 = vector.shape_cast %101 : vector<16x8xf32> to vector<2x8x8xf32>
    "tpu.trace_start"() <{level = 10 : i32, message = "bqd,bkd->bqk"}> : () -> ()
    %cst_66 = arith.constant dense<0.000000e+00> : vector<2x8x8xf32>
    %103 = tpu.matmul %100, %102, %cst_66 {dimension_numbers = #tpu.dot_dimension_numbers<[2], [2], [1], [1], [0, 0, 0, 1, 1, 1], [0], [0]>} : vector<2x8x8xf32>, vector<2x8x8xf32>, vector<2x8x8xf32> -> vector<2x8x8xf32>
    "tpu.trace_stop"() : () -> ()
    %cst_67 = arith.constant 0.353553385 : f32
    %104 = vector.broadcast %cst_67 : f32 to vector<2x8x8xf32>
    %105 = arith.mulf %103, %104 : vector<2x8x8xf32>
    %cst_68 = arith.constant 5.000000e-01 : f32
    %106 = vector.broadcast %cst_68 : f32 to vector<2x8x8xf32>
    %107 = arith.cmpf ogt, %2, %106 : vector<2x8x8xf32>
    %cst_69 = arith.constant -1.000000e+30 : f32
    %108 = vector.broadcast %cst_69 : f32 to vector<2x8x8xf32>
    %109 = arith.select %107, %108, %105 : vector<2x8x8xi1>, vector<2x8x8xf32>
    %cst_70 = arith.constant dense<0xFF800000> : vector<2x8xf32>
    %110 = vector.multi_reduction <maximumf>, %109, %cst_70 [2] : vector<2x8x8xf32> to vector<2x8xf32>
    %111 = vector.shape_cast %110 : vector<2x8xf32> to vector<2x8x1xf32>
    %112 = vector.broadcast %111 : vector<2x8x1xf32> to vector<2x8x8xf32>
    %113 = arith.subf %109, %112 : vector<2x8x8xf32>
    %114 = math.exp %113 : vector<2x8x8xf32>
    %cst_71 = arith.constant dense<0.000000e+00> : vector<2x8xf32>
    %115 = vector.multi_reduction <add>, %114, %cst_71 [2] : vector<2x8x8xf32> to vector<2x8xf32>
    %116 = vector.shape_cast %115 : vector<2x8xf32> to vector<2x8x1xf32>
    %117 = tpu.reciprocal %116 {approx = true} : vector<2x8x1xf32> -> vector<2x8x1xf32>
    %118 = vector.broadcast %117 : vector<2x8x1xf32> to vector<2x8x8xf32>
    %119 = arith.mulf %114, %118 : vector<2x8x8xf32>
    "tpu.trace_start"() <{level = 10 : i32, message = "bqk,bkd->bqd"}> : () -> ()
    %cst_72 = arith.constant dense<0.000000e+00> : vector<2x8x8xf32>
    %120 = tpu.matmul %119, %100, %cst_72 {dimension_numbers = #tpu.dot_dimension_numbers<[2], [1], [1], [2], [0, 0, 0, 1, 1, 2], [0], [0]>} : vector<2x8x8xf32>, vector<2x8x8xf32>, vector<2x8x8xf32> -> vector<2x8x8xf32>
    "tpu.trace_stop"() : () -> ()
    %121 = vector.shape_cast %120 : vector<2x8x8xf32> to vector<16x8xf32>
    %c3_73 = arith.constant 3 : index
    %c0_74 = arith.constant 0 : index
    %c0_75 = arith.constant 0 : index
    %122 = vector.load %arg4[%c3_73, %c0_74, %c0_75] : memref<4x8x32xf32, #tpu.memory_space<vmem>>, vector<1x8x32xf32>
    %123 = vector.shape_cast %122 : vector<1x8x32xf32> to vector<8x32xf32>
    %cst_76 = arith.constant dense<0.000000e+00> : vector<16x32xf32>
    %124 = tpu.matmul %121, %123, %cst_76 {dimension_numbers = #tpu.dot_dimension_numbers<[1], [0], [0], [1], [0, 0, 1, 1], [], []>} : vector<16x8xf32>, vector<8x32xf32>, vector<16x32xf32> -> vector<16x32xf32>
    %125 = arith.addf %94, %124 : vector<16x32xf32>
    %126 = arith.addf %125, %1 : vector<16x32xf32>
    %cst_77 = arith.constant dense<0.000000e+00> : vector<16xf32>
    %127 = vector.multi_reduction <add>, %126, %cst_77 [1] : vector<16x32xf32> to vector<16xf32>
    %128 = vector.shape_cast %127 : vector<16xf32> to vector<16x1xf32>
    %cst_78 = arith.constant 3.200000e+01 : f32
    %129 = vector.broadcast %cst_78 : f32 to vector<16x1xf32>
    %130 = arith.divf %128, %129 : vector<16x1xf32>
    %131 = vector.broadcast %130 : vector<16x1xf32> to vector<16x32xf32>
    %132 = arith.subf %126, %131 : vector<16x32xf32>
    %133 = arith.mulf %132, %132 : vector<16x32xf32>
    %cst_79 = arith.constant dense<0.000000e+00> : vector<16xf32>
    %134 = vector.multi_reduction <add>, %133, %cst_79 [1] : vector<16x32xf32> to vector<16xf32>
    %135 = vector.shape_cast %134 : vector<16xf32> to vector<16x1xf32>
    %cst_80 = arith.constant 3.200000e+01 : f32
    %136 = vector.broadcast %cst_80 : f32 to vector<16x1xf32>
    %137 = arith.divf %135, %136 : vector<16x1xf32>
    %138 = vector.broadcast %130 : vector<16x1xf32> to vector<16x32xf32>
    %139 = arith.subf %126, %138 : vector<16x32xf32>
    %cst_81 = arith.constant 9.99999974E-6 : f32
    %140 = vector.broadcast %cst_81 : f32 to vector<16x1xf32>
    %141 = arith.addf %137, %140 : vector<16x1xf32>
    %142 = math.rsqrt %141 : vector<16x1xf32>
    %143 = vector.broadcast %142 : vector<16x1xf32> to vector<16x32xf32>
    %144 = arith.mulf %139, %143 : vector<16x32xf32>
    %c0_82 = arith.constant 0 : index
    %c0_83 = arith.constant 0 : index
    %145 = vector.load %arg5[%c0_82, %c0_83] : memref<1x32xf32, #tpu.memory_space<vmem>>, vector<1x32xf32>
    %146 = vector.broadcast %145 : vector<1x32xf32> to vector<16x32xf32>
    %147 = arith.mulf %144, %146 : vector<16x32xf32>
    %c0_84 = arith.constant 0 : index
    %c0_85 = arith.constant 0 : index
    %148 = vector.load %arg6[%c0_84, %c0_85] : memref<1x32xf32, #tpu.memory_space<vmem>>, vector<1x32xf32>
    %149 = vector.broadcast %148 : vector<1x32xf32> to vector<16x32xf32>
    %150 = arith.addf %147, %149 : vector<16x32xf32>
    %151 = vector.shape_cast %150 : vector<16x32xf32> to vector<2x8x32xf32>
    %c0_86 = arith.constant 0 : index
    %c0_87 = arith.constant 0 : index
    %c0_88 = arith.constant 0 : index
    %152 = vector.load %arg7[%c0_86, %c0_87, %c0_88] : memref<2x8x32xf32, #tpu.memory_space<vmem>>, vector<2x8x32xf32>
    tpu.vector_store %arg7[%c0_86, %c0_87, %c0_88], %151 {strides = array<i32>} : memref<2x8x32xf32, #tpu.memory_space<vmem>>, vector<2x8x32xf32>,
    return
  }
}

module attributes {stable_mosaic.version = 11 : i64} {
  func.func @_ffn_fused_kernel(%arg0: memref<2x8x32xf32, #tpu.memory_space<vmem>>, %arg1: memref<32x64xf32, #tpu.memory_space<vmem>>, %arg2: memref<1x64xf32, #tpu.memory_space<vmem>>, %arg3: memref<64x32xf32, #tpu.memory_space<vmem>>, %arg4: memref<1x32xf32, #tpu.memory_space<vmem>>, %arg5: memref<1x32xf32, #tpu.memory_space<vmem>>, %arg6: memref<1x32xf32, #tpu.memory_space<vmem>>, %arg7: memref<2x8x32xf32, #tpu.memory_space<vmem>>) attributes {dimension_semantics = [], scalar_prefetch = 0 : i64, scratch_operands = 0 : i64, tpu.core_type = #tpu.core_type<tc>} {
    %c0 = arith.constant 0 : index
    %c0_0 = arith.constant 0 : index
    %c0_1 = arith.constant 0 : index
    %0 = vector.load %arg0[%c0, %c0_0, %c0_1] : memref<2x8x32xf32, #tpu.memory_space<vmem>>, vector<2x8x32xf32>
    %1 = vector.shape_cast %0 : vector<2x8x32xf32> to vector<16x32xf32>
    %c0_2 = arith.constant 0 : index
    %c0_3 = arith.constant 0 : index
    %2 = vector.load %arg1[%c0_2, %c0_3] : memref<32x64xf32, #tpu.memory_space<vmem>>, vector<32x64xf32>
    %cst = arith.constant dense<0.000000e+00> : vector<16x64xf32>
    %3 = tpu.matmul %1, %2, %cst {dimension_numbers = #tpu.dot_dimension_numbers<[1], [0], [0], [1], [0, 0, 1, 1], [], []>} : vector<16x32xf32>, vector<32x64xf32>, vector<16x64xf32> -> vector<16x64xf32>
    %c0_4 = arith.constant 0 : index
    %c0_5 = arith.constant 0 : index
    %4 = vector.load %arg2[%c0_4, %c0_5] : memref<1x64xf32, #tpu.memory_space<vmem>>, vector<1x64xf32>
    %5 = vector.broadcast %4 : vector<1x64xf32> to vector<16x64xf32>
    %6 = arith.addf %3, %5 : vector<16x64xf32>
    %cst_6 = arith.constant 0.000000e+00 : f32
    %7 = vector.broadcast %cst_6 : f32 to vector<16x64xf32>
    %8 = arith.maximumf %6, %7 : vector<16x64xf32>
    %c0_7 = arith.constant 0 : index
    %c0_8 = arith.constant 0 : index
    %9 = vector.load %arg3[%c0_7, %c0_8] : memref<64x32xf32, #tpu.memory_space<vmem>>, vector<64x32xf32>
    %cst_9 = arith.constant dense<0.000000e+00> : vector<16x32xf32>
    %10 = tpu.matmul %8, %9, %cst_9 {dimension_numbers = #tpu.dot_dimension_numbers<[1], [0], [0], [1], [0, 0, 1, 1], [], []>} : vector<16x64xf32>, vector<64x32xf32>, vector<16x32xf32> -> vector<16x32xf32>
    %c0_10 = arith.constant 0 : index
    %c0_11 = arith.constant 0 : index
    %11 = vector.load %arg4[%c0_10, %c0_11] : memref<1x32xf32, #tpu.memory_space<vmem>>, vector<1x32xf32>
    %12 = vector.broadcast %11 : vector<1x32xf32> to vector<16x32xf32>
    %13 = arith.addf %10, %12 : vector<16x32xf32>
    %14 = arith.addf %13, %1 : vector<16x32xf32>
    %cst_12 = arith.constant dense<0.000000e+00> : vector<16xf32>
    %15 = vector.multi_reduction <add>, %14, %cst_12 [1] : vector<16x32xf32> to vector<16xf32>
    %16 = vector.shape_cast %15 : vector<16xf32> to vector<16x1xf32>
    %cst_13 = arith.constant 3.200000e+01 : f32
    %17 = vector.broadcast %cst_13 : f32 to vector<16x1xf32>
    %18 = arith.divf %16, %17 : vector<16x1xf32>
    %19 = vector.broadcast %18 : vector<16x1xf32> to vector<16x32xf32>
    %20 = arith.subf %14, %19 : vector<16x32xf32>
    %21 = arith.mulf %20, %20 : vector<16x32xf32>
    %cst_14 = arith.constant dense<0.000000e+00> : vector<16xf32>
    %22 = vector.multi_reduction <add>, %21, %cst_14 [1] : vector<16x32xf32> to vector<16xf32>
    %23 = vector.shape_cast %22 : vector<16xf32> to vector<16x1xf32>
    %cst_15 = arith.constant 3.200000e+01 : f32
    %24 = vector.broadcast %cst_15 : f32 to vector<16x1xf32>
    %25 = arith.divf %23, %24 : vector<16x1xf32>
    %26 = vector.broadcast %18 : vector<16x1xf32> to vector<16x32xf32>
    %27 = arith.subf %14, %26 : vector<16x32xf32>
    %cst_16 = arith.constant 9.99999974E-6 : f32
    %28 = vector.broadcast %cst_16 : f32 to vector<16x1xf32>
    %29 = arith.addf %25, %28 : vector<16x1xf32>
    %30 = math.rsqrt %29 : vector<16x1xf32>
    %31 = vector.broadcast %30 : vector<16x1xf32> to vector<16x32xf32>
    %32 = arith.mulf %27, %31 : vector<16x32xf32>
    %c0_17 = arith.constant 0 : index
    %c0_18 = arith.constant 0 : index
    %33 = vector.load %arg5[%c0_17, %c0_18] : memref<1x32xf32, #tpu.memory_space<vmem>>, vector<1x32xf32>
    %34 = vector.broadcast %33 : vector<1x32xf32> to vector<16x32xf32>
    %35 = arith.mulf %32, %34 : vector<16x32xf32>
    %c0_19 = arith.constant 0 : index
    %c0_20 = arith.constant 0 : index
    %36 = vector.load %arg6[%c0_19, %c0_20] : memref<1x32xf32, #tpu.memory_space<vmem>>, vector<1x32xf32>
    %37 = vector.broadcast %36 : vector<1x32xf32> to vector<16x32xf32>
    %38 = arith.addf %35, %37 : vector<16x32xf32>
    %39 = vector.shape_cast %38 : vector<16x32xf32> to vector<2x8x32xf32>
    %c0_21 = arith.constant 0 : index
    %c0_22 = arith.constant 0 : index
    %c0_23 = arith.constant 0 : index
    %40 = vector.load %arg7[%c0_21, %c0_22, %c0_23] : memref<2x8x32xf32, #tpu.memory_space<vmem>>, vector<2x8x32xf32>
    tpu.vector_store %arg7[%c0_21, %c0_22, %c0_23], %39 {strides = array<i32>} : memref<2x8x32xf32, #tpu.memory_space<vmem>>, vector<2x8x32xf32>,
    return
  }
}

module attributes {stable_mosaic.version = 11 : i64} {
  func.func @_generator_kernel(%arg0: memref<16x32xf32, #tpu.memory_space<vmem>>, %arg1: memref<32x128xf32, #tpu.memory_space<vmem>>, %arg2: memref<1x128xf32, #tpu.memory_space<vmem>>, %arg3: memref<16x128xf32, #tpu.memory_space<vmem>>) attributes {dimension_semantics = [], scalar_prefetch = 0 : i64, scratch_operands = 0 : i64, tpu.core_type = #tpu.core_type<tc>} {
    %c0 = arith.constant 0 : index
    %c0_0 = arith.constant 0 : index
    %0 = vector.load %arg0[%c0, %c0_0] : memref<16x32xf32, #tpu.memory_space<vmem>>, vector<16x32xf32>
    %c0_1 = arith.constant 0 : index
    %c0_2 = arith.constant 0 : index
    %1 = vector.load %arg1[%c0_1, %c0_2] : memref<32x128xf32, #tpu.memory_space<vmem>>, vector<32x128xf32>
    %cst = arith.constant dense<0.000000e+00> : vector<16x128xf32>
    %2 = tpu.matmul %0, %1, %cst {dimension_numbers = #tpu.dot_dimension_numbers<[1], [0], [0], [1], [0, 0, 1, 1], [], []>} : vector<16x32xf32>, vector<32x128xf32>, vector<16x128xf32> -> vector<16x128xf32>
    %c0_3 = arith.constant 0 : index
    %c0_4 = arith.constant 0 : index
    %3 = vector.load %arg2[%c0_3, %c0_4] : memref<1x128xf32, #tpu.memory_space<vmem>>, vector<1x128xf32>
    %4 = vector.broadcast %3 : vector<1x128xf32> to vector<16x128xf32>
    %5 = arith.addf %2, %4 : vector<16x128xf32>
    %c0_5 = arith.constant 0 : index
    %c0_6 = arith.constant 0 : index
    %6 = vector.load %arg3[%c0_5, %c0_6] : memref<16x128xf32, #tpu.memory_space<vmem>>, vector<16x128xf32>
    tpu.vector_store %arg3[%c0_5, %c0_6], %5 {strides = array<i32>} : memref<16x128xf32, #tpu.memory_space<vmem>>, vector<16x128xf32>,
    return
  }
}

module attributes {stable_mosaic.version = 11 : i64} {
  func.func @_mha_fused_kernel(%arg0: memref<2x8x32xf32, #tpu.memory_space<vmem>>, %arg1: memref<2x8x32xf32, #tpu.memory_space<vmem>>, %arg2: memref<2x8x8xf32, #tpu.memory_space<vmem>>, %arg3: memref<4x32x8xf32, #tpu.memory_space<vmem>>, %arg4: memref<4x32x8xf32, #tpu.memory_space<vmem>>, %arg5: memref<4x8x32xf32, #tpu.memory_space<vmem>>, %arg6: memref<1x32xf32, #tpu.memory_space<vmem>>, %arg7: memref<1x32xf32, #tpu.memory_space<vmem>>, %arg8: memref<2x8x32xf32, #tpu.memory_space<vmem>>) attributes {dimension_semantics = [], scalar_prefetch = 0 : i64, scratch_operands = 0 : i64, tpu.core_type = #tpu.core_type<tc>} {
    %c0 = arith.constant 0 : index
    %c0_0 = arith.constant 0 : index
    %c0_1 = arith.constant 0 : index
    %0 = vector.load %arg0[%c0, %c0_0, %c0_1] : memref<2x8x32xf32, #tpu.memory_space<vmem>>, vector<2x8x32xf32>
    %1 = vector.shape_cast %0 : vector<2x8x32xf32> to vector<16x32xf32>
    %c0_2 = arith.constant 0 : index
    %c0_3 = arith.constant 0 : index
    %c0_4 = arith.constant 0 : index
    %2 = vector.load %arg1[%c0_2, %c0_3, %c0_4] : memref<2x8x32xf32, #tpu.memory_space<vmem>>, vector<2x8x32xf32>
    %3 = vector.shape_cast %2 : vector<2x8x32xf32> to vector<16x32xf32>
    %c0_5 = arith.constant 0 : index
    %c0_6 = arith.constant 0 : index
    %c0_7 = arith.constant 0 : index
    %4 = vector.load %arg2[%c0_5, %c0_6, %c0_7] : memref<2x8x8xf32, #tpu.memory_space<vmem>>, vector<2x8x8xf32>
    %c0_8 = arith.constant 0 : index
    %c0_9 = arith.constant 0 : index
    %c0_10 = arith.constant 0 : index
    %5 = vector.load %arg3[%c0_8, %c0_9, %c0_10] : memref<4x32x8xf32, #tpu.memory_space<vmem>>, vector<1x32x8xf32>
    %6 = vector.shape_cast %5 : vector<1x32x8xf32> to vector<32x8xf32>
    %c0_11 = arith.constant 0 : index
    %c0_12 = arith.constant 0 : index
    %c0_13 = arith.constant 0 : index
    %7 = vector.load %arg4[%c0_11, %c0_12, %c0_13] : memref<4x32x8xf32, #tpu.memory_space<vmem>>, vector<1x32x8xf32>
    %8 = vector.shape_cast %7 : vector<1x32x8xf32> to vector<32x8xf32>
    %cst = arith.constant dense<0.000000e+00> : vector<16x8xf32>
    %9 = tpu.matmul %1, %6, %cst {dimension_numbers = #tpu.dot_dimension_numbers<[1], [0], [0], [1], [0, 0, 1, 1], [], []>} : vector<16x32xf32>, vector<32x8xf32>, vector<16x8xf32> -> vector<16x8xf32>
    %10 = vector.shape_cast %9 : vector<16x8xf32> to vector<2x8x8xf32>
    %cst_14 = arith.constant dense<0.000000e+00> : vector<16x8xf32>
    %11 = tpu.matmul %3, %8, %cst_14 {dimension_numbers = #tpu.dot_dimension_numbers<[1], [0], [0], [1], [0, 0, 1, 1], [], []>} : vector<16x32xf32>, vector<32x8xf32>, vector<16x8xf32> -> vector<16x8xf32>
    %12 = vector.shape_cast %11 : vector<16x8xf32> to vector<2x8x8xf32>
    %cst_15 = arith.constant dense<0.000000e+00> : vector<16x8xf32>
    %13 = tpu.matmul %3, %6, %cst_15 {dimension_numbers = #tpu.dot_dimension_numbers<[1], [0], [0], [1], [0, 0, 1, 1], [], []>} : vector<16x32xf32>, vector<32x8xf32>, vector<16x8xf32> -> vector<16x8xf32>
    %14 = vector.shape_cast %13 : vector<16x8xf32> to vector<2x8x8xf32>
    "tpu.trace_start"() <{level = 10 : i32, message = "bqd,bkd->bqk"}> : () -> ()
    %cst_16 = arith.constant dense<0.000000e+00> : vector<2x8x8xf32>
    %15 = tpu.matmul %10, %12, %cst_16 {dimension_numbers = #tpu.dot_dimension_numbers<[2], [2], [1], [1], [0, 0, 0, 1, 1, 1], [0], [0]>} : vector<2x8x8xf32>, vector<2x8x8xf32>, vector<2x8x8xf32> -> vector<2x8x8xf32>
    "tpu.trace_stop"() : () -> ()
    %cst_17 = arith.constant 0.353553385 : f32
    %16 = vector.broadcast %cst_17 : f32 to vector<2x8x8xf32>
    %17 = arith.mulf %15, %16 : vector<2x8x8xf32>
    %cst_18 = arith.constant 5.000000e-01 : f32
    %18 = vector.broadcast %cst_18 : f32 to vector<2x8x8xf32>
    %19 = arith.cmpf ogt, %4, %18 : vector<2x8x8xf32>
    %cst_19 = arith.constant -1.000000e+30 : f32
    %20 = vector.broadcast %cst_19 : f32 to vector<2x8x8xf32>
    %21 = arith.select %19, %20, %17 : vector<2x8x8xi1>, vector<2x8x8xf32>
    %cst_20 = arith.constant dense<0xFF800000> : vector<2x8xf32>
    %22 = vector.multi_reduction <maximumf>, %21, %cst_20 [2] : vector<2x8x8xf32> to vector<2x8xf32>
    %23 = vector.shape_cast %22 : vector<2x8xf32> to vector<2x8x1xf32>
    %24 = vector.broadcast %23 : vector<2x8x1xf32> to vector<2x8x8xf32>
    %25 = arith.subf %21, %24 : vector<2x8x8xf32>
    %26 = math.exp %25 : vector<2x8x8xf32>
    %cst_21 = arith.constant dense<0.000000e+00> : vector<2x8xf32>
    %27 = vector.multi_reduction <add>, %26, %cst_21 [2] : vector<2x8x8xf32> to vector<2x8xf32>
    %28 = vector.shape_cast %27 : vector<2x8xf32> to vector<2x8x1xf32>
    %29 = tpu.reciprocal %28 {approx = true} : vector<2x8x1xf32> -> vector<2x8x1xf32>
    %30 = vector.broadcast %29 : vector<2x8x1xf32> to vector<2x8x8xf32>
    %31 = arith.mulf %26, %30 : vector<2x8x8xf32>
    "tpu.trace_start"() <{level = 10 : i32, message = "bqk,bkd->bqd"}> : () -> ()
    %cst_22 = arith.constant dense<0.000000e+00> : vector<2x8x8xf32>
    %32 = tpu.matmul %31, %14, %cst_22 {dimension_numbers = #tpu.dot_dimension_numbers<[2], [1], [1], [2], [0, 0, 0, 1, 1, 2], [0], [0]>} : vector<2x8x8xf32>, vector<2x8x8xf32>, vector<2x8x8xf32> -> vector<2x8x8xf32>
    "tpu.trace_stop"() : () -> ()
    %33 = vector.shape_cast %32 : vector<2x8x8xf32> to vector<16x8xf32>
    %c0_23 = arith.constant 0 : index
    %c0_24 = arith.constant 0 : index
    %c0_25 = arith.constant 0 : index
    %34 = vector.load %arg5[%c0_23, %c0_24, %c0_25] : memref<4x8x32xf32, #tpu.memory_space<vmem>>, vector<1x8x32xf32>
    %35 = vector.shape_cast %34 : vector<1x8x32xf32> to vector<8x32xf32>
    %cst_26 = arith.constant dense<0.000000e+00> : vector<16x32xf32>
    %36 = tpu.matmul %33, %35, %cst_26 {dimension_numbers = #tpu.dot_dimension_numbers<[1], [0], [0], [1], [0, 0, 1, 1], [], []>} : vector<16x8xf32>, vector<8x32xf32>, vector<16x32xf32> -> vector<16x32xf32>
    %c1 = arith.constant 1 : index
    %c0_27 = arith.constant 0 : index
    %c0_28 = arith.constant 0 : index
    %37 = vector.load %arg3[%c1, %c0_27, %c0_28] : memref<4x32x8xf32, #tpu.memory_space<vmem>>, vector<1x32x8xf32>
    %38 = vector.shape_cast %37 : vector<1x32x8xf32> to vector<32x8xf32>
    %c1_29 = arith.constant 1 : index
    %c0_30 = arith.constant 0 : index
    %c0_31 = arith.constant 0 : index
    %39 = vector.load %arg4[%c1_29, %c0_30, %c0_31] : memref<4x32x8xf32, #tpu.memory_space<vmem>>, vector<1x32x8xf32>
    %40 = vector.shape_cast %39 : vector<1x32x8xf32> to vector<32x8xf32>
    %cst_32 = arith.constant dense<0.000000e+00> : vector<16x8xf32>
    %41 = tpu.matmul %1, %38, %cst_32 {dimension_numbers = #tpu.dot_dimension_numbers<[1], [0], [0], [1], [0, 0, 1, 1], [], []>} : vector<16x32xf32>, vector<32x8xf32>, vector<16x8xf32> -> vector<16x8xf32>
    %42 = vector.shape_cast %41 : vector<16x8xf32> to vector<2x8x8xf32>
    %cst_33 = arith.constant dense<0.000000e+00> : vector<16x8xf32>
    %43 = tpu.matmul %3, %40, %cst_33 {dimension_numbers = #tpu.dot_dimension_numbers<[1], [0], [0], [1], [0, 0, 1, 1], [], []>} : vector<16x32xf32>, vector<32x8xf32>, vector<16x8xf32> -> vector<16x8xf32>
    %44 = vector.shape_cast %43 : vector<16x8xf32> to vector<2x8x8xf32>
    %cst_34 = arith.constant dense<0.000000e+00> : vector<16x8xf32>
    %45 = tpu.matmul %3, %38, %cst_34 {dimension_numbers = #tpu.dot_dimension_numbers<[1], [0], [0], [1], [0, 0, 1, 1], [], []>} : vector<16x32xf32>, vector<32x8xf32>, vector<16x8xf32> -> vector<16x8xf32>
    %46 = vector.shape_cast %45 : vector<16x8xf32> to vector<2x8x8xf32>
    "tpu.trace_start"() <{level = 10 : i32, message = "bqd,bkd->bqk"}> : () -> ()
    %cst_35 = arith.constant dense<0.000000e+00> : vector<2x8x8xf32>
    %47 = tpu.matmul %42, %44, %cst_35 {dimension_numbers = #tpu.dot_dimension_numbers<[2], [2], [1], [1], [0, 0, 0, 1, 1, 1], [0], [0]>} : vector<2x8x8xf32>, vector<2x8x8xf32>, vector<2x8x8xf32> -> vector<2x8x8xf32>
    "tpu.trace_stop"() : () -> ()
    %cst_36 = arith.constant 0.353553385 : f32
    %48 = vector.broadcast %cst_36 : f32 to vector<2x8x8xf32>
    %49 = arith.mulf %47, %48 : vector<2x8x8xf32>
    %cst_37 = arith.constant 5.000000e-01 : f32
    %50 = vector.broadcast %cst_37 : f32 to vector<2x8x8xf32>
    %51 = arith.cmpf ogt, %4, %50 : vector<2x8x8xf32>
    %cst_38 = arith.constant -1.000000e+30 : f32
    %52 = vector.broadcast %cst_38 : f32 to vector<2x8x8xf32>
    %53 = arith.select %51, %52, %49 : vector<2x8x8xi1>, vector<2x8x8xf32>
    %cst_39 = arith.constant dense<0xFF800000> : vector<2x8xf32>
    %54 = vector.multi_reduction <maximumf>, %53, %cst_39 [2] : vector<2x8x8xf32> to vector<2x8xf32>
    %55 = vector.shape_cast %54 : vector<2x8xf32> to vector<2x8x1xf32>
    %56 = vector.broadcast %55 : vector<2x8x1xf32> to vector<2x8x8xf32>
    %57 = arith.subf %53, %56 : vector<2x8x8xf32>
    %58 = math.exp %57 : vector<2x8x8xf32>
    %cst_40 = arith.constant dense<0.000000e+00> : vector<2x8xf32>
    %59 = vector.multi_reduction <add>, %58, %cst_40 [2] : vector<2x8x8xf32> to vector<2x8xf32>
    %60 = vector.shape_cast %59 : vector<2x8xf32> to vector<2x8x1xf32>
    %61 = tpu.reciprocal %60 {approx = true} : vector<2x8x1xf32> -> vector<2x8x1xf32>
    %62 = vector.broadcast %61 : vector<2x8x1xf32> to vector<2x8x8xf32>
    %63 = arith.mulf %58, %62 : vector<2x8x8xf32>
    "tpu.trace_start"() <{level = 10 : i32, message = "bqk,bkd->bqd"}> : () -> ()
    %cst_41 = arith.constant dense<0.000000e+00> : vector<2x8x8xf32>
    %64 = tpu.matmul %63, %46, %cst_41 {dimension_numbers = #tpu.dot_dimension_numbers<[2], [1], [1], [2], [0, 0, 0, 1, 1, 2], [0], [0]>} : vector<2x8x8xf32>, vector<2x8x8xf32>, vector<2x8x8xf32> -> vector<2x8x8xf32>
    "tpu.trace_stop"() : () -> ()
    %65 = vector.shape_cast %64 : vector<2x8x8xf32> to vector<16x8xf32>
    %c1_42 = arith.constant 1 : index
    %c0_43 = arith.constant 0 : index
    %c0_44 = arith.constant 0 : index
    %66 = vector.load %arg5[%c1_42, %c0_43, %c0_44] : memref<4x8x32xf32, #tpu.memory_space<vmem>>, vector<1x8x32xf32>
    %67 = vector.shape_cast %66 : vector<1x8x32xf32> to vector<8x32xf32>
    %cst_45 = arith.constant dense<0.000000e+00> : vector<16x32xf32>
    %68 = tpu.matmul %65, %67, %cst_45 {dimension_numbers = #tpu.dot_dimension_numbers<[1], [0], [0], [1], [0, 0, 1, 1], [], []>} : vector<16x8xf32>, vector<8x32xf32>, vector<16x32xf32> -> vector<16x32xf32>
    %69 = arith.addf %36, %68 : vector<16x32xf32>
    %c2 = arith.constant 2 : index
    %c0_46 = arith.constant 0 : index
    %c0_47 = arith.constant 0 : index
    %70 = vector.load %arg3[%c2, %c0_46, %c0_47] : memref<4x32x8xf32, #tpu.memory_space<vmem>>, vector<1x32x8xf32>
    %71 = vector.shape_cast %70 : vector<1x32x8xf32> to vector<32x8xf32>
    %c2_48 = arith.constant 2 : index
    %c0_49 = arith.constant 0 : index
    %c0_50 = arith.constant 0 : index
    %72 = vector.load %arg4[%c2_48, %c0_49, %c0_50] : memref<4x32x8xf32, #tpu.memory_space<vmem>>, vector<1x32x8xf32>
    %73 = vector.shape_cast %72 : vector<1x32x8xf32> to vector<32x8xf32>
    %cst_51 = arith.constant dense<0.000000e+00> : vector<16x8xf32>
    %74 = tpu.matmul %1, %71, %cst_51 {dimension_numbers = #tpu.dot_dimension_numbers<[1], [0], [0], [1], [0, 0, 1, 1], [], []>} : vector<16x32xf32>, vector<32x8xf32>, vector<16x8xf32> -> vector<16x8xf32>
    %75 = vector.shape_cast %74 : vector<16x8xf32> to vector<2x8x8xf32>
    %cst_52 = arith.constant dense<0.000000e+00> : vector<16x8xf32>
    %76 = tpu.matmul %3, %73, %cst_52 {dimension_numbers = #tpu.dot_dimension_numbers<[1], [0], [0], [1], [0, 0, 1, 1], [], []>} : vector<16x32xf32>, vector<32x8xf32>, vector<16x8xf32> -> vector<16x8xf32>
    %77 = vector.shape_cast %76 : vector<16x8xf32> to vector<2x8x8xf32>
    %cst_53 = arith.constant dense<0.000000e+00> : vector<16x8xf32>
    %78 = tpu.matmul %3, %71, %cst_53 {dimension_numbers = #tpu.dot_dimension_numbers<[1], [0], [0], [1], [0, 0, 1, 1], [], []>} : vector<16x32xf32>, vector<32x8xf32>, vector<16x8xf32> -> vector<16x8xf32>
    %79 = vector.shape_cast %78 : vector<16x8xf32> to vector<2x8x8xf32>
    "tpu.trace_start"() <{level = 10 : i32, message = "bqd,bkd->bqk"}> : () -> ()
    %cst_54 = arith.constant dense<0.000000e+00> : vector<2x8x8xf32>
    %80 = tpu.matmul %75, %77, %cst_54 {dimension_numbers = #tpu.dot_dimension_numbers<[2], [2], [1], [1], [0, 0, 0, 1, 1, 1], [0], [0]>} : vector<2x8x8xf32>, vector<2x8x8xf32>, vector<2x8x8xf32> -> vector<2x8x8xf32>
    "tpu.trace_stop"() : () -> ()
    %cst_55 = arith.constant 0.353553385 : f32
    %81 = vector.broadcast %cst_55 : f32 to vector<2x8x8xf32>
    %82 = arith.mulf %80, %81 : vector<2x8x8xf32>
    %cst_56 = arith.constant 5.000000e-01 : f32
    %83 = vector.broadcast %cst_56 : f32 to vector<2x8x8xf32>
    %84 = arith.cmpf ogt, %4, %83 : vector<2x8x8xf32>
    %cst_57 = arith.constant -1.000000e+30 : f32
    %85 = vector.broadcast %cst_57 : f32 to vector<2x8x8xf32>
    %86 = arith.select %84, %85, %82 : vector<2x8x8xi1>, vector<2x8x8xf32>
    %cst_58 = arith.constant dense<0xFF800000> : vector<2x8xf32>
    %87 = vector.multi_reduction <maximumf>, %86, %cst_58 [2] : vector<2x8x8xf32> to vector<2x8xf32>
    %88 = vector.shape_cast %87 : vector<2x8xf32> to vector<2x8x1xf32>
    %89 = vector.broadcast %88 : vector<2x8x1xf32> to vector<2x8x8xf32>
    %90 = arith.subf %86, %89 : vector<2x8x8xf32>
    %91 = math.exp %90 : vector<2x8x8xf32>
    %cst_59 = arith.constant dense<0.000000e+00> : vector<2x8xf32>
    %92 = vector.multi_reduction <add>, %91, %cst_59 [2] : vector<2x8x8xf32> to vector<2x8xf32>
    %93 = vector.shape_cast %92 : vector<2x8xf32> to vector<2x8x1xf32>
    %94 = tpu.reciprocal %93 {approx = true} : vector<2x8x1xf32> -> vector<2x8x1xf32>
    %95 = vector.broadcast %94 : vector<2x8x1xf32> to vector<2x8x8xf32>
    %96 = arith.mulf %91, %95 : vector<2x8x8xf32>
    "tpu.trace_start"() <{level = 10 : i32, message = "bqk,bkd->bqd"}> : () -> ()
    %cst_60 = arith.constant dense<0.000000e+00> : vector<2x8x8xf32>
    %97 = tpu.matmul %96, %79, %cst_60 {dimension_numbers = #tpu.dot_dimension_numbers<[2], [1], [1], [2], [0, 0, 0, 1, 1, 2], [0], [0]>} : vector<2x8x8xf32>, vector<2x8x8xf32>, vector<2x8x8xf32> -> vector<2x8x8xf32>
    "tpu.trace_stop"() : () -> ()
    %98 = vector.shape_cast %97 : vector<2x8x8xf32> to vector<16x8xf32>
    %c2_61 = arith.constant 2 : index
    %c0_62 = arith.constant 0 : index
    %c0_63 = arith.constant 0 : index
    %99 = vector.load %arg5[%c2_61, %c0_62, %c0_63] : memref<4x8x32xf32, #tpu.memory_space<vmem>>, vector<1x8x32xf32>
    %100 = vector.shape_cast %99 : vector<1x8x32xf32> to vector<8x32xf32>
    %cst_64 = arith.constant dense<0.000000e+00> : vector<16x32xf32>
    %101 = tpu.matmul %98, %100, %cst_64 {dimension_numbers = #tpu.dot_dimension_numbers<[1], [0], [0], [1], [0, 0, 1, 1], [], []>} : vector<16x8xf32>, vector<8x32xf32>, vector<16x32xf32> -> vector<16x32xf32>
    %102 = arith.addf %69, %101 : vector<16x32xf32>
    %c3 = arith.constant 3 : index
    %c0_65 = arith.constant 0 : index
    %c0_66 = arith.constant 0 : index
    %103 = vector.load %arg3[%c3, %c0_65, %c0_66] : memref<4x32x8xf32, #tpu.memory_space<vmem>>, vector<1x32x8xf32>
    %104 = vector.shape_cast %103 : vector<1x32x8xf32> to vector<32x8xf32>
    %c3_67 = arith.constant 3 : index
    %c0_68 = arith.constant 0 : index
    %c0_69 = arith.constant 0 : index
    %105 = vector.load %arg4[%c3_67, %c0_68, %c0_69] : memref<4x32x8xf32, #tpu.memory_space<vmem>>, vector<1x32x8xf32>
    %106 = vector.shape_cast %105 : vector<1x32x8xf32> to vector<32x8xf32>
    %cst_70 = arith.constant dense<0.000000e+00> : vector<16x8xf32>
    %107 = tpu.matmul %1, %104, %cst_70 {dimension_numbers = #tpu.dot_dimension_numbers<[1], [0], [0], [1], [0, 0, 1, 1], [], []>} : vector<16x32xf32>, vector<32x8xf32>, vector<16x8xf32> -> vector<16x8xf32>
    %108 = vector.shape_cast %107 : vector<16x8xf32> to vector<2x8x8xf32>
    %cst_71 = arith.constant dense<0.000000e+00> : vector<16x8xf32>
    %109 = tpu.matmul %3, %106, %cst_71 {dimension_numbers = #tpu.dot_dimension_numbers<[1], [0], [0], [1], [0, 0, 1, 1], [], []>} : vector<16x32xf32>, vector<32x8xf32>, vector<16x8xf32> -> vector<16x8xf32>
    %110 = vector.shape_cast %109 : vector<16x8xf32> to vector<2x8x8xf32>
    %cst_72 = arith.constant dense<0.000000e+00> : vector<16x8xf32>
    %111 = tpu.matmul %3, %104, %cst_72 {dimension_numbers = #tpu.dot_dimension_numbers<[1], [0], [0], [1], [0, 0, 1, 1], [], []>} : vector<16x32xf32>, vector<32x8xf32>, vector<16x8xf32> -> vector<16x8xf32>
    %112 = vector.shape_cast %111 : vector<16x8xf32> to vector<2x8x8xf32>
    "tpu.trace_start"() <{level = 10 : i32, message = "bqd,bkd->bqk"}> : () -> ()
    %cst_73 = arith.constant dense<0.000000e+00> : vector<2x8x8xf32>
    %113 = tpu.matmul %108, %110, %cst_73 {dimension_numbers = #tpu.dot_dimension_numbers<[2], [2], [1], [1], [0, 0, 0, 1, 1, 1], [0], [0]>} : vector<2x8x8xf32>, vector<2x8x8xf32>, vector<2x8x8xf32> -> vector<2x8x8xf32>
    "tpu.trace_stop"() : () -> ()
    %cst_74 = arith.constant 0.353553385 : f32
    %114 = vector.broadcast %cst_74 : f32 to vector<2x8x8xf32>
    %115 = arith.mulf %113, %114 : vector<2x8x8xf32>
    %cst_75 = arith.constant 5.000000e-01 : f32
    %116 = vector.broadcast %cst_75 : f32 to vector<2x8x8xf32>
    %117 = arith.cmpf ogt, %4, %116 : vector<2x8x8xf32>
    %cst_76 = arith.constant -1.000000e+30 : f32
    %118 = vector.broadcast %cst_76 : f32 to vector<2x8x8xf32>
    %119 = arith.select %117, %118, %115 : vector<2x8x8xi1>, vector<2x8x8xf32>
    %cst_77 = arith.constant dense<0xFF800000> : vector<2x8xf32>
    %120 = vector.multi_reduction <maximumf>, %119, %cst_77 [2] : vector<2x8x8xf32> to vector<2x8xf32>
    %121 = vector.shape_cast %120 : vector<2x8xf32> to vector<2x8x1xf32>
    %122 = vector.broadcast %121 : vector<2x8x1xf32> to vector<2x8x8xf32>
    %123 = arith.subf %119, %122 : vector<2x8x8xf32>
    %124 = math.exp %123 : vector<2x8x8xf32>
    %cst_78 = arith.constant dense<0.000000e+00> : vector<2x8xf32>
    %125 = vector.multi_reduction <add>, %124, %cst_78 [2] : vector<2x8x8xf32> to vector<2x8xf32>
    %126 = vector.shape_cast %125 : vector<2x8xf32> to vector<2x8x1xf32>
    %127 = tpu.reciprocal %126 {approx = true} : vector<2x8x1xf32> -> vector<2x8x1xf32>
    %128 = vector.broadcast %127 : vector<2x8x1xf32> to vector<2x8x8xf32>
    %129 = arith.mulf %124, %128 : vector<2x8x8xf32>
    "tpu.trace_start"() <{level = 10 : i32, message = "bqk,bkd->bqd"}> : () -> ()
    %cst_79 = arith.constant dense<0.000000e+00> : vector<2x8x8xf32>
    %130 = tpu.matmul %129, %112, %cst_79 {dimension_numbers = #tpu.dot_dimension_numbers<[2], [1], [1], [2], [0, 0, 0, 1, 1, 2], [0], [0]>} : vector<2x8x8xf32>, vector<2x8x8xf32>, vector<2x8x8xf32> -> vector<2x8x8xf32>
    "tpu.trace_stop"() : () -> ()
    %131 = vector.shape_cast %130 : vector<2x8x8xf32> to vector<16x8xf32>
    %c3_80 = arith.constant 3 : index
    %c0_81 = arith.constant 0 : index
    %c0_82 = arith.constant 0 : index
    %132 = vector.load %arg5[%c3_80, %c0_81, %c0_82] : memref<4x8x32xf32, #tpu.memory_space<vmem>>, vector<1x8x32xf32>
    %133 = vector.shape_cast %132 : vector<1x8x32xf32> to vector<8x32xf32>
    %cst_83 = arith.constant dense<0.000000e+00> : vector<16x32xf32>
    %134 = tpu.matmul %131, %133, %cst_83 {dimension_numbers = #tpu.dot_dimension_numbers<[1], [0], [0], [1], [0, 0, 1, 1], [], []>} : vector<16x8xf32>, vector<8x32xf32>, vector<16x32xf32> -> vector<16x32xf32>
    %135 = arith.addf %102, %134 : vector<16x32xf32>
    %136 = arith.addf %135, %1 : vector<16x32xf32>
    %cst_84 = arith.constant dense<0.000000e+00> : vector<16xf32>
    %137 = vector.multi_reduction <add>, %136, %cst_84 [1] : vector<16x32xf32> to vector<16xf32>
    %138 = vector.shape_cast %137 : vector<16xf32> to vector<16x1xf32>
    %cst_85 = arith.constant 3.200000e+01 : f32
    %139 = vector.broadcast %cst_85 : f32 to vector<16x1xf32>
    %140 = arith.divf %138, %139 : vector<16x1xf32>
    %141 = vector.broadcast %140 : vector<16x1xf32> to vector<16x32xf32>
    %142 = arith.subf %136, %141 : vector<16x32xf32>
    %143 = arith.mulf %142, %142 : vector<16x32xf32>
    %cst_86 = arith.constant dense<0.000000e+00> : vector<16xf32>
    %144 = vector.multi_reduction <add>, %143, %cst_86 [1] : vector<16x32xf32> to vector<16xf32>
    %145 = vector.shape_cast %144 : vector<16xf32> to vector<16x1xf32>
    %cst_87 = arith.constant 3.200000e+01 : f32
    %146 = vector.broadcast %cst_87 : f32 to vector<16x1xf32>
    %147 = arith.divf %145, %146 : vector<16x1xf32>
    %148 = vector.broadcast %140 : vector<16x1xf32> to vector<16x32xf32>
    %149 = arith.subf %136, %148 : vector<16x32xf32>
    %cst_88 = arith.constant 9.99999974E-6 : f32
    %150 = vector.broadcast %cst_88 : f32 to vector<16x1xf32>
    %151 = arith.addf %147, %150 : vector<16x1xf32>
    %152 = math.rsqrt %151 : vector<16x1xf32>
    %153 = vector.broadcast %152 : vector<16x1xf32> to vector<16x32xf32>
    %154 = arith.mulf %149, %153 : vector<16x32xf32>
    %c0_89 = arith.constant 0 : index
    %c0_90 = arith.constant 0 : index
    %155 = vector.load %arg6[%c0_89, %c0_90] : memref<1x32xf32, #tpu.memory_space<vmem>>, vector<1x32xf32>
    %156 = vector.broadcast %155 : vector<1x32xf32> to vector<16x32xf32>
    %157 = arith.mulf %154, %156 : vector<16x32xf32>
    %c0_91 = arith.constant 0 : index
    %c0_92 = arith.constant 0 : index
    %158 = vector.load %arg7[%c0_91, %c0_92] : memref<1x32xf32, #tpu.memory_space<vmem>>, vector<1x32xf32>
    %159 = vector.broadcast %158 : vector<1x32xf32> to vector<16x32xf32>
    %160 = arith.addf %157, %159 : vector<16x32xf32>
    %161 = vector.shape_cast %160 : vector<16x32xf32> to vector<2x8x32xf32>
    %c0_93 = arith.constant 0 : index
    %c0_94 = arith.constant 0 : index
    %c0_95 = arith.constant 0 : index
    %162 = vector.load %arg8[%c0_93, %c0_94, %c0_95] : memref<2x8x32xf32, #tpu.memory_space<vmem>>, vector<2x8x32xf32>
    tpu.vector_store %arg8[%c0_93, %c0_94, %c0_95], %161 {strides = array<i32>} : memref<2x8x32xf32, #tpu.memory_space<vmem>>, vector<2x8x32xf32>,
    return
  }
}

</mosaic_0001>

<llo_original>
// kernel: transformer_forward.21
$region0: #{transformer_forward.21}
  #allocation0 [shape = 'u32[]', space=smem, size = 0x4, offset = 0x4, fixed_abs, tag = 'smem constant byte address 0x4 - core index']
  #allocation1 [shape = 'u32[144,128]{1,0:T(1,128)}', space=vmem, size = 0x12000, scoped, tag = 'internal scratch']
  %s0 = inlined_call_operand.vmem [shape: f32[16,32], index: 0, kind: input, shape index: {}]
  %s1 = inlined_call_operand.vmem [shape: f32[32,128], index: 1, kind: input, shape index: {}]
  %s2 = inlined_call_operand.vmem [shape: f32[1,128], index: 2, kind: input, shape index: {}]
  %s3 = inlined_call_operand.vmem [shape: f32[16,128], index: 3, kind: output, shape index: {}]
  %s4 = sld [smem:[#allocation0]]
  $region22: #{transformer_forward.21} parent=0
    _
  %s6 = ssub.s32 1, %s4
  %s7 = scalar_select 0, %s6, %s4
  // Predicated region
  $region2: #{transformer_forward.21} parent=0 // pred_check
    _
  $region3: #{transformer_forward.21} parent=0 // pred_check_branch
    %9 = sbr.rel (0) target = $region5
  $region4: #{transformer_forward.21} parent=0 // pred_region
    _
  $region5: #{transformer_forward.21} parent=0 // pred_fallthru
    _
  // Predicated region
  $region6: #{transformer_forward.21} parent=0 // pred_check
    _
  $region7: #{transformer_forward.21} parent=0 // pred_check_branch
    %11 = sbr.rel (0) target = $region9
  $region8: #{transformer_forward.21} parent=0 // pred_region
    _
  $region9: #{transformer_forward.21} parent=0 // pred_fallthru
    _
  // Predicated region
  $region10: #{transformer_forward.21} parent=0 // pred_check
    _
  $region11: #{transformer_forward.21} parent=0 // pred_check_branch
    %13 = sbr.rel (0) target = $region13
  $region12: #{transformer_forward.21} parent=0 // pred_region
    _
  $region13: #{transformer_forward.21} parent=0 // pred_fallthru
    _
  %v14 = vld [vmem:[%s0] sm:$0xff]
  %v15 = vld [vmem:[%s0 + $0x8] sm:$0xff]
  %v16 = vld [vmem:[%s1] sm:$0xff]
  %v17 = vld [vmem:[%s1 + $0x8] sm:$0xff]
  %v18 = vld [vmem:[%s1 + $0x10] sm:$0xff]
  %v19 = vld [vmem:[%s1 + $0x18] sm:$0xff]
  %v20 = vld [vmem:[%s2] sm:$0x1]
  %v22 = vlaneseq
  %v23 = vshrl.u32 %v22, 7
  %v24 = vsub.s32 0, %v23
  %v25 = vrot.slane %v20, %v24
  %vm27 = vcmask 261120
  %v29 = vsel %vm27, %v14, 0
  %v32 = vsel %vm27, %v15, 0
  %34 = vmatprep.subr.mxu0 0.0
  %35 = vmatpush1.msra.mxu0 %v16
  %36 = vmatprep.subr.mxu0 0.0
  %37 = vmatpush1.msra.mxu0 %v17
  %38 = vmatprep.subr.mxu0 0.0
  %39 = vmatpush1.msra.mxu0 %v18
  %40 = vmatprep.subr.mxu0 0.0
  %41 = vmatpush1.msra.mxu0 %v19
  %42 = vmatprep.subr.mxu0 0.0
  %43 = vmatpush1.msra.mxu0 0.0
  %44 = vmatprep.subr.mxu0 0.0
  %45 = vmatpush1.msra.mxu0 0.0
  %46 = vmatprep.subr.mxu0 0.0
  %47 = vmatpush1.msra.mxu0 0.0
  %48 = vmatprep.subr.mxu0 0.0
  %49 = vmatpush1.msra.mxu0 0.0
  %50 = vmatprep.subr.mxu0 0.0
  %51 = vmatpush1.msra.mxu0 0.0
  %52 = vmatprep.subr.mxu0 0.0
  %53 = vmatpush1.msra.mxu0 0.0
  %54 = vmatprep.subr.mxu0 0.0
  %55 = vmatpush1.msra.mxu0 0.0
  %56 = vmatprep.subr.mxu0 0.0
  %57 = vmatpush1.msra.mxu0 0.0
  %58 = vmatprep.subr.mxu0 0.0
  %59 = vmatpush1.msra.mxu0 0.0
  %60 = vmatprep.subr.mxu0 0.0
  %61 = vmatpush1.msra.mxu0 0.0
  %62 = vmatprep.subr.mxu0 0.0
  %63 = vmatpush1.msra.mxu0 0.0
  %64 = vmatprep.subr.mxu0 0.0
  %65 = vmatpush1.msra.mxu0 0.0
  %66 = vmatprep.subr.mxu0 0.0
  %67 = vmatpush1.msra.mxu0 0.0
  %68 = vmatprep.subr.mxu0 0.0
  %69 = vmatpush1.msra.mxu0 0.0
  %70 = vmatprep.subr.mxu0 0.0
  %71 = vmatpush1.msra.mxu0 0.0
  %72 = vmatprep.subr.mxu0 0.0
  %73 = vmatpush1.msra.mxu0 0.0
  %74 = vmatprep.subr.mxu0 0.0
  %75 = vmatpush1.msra.mxu0 0.0
  %76 = vmatprep.subr.mxu0 0.0
  %77 = vmatpush1.msra.mxu0 0.0
  %78 = vmatprep.subr.mxu0 0.0
  %79 = vmatpush1.msra.mxu0 0.0
  %80 = vmatprep.subr.mxu0 0.0
  %81 = vmatpush1.msra.mxu0 0.0
  %82 = vmatprep.subr.mxu0 0.0
  %83 = vmatpush1.msra.mxu0 0.0
  %84 = vmatprep.subr.mxu0 0.0
  %85 = vmatpush1.msra.mxu0 0.0
  %86 = vmatprep.subr.mxu0 0.0
  %87 = vmatpush1.msra.mxu0 0.0
  %88 = vmatprep.subr.mxu0 0.0
  %89 = vmatpush1.msra.mxu0 0.0
  %90 = vmatprep.subr.mxu0 0.0
  %91 = vmatpush1.msra.mxu0 0.0
  %92 = vmatprep.subr.mxu0 0.0
  %93 = vmatpush1.msra.mxu0 0.0
  %94 = vmatprep.subr.mxu0 0.0
  %95 = vmatpush1.msra.mxu0 0.0
  %96 = vmatprep.subr.mxu0 0.0
  %97 = vmatpush1.msra.mxu0 0.0
  %98 = vmatprep.mubr.f32.mxu0 0.0
  %99 = vmatmul.mubr.f32.gmra.mrb[0].mxu0 %v29
  %v100 = vpop.f32.mrb[0].mxu0
  %v101 = vadd.f32 %v25, %v100
  %v102 = vpop.f32.mrb[0].mxu0
  %103 = vmatprep.mubr.f32.mxu0 0.0
  %104 = vmatmul.mubr.f32.gmra.mrb[0].mxu0 %v32
  %v105 = vpop.f32.mrb[0].mxu0
  %v106 = vadd.f32 %v25, %v105
  %v107 = vpop.f32.mrb[0].mxu0
  %108 = vdwg.mxu0
  %109 = vst [vmem:[%s3] sm:$0xff] %v101
  %110 = vst [vmem:[%s3 + $0x8] sm:$0xff] %v106
  // Predicated region
  $region14: #{transformer_forward.21} parent=0 // pred_check
    _
  $region15: #{transformer_forward.21} parent=0 // pred_check_branch
    %112 = sbr.rel (0) target = $region17
  $region16: #{transformer_forward.21} parent=0 // pred_region
    _
  $region17: #{transformer_forward.21} parent=0 // pred_fallthru
    _
  // Predicated region
  $region18: #{transformer_forward.21} parent=0 // pred_check
    _
  $region19: #{transformer_forward.21} parent=0 // pred_check_branch
    %114 = sbr.rel (0) target = $region21
  $region20: #{transformer_forward.21} parent=0 // pred_region
    _
  $region21: #{transformer_forward.21} parent=0 // pred_fallthru
    _

// kernel: transformer_forward.12
$region0: #{transformer_forward.12}
  #allocation0 [shape = 'u32[]', space=smem, size = 0x4, offset = 0x4, fixed_abs, tag = 'smem constant byte address 0x4 - core index']
  #allocation1 [shape = 'u32[144,128]{1,0:T(1,128)}', space=vmem, size = 0x12000, scoped, tag = 'internal scratch']
  %s0 = inlined_call_operand.vmem [shape: f32[2,8,32], index: 0, kind: input, shape index: {}]
  %s1 = inlined_call_operand.vmem [shape: f32[32,64], index: 1, kind: input, shape index: {}]
  %s2 = inlined_call_operand.vmem [shape: f32[1,64], index: 2, kind: input, shape index: {}]
  %s3 = inlined_call_operand.vmem [shape: f32[64,32], index: 3, kind: input, shape index: {}]
  %s4 = inlined_call_operand.vmem [shape: f32[1,32], index: 4, kind: input, shape index: {}]
  %s5 = inlined_call_operand.vmem [shape: f32[1,32], index: 5, kind: input, shape index: {}]
  %s6 = inlined_call_operand.vmem [shape: f32[1,32], index: 6, kind: input, shape index: {}]
  %s7 = inlined_call_operand.vmem [shape: f32[2,8,32], index: 7, kind: output, shape index: {}]
  %s8 = sld [smem:[#allocation0]]
  $region38: #{transformer_forward.12} parent=0
    _
  %s10 = ssub.s32 1, %s8
  %s11 = scalar_select 0, %s10, %s8
  // Predicated region
  $region2: #{transformer_forward.12} parent=0 // pred_check
    _
  $region3: #{transformer_forward.12} parent=0 // pred_check_branch
    %13 = sbr.rel (0) target = $region5
  $region4: #{transformer_forward.12} parent=0 // pred_region
    _
  $region5: #{transformer_forward.12} parent=0 // pred_fallthru
    _
  // Predicated region
  $region6: #{transformer_forward.12} parent=0 // pred_check
    _
  $region7: #{transformer_forward.12} parent=0 // pred_check_branch
    %15 = sbr.rel (0) target = $region9
  $region8: #{transformer_forward.12} parent=0 // pred_region
    _
  $region9: #{transformer_forward.12} parent=0 // pred_fallthru
    _
  // Predicated region
  $region10: #{transformer_forward.12} parent=0 // pred_check
    _
  $region11: #{transformer_forward.12} parent=0 // pred_check_branch
    %17 = sbr.rel (0) target = $region13
  $region12: #{transformer_forward.12} parent=0 // pred_region
    _
  $region13: #{transformer_forward.12} parent=0 // pred_fallthru
    _
  // Predicated region
  $region14: #{transformer_forward.12} parent=0 // pred_check
    _
  $region15: #{transformer_forward.12} parent=0 // pred_check_branch
    %19 = sbr.rel (0) target = $region17
  $region16: #{transformer_forward.12} parent=0 // pred_region
    _
  $region17: #{transformer_forward.12} parent=0 // pred_fallthru
    _
  // Predicated region
  $region18: #{transformer_forward.12} parent=0 // pred_check
    _
  $region19: #{transformer_forward.12} parent=0 // pred_check_branch
    %21 = sbr.rel (0) target = $region21
  $region20: #{transformer_forward.12} parent=0 // pred_region
    _
  $region21: #{transformer_forward.12} parent=0 // pred_fallthru
    _
  // Predicated region
  $region22: #{transformer_forward.12} parent=0 // pred_check
    _
  $region23: #{transformer_forward.12} parent=0 // pred_check_branch
    %23 = sbr.rel (0) target = $region25
  $region24: #{transformer_forward.12} parent=0 // pred_region
    _
  $region25: #{transformer_forward.12} parent=0 // pred_fallthru
    _
  // Predicated region
  $region26: #{transformer_forward.12} parent=0 // pred_check
    _
  $region27: #{transformer_forward.12} parent=0 // pred_check_branch
    %25 = sbr.rel (0) target = $region29
  $region28: #{transformer_forward.12} parent=0 // pred_region
    _
  $region29: #{transformer_forward.12} parent=0 // pred_fallthru
    _
  %v26 = vld [vmem:[%s0] sm:$0xff]
  %v27 = vld [vmem:[%s0 + $0x8] sm:$0xff]
  %v28 = vld [vmem:[%s1] sm:$0xff]
  %v29 = vld [vmem:[%s1 + $0x8] sm:$0xff]
  %v30 = vld [vmem:[%s1 + $0x10] sm:$0xff]
  %v31 = vld [vmem:[%s1 + $0x18] sm:$0xff]
  %v32 = vld [vmem:[%s2] sm:$0x1]
  %v34 = vlaneseq
  %v35 = vshrl.u32 %v34, 7
  %v36 = vsub.s32 0, %v35
  %v37 = vrot.slane %v32, %v36
  %vm39 = vcmask 261120
  %v41 = vsel %vm39, %v26, 0
  %v44 = vsel %vm39, %v27, 0
  %46 = vmatprep.subr.mxu0 0.0
  %47 = vmatpush1.msra.mxu0 %v28
  %48 = vmatprep.subr.mxu0 0.0
  %49 = vmatpush1.msra.mxu0 %v29
  %50 = vmatprep.subr.mxu0 0.0
  %51 = vmatpush1.msra.mxu0 %v30
  %52 = vmatprep.subr.mxu0 0.0
  %53 = vmatpush1.msra.mxu0 %v31
  %54 = vmatprep.subr.mxu0 0.0
  %55 = vmatpush1.msra.mxu0 0.0
  %56 = vmatprep.subr.mxu0 0.0
  %57 = vmatpush1.msra.mxu0 0.0
  %58 = vmatprep.subr.mxu0 0.0
  %59 = vmatpush1.msra.mxu0 0.0
  %60 = vmatprep.subr.mxu0 0.0
  %61 = vmatpush1.msra.mxu0 0.0
  %62 = vmatprep.subr.mxu0 0.0
  %63 = vmatpush1.msra.mxu0 0.0
  %64 = vmatprep.subr.mxu0 0.0
  %65 = vmatpush1.msra.mxu0 0.0
  %66 = vmatprep.subr.mxu0 0.0
  %67 = vmatpush1.msra.mxu0 0.0
  %68 = vmatprep.subr.mxu0 0.0
  %69 = vmatpush1.msra.mxu0 0.0
  %70 = vmatprep.subr.mxu0 0.0
  %71 = vmatpush1.msra.mxu0 0.0
  %72 = vmatprep.subr.mxu0 0.0
  %73 = vmatpush1.msra.mxu0 0.0
  %74 = vmatprep.subr.mxu0 0.0
  %75 = vmatpush1.msra.mxu0 0.0
  %76 = vmatprep.subr.mxu0 0.0
  %77 = vmatpush1.msra.mxu0 0.0
  %78 = vmatprep.subr.mxu0 0.0
  %79 = vmatpush1.msra.mxu0 0.0
  %80 = vmatprep.subr.mxu0 0.0
  %81 = vmatpush1.msra.mxu0 0.0
  %82 = vmatprep.subr.mxu0 0.0
  %83 = vmatpush1.msra.mxu0 0.0
  %84 = vmatprep.subr.mxu0 0.0
  %85 = vmatpush1.msra.mxu0 0.0
  %86 = vmatprep.subr.mxu0 0.0
  %87 = vmatpush1.msra.mxu0 0.0
  %88 = vmatprep.subr.mxu0 0.0
  %89 = vmatpush1.msra.mxu0 0.0
  %90 = vmatprep.subr.mxu0 0.0
  %91 = vmatpush1.msra.mxu0 0.0
  %92 = vmatprep.subr.mxu0 0.0
  %93 = vmatpush1.msra.mxu0 0.0
  %94 = vmatprep.subr.mxu0 0.0
  %95 = vmatpush1.msra.mxu0 0.0
  %96 = vmatprep.subr.mxu0 0.0
  %97 = vmatpush1.msra.mxu0 0.0
  %98 = vmatprep.subr.mxu0 0.0
  %99 = vmatpush1.msra.mxu0 0.0
  %100 = vmatprep.subr.mxu0 0.0
  %101 = vmatpush1.msra.mxu0 0.0
  %102 = vmatprep.subr.mxu0 0.0
  %103 = vmatpush1.msra.mxu0 0.0
  %104 = vmatprep.subr.mxu0 0.0
  %105 = vmatpush1.msra.mxu0 0.0
  %106 = vmatprep.subr.mxu0 0.0
  %107 = vmatpush1.msra.mxu0 0.0
  %108 = vmatprep.subr.mxu0 0.0
  %109 = vmatpush1.msra.mxu0 0.0
  %110 = vmatprep.mubr.f32.mxu0 0.0
  %111 = vmatmul.mubr.f32.gmra.mrb[0].mxu0 %v41
  %v112 = vpop.f32.mrb[0].mxu0
  %v113 = vadd.f32 %v37, %v112
  %v114 = vpop.f32.mrb[0].mxu0
  %115 = vmatprep.mubr.f32.mxu0 0.0
  %116 = vmatmul.mubr.f32.gmra.mrb[0].mxu0 %v44
  %v117 = vpop.f32.mrb[0].mxu0
  %v118 = vadd.f32 %v37, %v117
  %v119 = vpop.f32.mrb[0].mxu0
  %120 = vdwg.mxu0
  %v121 = vmax.f32 %v113, 0.0
  %v122 = vmax.f32 %v118, 0.0
  %v123 = vld [vmem:[%s3] sm:$0xff]
  %v124 = vld [vmem:[%s3 + $0x8] sm:$0xff]
  %v125 = vld [vmem:[%s3 + $0x10] sm:$0xff]
  %v126 = vld [vmem:[%s3 + $0x18] sm:$0xff]
  %v127 = vld [vmem:[%s3 + $0x20] sm:$0xff]
  %v128 = vld [vmem:[%s3 + $0x28] sm:$0xff]
  %v129 = vld [vmem:[%s3 + $0x30] sm:$0xff]
  %v130 = vld [vmem:[%s3 + $0x38] sm:$0xff]
  %v131 = vld [vmem:[%s4] sm:$0x1]
  %v133 = vlaneseq
  %v134 = vshrl.u32 %v133, 7
  %v135 = vsub.s32 0, %v134
  %v136 = vrot.slane %v131, %v135
  %vm138 = vcmask 523264
  %v140 = vsel %vm138, %v121, 0
  %v143 = vsel %vm138, %v122, 0
  %145 = vmatprep.subr.mxu0 0.0
  %146 = vmatpush1.msra.mxu0 %v123
  %147 = vmatprep.subr.mxu0 0.0
  %148 = vmatpush1.msra.mxu0 %v124
  %149 = vmatprep.subr.mxu0 0.0
  %150 = vmatpush1.msra.mxu0 %v125
  %151 = vmatprep.subr.mxu0 0.0
  %152 = vmatpush1.msra.mxu0 %v126
  %153 = vmatprep.subr.mxu0 0.0
  %154 = vmatpush1.msra.mxu0 %v127
  %155 = vmatprep.subr.mxu0 0.0
  %156 = vmatpush1.msra.mxu0 %v128
  %157 = vmatprep.subr.mxu0 0.0
  %158 = vmatpush1.msra.mxu0 %v129
  %159 = vmatprep.subr.mxu0 0.0
  %160 = vmatpush1.msra.mxu0 %v130
  %161 = vmatprep.subr.mxu0 0.0
  %162 = vmatpush1.msra.mxu0 0.0
  %163 = vmatprep.subr.mxu0 0.0
  %164 = vmatpush1.msra.mxu0 0.0
  %165 = vmatprep.subr.mxu0 0.0
  %166 = vmatpush1.msra.mxu0 0.0
  %167 = vmatprep.subr.mxu0 0.0
  %168 = vmatpush1.msra.mxu0 0.0
  %169 = vmatprep.subr.mxu0 0.0
  %170 = vmatpush1.msra.mxu0 0.0
  %171 = vmatprep.subr.mxu0 0.0
  %172 = vmatpush1.msra.mxu0 0.0
  %173 = vmatprep.subr.mxu0 0.0
  %174 = vmatpush1.msra.mxu0 0.0
  %175 = vmatprep.subr.mxu0 0.0
  %176 = vmatpush1.msra.mxu0 0.0
  %177 = vmatprep.subr.mxu0 0.0
  %178 = vmatpush1.msra.mxu0 0.0
  %179 = vmatprep.subr.mxu0 0.0
  %180 = vmatpush1.msra.mxu0 0.0
  %181 = vmatprep.subr.mxu0 0.0
  %182 = vmatpush1.msra.mxu0 0.0
  %183 = vmatprep.subr.mxu0 0.0
  %184 = vmatpush1.msra.mxu0 0.0
  %185 = vmatprep.subr.mxu0 0.0
  %186 = vmatpush1.msra.mxu0 0.0
  %187 = vmatprep.subr.mxu0 0.0
  %188 = vmatpush1.msra.mxu0 0.0
  %189 = vmatprep.subr.mxu0 0.0
  %190 = vmatpush1.msra.mxu0 0.0
  %191 = vmatprep.subr.mxu0 0.0
  %192 = vmatpush1.msra.mxu0 0.0
  %193 = vmatprep.subr.mxu0 0.0
  %194 = vmatpush1.msra.mxu0 0.0
  %195 = vmatprep.subr.mxu0 0.0
  %196 = vmatpush1.msra.mxu0 0.0
  %197 = vmatprep.subr.mxu0 0.0
  %198 = vmatpush1.msra.mxu0 0.0
  %199 = vmatprep.subr.mxu0 0.0
  %200 = vmatpush1.msra.mxu0 0.0
  %201 = vmatprep.subr.mxu0 0.0
  %202 = vmatpush1.msra.mxu0 0.0
  %203 = vmatprep.subr.mxu0 0.0
  %204 = vmatpush1.msra.mxu0 0.0
  %205 = vmatprep.subr.mxu0 0.0
  %206 = vmatpush1.msra.mxu0 0.0
  %207 = vmatprep.subr.mxu0 0.0
  %208 = vmatpush1.msra.mxu0 0.0
  %209 = vmatprep.mubr.f32.mxu0 0.0
  %210 = vmatmul.mubr.f32.gmra.mrb[0].mxu0 %v140
  %v211 = vpop.f32.mrb[0].mxu0
  %v212 = vadd.f32 %v136, %v211
  %v213 = vpop.f32.mrb[0].mxu0
  %214 = vmatprep.mubr.f32.mxu0 0.0
  %215 = vmatmul.mubr.f32.gmra.mrb[0].mxu0 %v143
  %v216 = vpop.f32.mrb[0].mxu0
  %v217 = vadd.f32 %v136, %v216
  %v218 = vpop.f32.mrb[0].mxu0
  %219 = vdwg.mxu0
  %v220 = vadd.f32 %v212, %v26
  %v221 = vadd.f32 %v217, %v27
  %v222 = vsel %vm39, %v220, 0.0
  %223 = vadd.xlane.f32.xlu0 %v222
  %v224 = vpop.xlane.xlu0 %223
  %v225 = vsel %vm39, %v221, 0.0
  %226 = vadd.xlane.f32.xlu0 %v225
  %v227 = vpop.xlane.xlu0 %226
  %v228 = vrcp.pop 32.0
  %v229 = vmul.f32 %v224, %v228
  %v230 = vmul.f32 %v227, %v228
  %v231 = vsub.f32 %v220, %v229
  %v232 = vsub.f32 %v221, %v230
  %v233 = vmul.f32 %v231, %v231
  %v234 = vmul.f32 %v232, %v232
  %v235 = vsel %vm39, %v233, 0.0
  %236 = vadd.xlane.f32.xlu0 %v235
  %v237 = vpop.xlane.xlu0 %236
  %v238 = vsel %vm39, %v234, 0.0
  %239 = vadd.xlane.f32.xlu0 %v238
  %v240 = vpop.xlane.xlu0 %239
  %v241 = vmul.f32 %v237, %v228
  %v242 = vmul.f32 %v240, %v228
  %v243 = vadd.f32 %v241, 1e-05
  %v244 = vadd.f32 %v242, 1e-05
  %v245 = vrsqrt.pop %v243
  %v246 = vrsqrt.pop %v244
  %v247 = vmul.f32 %v231, %v245
  %v248 = vmul.f32 %v232, %v246
  %v249 = vld [vmem:[%s5] sm:$0x1]
  %v251 = vlaneseq
  %v252 = vshrl.u32 %v251, 7
  %v253 = vsub.s32 0, %v252
  %v254 = vrot.slane %v249, %v253
  %v256 = vmul.f32 %v247, %v254
  %v257 = vmul.f32 %v248, %v254
  %v258 = vld [vmem:[%s6] sm:$0x1]
  %v260 = vlaneseq
  %v261 = vshrl.u32 %v260, 7
  %v262 = vsub.s32 0, %v261
  %v263 = vrot.slane %v258, %v262
  %v265 = vadd.f32 %v256, %v263
  %v266 = vadd.f32 %v257, %v263
  %267 = vst.msk [vmem:[%s7] sm:$0xff] %vm39, %v265
  %268 = vst.msk [vmem:[%s7 + $0x8] sm:$0xff] %vm39, %v266
  // Predicated region
  $region30: #{transformer_forward.12} parent=0 // pred_check
    _
  $region31: #{transformer_forward.12} parent=0 // pred_check_branch
    %270 = sbr.rel (0) target = $region33
  $region32: #{transformer_forward.12} parent=0 // pred_region
    _
  $region33: #{transformer_forward.12} parent=0 // pred_fallthru
    _
  // Predicated region
  $region34: #{transformer_forward.12} parent=0 // pred_check
    _
  $region35: #{transformer_forward.12} parent=0 // pred_check_branch
    %272 = sbr.rel (0) target = $region37
  $region36: #{transformer_forward.12} parent=0 // pred_region
    _
  $region37: #{transformer_forward.12} parent=0 // pred_fallthru
    _

// kernel: transformer_forward.15
$region0: #{transformer_forward.15}
  #allocation0 [shape = 'u32[]', space=smem, size = 0x4, offset = 0x4, fixed_abs, tag = 'smem constant byte address 0x4 - core index']
  #allocation1 [shape = 'u32[144,128]{1,0:T(1,128)}', space=vmem, size = 0x12000, scoped, tag = 'internal scratch']
  %s0 = inlined_call_operand.vmem [shape: f32[2,8,32], index: 0, kind: input, shape index: {}]
  %s1 = inlined_call_operand.vmem [shape: f32[2,8,8], index: 1, kind: input, shape index: {}]
  %s2 = inlined_call_operand.vmem [shape: f32[4,32,8], index: 2, kind: input, shape index: {}]
  %s3 = inlined_call_operand.vmem [shape: f32[4,32,8], index: 3, kind: input, shape index: {}]
  %s4 = inlined_call_operand.vmem [shape: f32[4,8,32], index: 4, kind: input, shape index: {}]
  %s5 = inlined_call_operand.vmem [shape: f32[1,32], index: 5, kind: input, shape index: {}]
  %s6 = inlined_call_operand.vmem [shape: f32[1,32], index: 6, kind: input, shape index: {}]
  %s7 = inlined_call_operand.vmem [shape: f32[2,8,32], index: 7, kind: output, shape index: {}]
  %s8 = sld [smem:[#allocation0]]
  $region38: #{transformer_forward.15} parent=0
    _
  %s10 = ssub.s32 1, %s8
  %s11 = scalar_select 0, %s10, %s8
  // Predicated region
  $region2: #{transformer_forward.15} parent=0 // pred_check
    _
  $region3: #{transformer_forward.15} parent=0 // pred_check_branch
    %13 = sbr.rel (0) target = $region5
  $region4: #{transformer_forward.15} parent=0 // pred_region
    _
  $region5: #{transformer_forward.15} parent=0 // pred_fallthru
    _
  // Predicated region
  $region6: #{transformer_forward.15} parent=0 // pred_check
    _
  $region7: #{transformer_forward.15} parent=0 // pred_check_branch
    %15 = sbr.rel (0) target = $region9
  $region8: #{transformer_forward.15} parent=0 // pred_region
    _
  $region9: #{transformer_forward.15} parent=0 // pred_fallthru
    _
  // Predicated region
  $region10: #{transformer_forward.15} parent=0 // pred_check
    _
  $region11: #{transformer_forward.15} parent=0 // pred_check_branch
    %17 = sbr.rel (0) target = $region13
  $region12: #{transformer_forward.15} parent=0 // pred_region
    _
  $region13: #{transformer_forward.15} parent=0 // pred_fallthru
    _
  // Predicated region
  $region14: #{transformer_forward.15} parent=0 // pred_check
    _
  $region15: #{transformer_forward.15} parent=0 // pred_check_branch
    %19 = sbr.rel (0) target = $region17
  $region16: #{transformer_forward.15} parent=0 // pred_region
    _
  $region17: #{transformer_forward.15} parent=0 // pred_fallthru
    _
  // Predicated region
  $region18: #{transformer_forward.15} parent=0 // pred_check
    _
  $region19: #{transformer_forward.15} parent=0 // pred_check_branch
    %21 = sbr.rel (0) target = $region21
  $region20: #{transformer_forward.15} parent=0 // pred_region
    _
  $region21: #{transformer_forward.15} parent=0 // pred_fallthru
    _
  // Predicated region
  $region22: #{transformer_forward.15} parent=0 // pred_check
    _
  $region23: #{transformer_forward.15} parent=0 // pred_check_branch
    %23 = sbr.rel (0) target = $region25
  $region24: #{transformer_forward.15} parent=0 // pred_region
    _
  $region25: #{transformer_forward.15} parent=0 // pred_fallthru
    _
  // Predicated region
  $region26: #{transformer_forward.15} parent=0 // pred_check
    _
  $region27: #{transformer_forward.15} parent=0 // pred_check_branch
    %25 = sbr.rel (0) target = $region29
  $region28: #{transformer_forward.15} parent=0 // pred_region
    _
  $region29: #{transformer_forward.15} parent=0 // pred_fallthru
    _
  %v26 = vld [vmem:[%s0] sm:$0xff]
  %v27 = vld [vmem:[%s0 + $0x8] sm:$0xff]
  %v28 = vld [vmem:[%s1] sm:$0xff]
  %v29 = vld [vmem:[%s1 + $0x8] sm:$0xff]
  %v30 = vld [vmem:[%s2] sm:$0xff]
  %v31 = vld [vmem:[%s2 + $0x8] sm:$0xff]
  %v32 = vld [vmem:[%s2 + $0x10] sm:$0xff]
  %v33 = vld [vmem:[%s2 + $0x18] sm:$0xff]
  %v34 = vld [vmem:[%s3] sm:$0xff]
  %v35 = vld [vmem:[%s3 + $0x8] sm:$0xff]
  %v36 = vld [vmem:[%s3 + $0x10] sm:$0xff]
  %v37 = vld [vmem:[%s3 + $0x18] sm:$0xff]
  %vm38 = vcmask 261120
  %v40 = vsel %vm38, %v26, 0
  %v43 = vsel %vm38, %v27, 0
  %45 = vmatprep.subr.mxu0 0.0
  %46 = vmatpush1.msra.mxu0 %v30
  %47 = vmatprep.subr.mxu0 0.0
  %48 = vmatpush1.msra.mxu0 %v31
  %49 = vmatprep.subr.mxu0 0.0
  %50 = vmatpush1.msra.mxu0 %v32
  %51 = vmatprep.subr.mxu0 0.0
  %52 = vmatpush1.msra.mxu0 %v33
  %53 = vmatprep.subr.mxu0 0.0
  %54 = vmatpush1.msra.mxu0 0.0
  %55 = vmatprep.subr.mxu0 0.0
  %56 = vmatpush1.msra.mxu0 0.0
  %57 = vmatprep.subr.mxu0 0.0
  %58 = vmatpush1.msra.mxu0 0.0
  %59 = vmatprep.subr.mxu0 0.0
  %60 = vmatpush1.msra.mxu0 0.0
  %61 = vmatprep.subr.mxu0 0.0
  %62 = vmatpush1.msra.mxu0 0.0
  %63 = vmatprep.subr.mxu0 0.0
  %64 = vmatpush1.msra.mxu0 0.0
  %65 = vmatprep.subr.mxu0 0.0
  %66 = vmatpush1.msra.mxu0 0.0
  %67 = vmatprep.subr.mxu0 0.0
  %68 = vmatpush1.msra.mxu0 0.0
  %69 = vmatprep.subr.mxu0 0.0
  %70 = vmatpush1.msra.mxu0 0.0
  %71 = vmatprep.subr.mxu0 0.0
  %72 = vmatpush1.msra.mxu0 0.0
  %73 = vmatprep.subr.mxu0 0.0
  %74 = vmatpush1.msra.mxu0 0.0
  %75 = vmatprep.subr.mxu0 0.0
  %76 = vmatpush1.msra.mxu0 0.0
  %77 = vmatprep.subr.mxu0 0.0
  %78 = vmatpush1.msra.mxu0 0.0
  %79 = vmatprep.subr.mxu0 0.0
  %80 = vmatpush1.msra.mxu0 0.0
  %81 = vmatprep.subr.mxu0 0.0
  %82 = vmatpush1.msra.mxu0 0.0
  %83 = vmatprep.subr.mxu0 0.0
  %84 = vmatpush1.msra.mxu0 0.0
  %85 = vmatprep.subr.mxu0 0.0
  %86 = vmatpush1.msra.mxu0 0.0
  %87 = vmatprep.subr.mxu0 0.0
  %88 = vmatpush1.msra.mxu0 0.0
  %89 = vmatprep.subr.mxu0 0.0
  %90 = vmatpush1.msra.mxu0 0.0
  %91 = vmatprep.subr.mxu0 0.0
  %92 = vmatpush1.msra.mxu0 0.0
  %93 = vmatprep.subr.mxu0 0.0
  %94 = vmatpush1.msra.mxu0 0.0
  %95 = vmatprep.subr.mxu0 0.0
  %96 = vmatpush1.msra.mxu0 0.0
  %97 = vmatprep.subr.mxu0 0.0
  %98 = vmatpush1.msra.mxu0 0.0
  %99 = vmatprep.subr.mxu0 0.0
  %100 = vmatpush1.msra.mxu0 0.0
  %101 = vmatprep.subr.mxu0 0.0
  %102 = vmatpush1.msra.mxu0 0.0
  %103 = vmatprep.subr.mxu0 0.0
  %104 = vmatpush1.msra.mxu0 0.0
  %105 = vmatprep.subr.mxu0 0.0
  %106 = vmatpush1.msra.mxu0 0.0
  %107 = vmatprep.subr.mxu0 0.0
  %108 = vmatpush1.msra.mxu0 0.0
  %109 = vmatprep.mubr.f32.mxu0 0.0
  %110 = vmatmul.mubr.f32.gmra.mrb[0].mxu0 %v40
  %v111 = vpop.f32.mrb[0].mxu0
  %v112 = vadd.f32 0.0, %v111
  %v113 = vpop.f32.mrb[0].mxu0
  %114 = vmatprep.mubr.f32.mxu0 0.0
  %115 = vmatmul.mubr.f32.gmra.mrb[0].mxu0 %v43
  %v116 = vpop.f32.mrb[0].mxu0
  %v117 = vadd.f32 0.0, %v116
  %v118 = vpop.f32.mrb[0].mxu0
  %119 = vdwg.mxu0
  %120 = vmatprep.subr.mxu0 0.0
  %121 = vmatpush1.msra.mxu0 %v34
  %122 = vmatprep.subr.mxu0 0.0
  %123 = vmatpush1.msra.mxu0 %v35
  %124 = vmatprep.subr.mxu0 0.0
  %125 = vmatpush1.msra.mxu0 %v36
  %126 = vmatprep.subr.mxu0 0.0
  %127 = vmatpush1.msra.mxu0 %v37
  %128 = vmatprep.subr.mxu0 0.0
  %129 = vmatpush1.msra.mxu0 0.0
  %130 = vmatprep.subr.mxu0 0.0
  %131 = vmatpush1.msra.mxu0 0.0
  %132 = vmatprep.subr.mxu0 0.0
  %133 = vmatpush1.msra.mxu0 0.0
  %134 = vmatprep.subr.mxu0 0.0
  %135 = vmatpush1.msra.mxu0 0.0
  %136 = vmatprep.subr.mxu0 0.0
  %137 = vmatpush1.msra.mxu0 0.0
  %138 = vmatprep.subr.mxu0 0.0
  %139 = vmatpush1.msra.mxu0 0.0
  %140 = vmatprep.subr.mxu0 0.0
  %141 = vmatpush1.msra.mxu0 0.0
  %142 = vmatprep.subr.mxu0 0.0
  %143 = vmatpush1.msra.mxu0 0.0
  %144 = vmatprep.subr.mxu0 0.0
  %145 = vmatpush1.msra.mxu0 0.0
  %146 = vmatprep.subr.mxu0 0.0
  %147 = vmatpush1.msra.mxu0 0.0
  %148 = vmatprep.subr.mxu0 0.0
  %149 = vmatpush1.msra.mxu0 0.0
  %150 = vmatprep.subr.mxu0 0.0
  %151 = vmatpush1.msra.mxu0 0.0
  %152 = vmatprep.subr.mxu0 0.0
  %153 = vmatpush1.msra.mxu0 0.0
  %154 = vmatprep.subr.mxu0 0.0
  %155 = vmatpush1.msra.mxu0 0.0
  %156 = vmatprep.subr.mxu0 0.0
  %157 = vmatpush1.msra.mxu0 0.0
  %158 = vmatprep.subr.mxu0 0.0
  %159 = vmatpush1.msra.mxu0 0.0
  %160 = vmatprep.subr.mxu0 0.0
  %161 = vmatpush1.msra.mxu0 0.0
  %162 = vmatprep.subr.mxu0 0.0
  %163 = vmatpush1.msra.mxu0 0.0
  %164 = vmatprep.subr.mxu0 0.0
  %165 = vmatpush1.msra.mxu0 0.0
  %166 = vmatprep.subr.mxu0 0.0
  %167 = vmatpush1.msra.mxu0 0.0
  %168 = vmatprep.subr.mxu0 0.0
  %169 = vmatpush1.msra.mxu0 0.0
  %170 = vmatprep.subr.mxu0 0.0
  %171 = vmatpush1.msra.mxu0 0.0
  %172 = vmatprep.subr.mxu0 0.0
  %173 = vmatpush1.msra.mxu0 0.0
  %174 = vmatprep.subr.mxu0 0.0
  %175 = vmatpush1.msra.mxu0 0.0
  %176 = vmatprep.subr.mxu0 0.0
  %177 = vmatpush1.msra.mxu0 0.0
  %178 = vmatprep.subr.mxu0 0.0
  %179 = vmatpush1.msra.mxu0 0.0
  %180 = vmatprep.subr.mxu0 0.0
  %181 = vmatpush1.msra.mxu0 0.0
  %182 = vmatprep.subr.mxu0 0.0
  %183 = vmatpush1.msra.mxu0 0.0
  %184 = vmatprep.mubr.f32.mxu0 0.0
  %185 = vmatmul.mubr.f32.gmra.mrb[0].mxu0 %v40
  %v186 = vpop.f32.mrb[0].mxu0
  %v187 = vadd.f32 0.0, %v186
  %v188 = vpop.f32.mrb[0].mxu0
  %189 = vmatprep.mubr.f32.mxu0 0.0
  %190 = vmatmul.mubr.f32.gmra.mrb[0].mxu0 %v43
  %v191 = vpop.f32.mrb[0].mxu0
  %v192 = vadd.f32 0.0, %v191
  %v193 = vpop.f32.mrb[0].mxu0
  %194 = vdwg.mxu0
  %vm195 = vcmask 64512
  %v197 = vsel %vm195, %v112, 0
  %v200 = vsel %vm195, %v187, 0
  %202 = vmatprep.subr.mxu0 0.0
  %203 = vmatpush1.xpose.msra.mxu0 %v200
  %204 = vmatprep.subr.mxu0 0.0
  %205 = vmatpush1.xpose.msra.mxu0 0.0
  %206 = vmatprep.subr.mxu0 0.0
  %207 = vmatpush1.xpose.msra.mxu0 0.0
  %208 = vmatprep.subr.mxu0 0.0
  %209 = vmatpush1.xpose.msra.mxu0 0.0
  %210 = vmatprep.subr.mxu0 0.0
  %211 = vmatpush1.xpose.msra.mxu0 0.0
  %212 = vmatprep.subr.mxu0 0.0
  %213 = vmatpush1.xpose.msra.mxu0 0.0
  %214 = vmatprep.subr.mxu0 0.0
  %215 = vmatpush1.xpose.msra.mxu0 0.0
  %216 = vmatprep.subr.mxu0 0.0
  %217 = vmatpush1.xpose.msra.mxu0 0.0
  %218 = vmatprep.subr.mxu0 0.0
  %219 = vmatpush1.xpose.msra.mxu0 0.0
  %220 = vmatprep.subr.mxu0 0.0
  %221 = vmatpush1.xpose.msra.mxu0 0.0
  %222 = vmatprep.subr.mxu0 0.0
  %223 = vmatpush1.xpose.msra.mxu0 0.0
  %224 = vmatprep.subr.mxu0 0.0
  %225 = vmatpush1.xpose.msra.mxu0 0.0
  %226 = vmatprep.subr.mxu0 0.0
  %227 = vmatpush1.xpose.msra.mxu0 0.0
  %228 = vmatprep.subr.mxu0 0.0
  %229 = vmatpush1.xpose.msra.mxu0 0.0
  %230 = vmatprep.subr.mxu0 0.0
  %231 = vmatpush1.xpose.msra.mxu0 0.0
  %232 = vmatprep.subr.mxu0 0.0
  %233 = vmatpush1.xpose.msra.mxu0 0.0
  %234 = vmatprep.subr.mxu0 0.0
  %235 = vmatpush1.xpose.msra.mxu0 0.0
  %236 = vmatprep.subr.mxu0 0.0
  %237 = vmatpush1.xpose.msra.mxu0 0.0
  %238 = vmatprep.subr.mxu0 0.0
  %239 = vmatpush1.xpose.msra.mxu0 0.0
  %240 = vmatprep.subr.mxu0 0.0
  %241 = vmatpush1.xpose.msra.mxu0 0.0
  %242 = vmatprep.subr.mxu0 0.0
  %243 = vmatpush1.xpose.msra.mxu0 0.0
  %244 = vmatprep.subr.mxu0 0.0
  %245 = vmatpush1.xpose.msra.mxu0 0.0
  %246 = vmatprep.subr.mxu0 0.0
  %247 = vmatpush1.xpose.msra.mxu0 0.0
  %248 = vmatprep.subr.mxu0 0.0
  %249 = vmatpush1.xpose.msra.mxu0 0.0
  %250 = vmatprep.subr.mxu0 0.0
  %251 = vmatpush1.xpose.msra.mxu0 0.0
  %252 = vmatprep.subr.mxu0 0.0
  %253 = vmatpush1.xpose.msra.mxu0 0.0
  %254 = vmatprep.subr.mxu0 0.0
  %255 = vmatpush1.xpose.msra.mxu0 0.0
  %256 = vmatprep.subr.mxu0 0.0
  %257 = vmatpush1.xpose.msra.mxu0 0.0
  %258 = vmatprep.subr.mxu0 0.0
  %259 = vmatpush1.xpose.msra.mxu0 0.0
  %260 = vmatprep.subr.mxu0 0.0
  %261 = vmatpush1.xpose.msra.mxu0 0.0
  %262 = vmatprep.subr.mxu0 0.0
  %263 = vmatpush1.xpose.msra.mxu0 0.0
  %264 = vmatprep.subr.mxu0 0.0
  %265 = vmatpush1.xpose.msra.mxu0 0.0
  %266 = vmatprep.mubr.f32.mxu0 0.0
  %267 = vmatmul.mubr.f32.gmra.mrb[0].mxu0 %v197
  %v268 = vpop.f32.mrb[0].mxu0
  %v269 = vadd.f32 0.0, %v268
  %v270 = vpop.f32.mrb[0].mxu0
  %271 = vdwg.mxu0
  %v273 = vsel %vm195, %v117, 0
  %v276 = vsel %vm195, %v192, 0
  %278 = vmatprep.subr.mxu0 0.0
  %279 = vmatpush1.xpose.msra.mxu0 %v276
  %280 = vmatprep.subr.mxu0 0.0
  %281 = vmatpush1.xpose.msra.mxu0 0.0
  %282 = vmatprep.subr.mxu0 0.0
  %283 = vmatpush1.xpose.msra.mxu0 0.0
  %284 = vmatprep.subr.mxu0 0.0
  %285 = vmatpush1.xpose.msra.mxu0 0.0
  %286 = vmatprep.subr.mxu0 0.0
  %287 = vmatpush1.xpose.msra.mxu0 0.0
  %288 = vmatprep.subr.mxu0 0.0
  %289 = vmatpush1.xpose.msra.mxu0 0.0
  %290 = vmatprep.subr.mxu0 0.0
  %291 = vmatpush1.xpose.msra.mxu0 0.0
  %292 = vmatprep.subr.mxu0 0.0
  %293 = vmatpush1.xpose.msra.mxu0 0.0
  %294 = vmatprep.subr.mxu0 0.0
  %295 = vmatpush1.xpose.msra.mxu0 0.0
  %296 = vmatprep.subr.mxu0 0.0
  %297 = vmatpush1.xpose.msra.mxu0 0.0
  %298 = vmatprep.subr.mxu0 0.0
  %299 = vmatpush1.xpose.msra.mxu0 0.0
  %300 = vmatprep.subr.mxu0 0.0
  %301 = vmatpush1.xpose.msra.mxu0 0.0
  %302 = vmatprep.subr.mxu0 0.0
  %303 = vmatpush1.xpose.msra.mxu0 0.0
  %304 = vmatprep.subr.mxu0 0.0
  %305 = vmatpush1.xpose.msra.mxu0 0.0
  %306 = vmatprep.subr.mxu0 0.0
  %307 = vmatpush1.xpose.msra.mxu0 0.0
  %308 = vmatprep.subr.mxu0 0.0
  %309 = vmatpush1.xpose.msra.mxu0 0.0
  %310 = vmatprep.subr.mxu0 0.0
  %311 = vmatpush1.xpose.msra.mxu0 0.0
  %312 = vmatprep.subr.mxu0 0.0
  %313 = vmatpush1.xpose.msra.mxu0 0.0
  %314 = vmatprep.subr.mxu0 0.0
  %315 = vmatpush1.xpose.msra.mxu0 0.0
  %316 = vmatprep.subr.mxu0 0.0
  %317 = vmatpush1.xpose.msra.mxu0 0.0
  %318 = vmatprep.subr.mxu0 0.0
  %319 = vmatpush1.xpose.msra.mxu0 0.0
  %320 = vmatprep.subr.mxu0 0.0
  %321 = vmatpush1.xpose.msra.mxu0 0.0
  %322 = vmatprep.subr.mxu0 0.0
  %323 = vmatpush1.xpose.msra.mxu0 0.0
  %324 = vmatprep.subr.mxu0 0.0
  %325 = vmatpush1.xpose.msra.mxu0 0.0
  %326 = vmatprep.subr.mxu0 0.0
  %327 = vmatpush1.xpose.msra.mxu0 0.0
  %328 = vmatprep.subr.mxu0 0.0
  %329 = vmatpush1.xpose.msra.mxu0 0.0
  %330 = vmatprep.subr.mxu0 0.0
  %331 = vmatpush1.xpose.msra.mxu0 0.0
  %332 = vmatprep.subr.mxu0 0.0
  %333 = vmatpush1.xpose.msra.mxu0 0.0
  %334 = vmatprep.subr.mxu0 0.0
  %335 = vmatpush1.xpose.msra.mxu0 0.0
  %336 = vmatprep.subr.mxu0 0.0
  %337 = vmatpush1.xpose.msra.mxu0 0.0
  %338 = vmatprep.subr.mxu0 0.0
  %339 = vmatpush1.xpose.msra.mxu0 0.0
  %340 = vmatprep.subr.mxu0 0.0
  %341 = vmatpush1.xpose.msra.mxu0 0.0
  %342 = vmatprep.mubr.f32.mxu0 0.0
  %343 = vmatmul.mubr.f32.gmra.mrb[0].mxu0 %v273
  %v344 = vpop.f32.mrb[0].mxu0
  %v345 = vadd.f32 0.0, %v344
  %v346 = vpop.f32.mrb[0].mxu0
  %347 = vdwg.mxu0
  %v348 = vmul.f32 %v269, 0.35355338
  %v349 = vmul.f32 %v345, 0.35355338
  %vm350 = vcmp.gt.f32.partialorder %v28, 0.5
  %vm351 = vcmp.gt.f32.partialorder %v29, 0.5
  %v352 = vsel %vm350, -1e+30, %v348
  %v353 = vsel %vm351, -1e+30, %v349
  %v354 = vsel %vm195, %v352, -inf
  %355 = vmax.xlane.f32.xlu0 %v354
  %v356 = vpop.xlane.xlu0 %355
  %v357 = vsel %vm195, %v353, -inf
  %358 = vmax.xlane.f32.xlu0 %v357
  %v359 = vpop.xlane.xlu0 %358
  %v360 = vsub.f32 %v352, %v356
  %v361 = vsub.f32 %v353, %v359
  %v362 = vmul.f32 %v360, 1.442695
  %v363 = vpow.pop %v362
  %v364 = vmul.f32 %v361, 1.442695
  %v365 = vpow.pop %v364
  %v366 = vsel %vm195, %v363, 0.0
  %367 = vadd.xlane.f32.xlu0 %v366
  %v368 = vpop.xlane.xlu0 %367
  %v369 = vsel %vm195, %v365, 0.0
  %370 = vadd.xlane.f32.xlu0 %v369
  %v371 = vpop.xlane.xlu0 %370
  %v372 = vrcp.pop %v368
  %v373 = vrcp.pop %v371
  %v374 = vmul.f32 %v363, %v372
  %v375 = vmul.f32 %v365, %v373
  %v377 = vsel %vm195, %v374, 0
  %379 = vmatprep.subr.mxu0 0.0
  %380 = vmatpush1.msra.mxu0 %v112
  %381 = vmatprep.subr.mxu0 0.0
  %382 = vmatpush1.msra.mxu0 0.0
  %383 = vmatprep.subr.mxu0 0.0
  %384 = vmatpush1.msra.mxu0 0.0
  %385 = vmatprep.subr.mxu0 0.0
  %386 = vmatpush1.msra.mxu0 0.0
  %387 = vmatprep.subr.mxu0 0.0
  %388 = vmatpush1.msra.mxu0 0.0
  %389 = vmatprep.subr.mxu0 0.0
  %390 = vmatpush1.msra.mxu0 0.0
  %391 = vmatprep.subr.mxu0 0.0
  %392 = vmatpush1.msra.mxu0 0.0
  %393 = vmatprep.subr.mxu0 0.0
  %394 = vmatpush1.msra.mxu0 0.0
  %395 = vmatprep.subr.mxu0 0.0
  %396 = vmatpush1.msra.mxu0 0.0
  %397 = vmatprep.subr.mxu0 0.0
  %398 = vmatpush1.msra.mxu0 0.0
  %399 = vmatprep.subr.mxu0 0.0
  %400 = vmatpush1.msra.mxu0 0.0
  %401 = vmatprep.subr.mxu0 0.0
  %402 = vmatpush1.msra.mxu0 0.0
  %403 = vmatprep.subr.mxu0 0.0
  %404 = vmatpush1.msra.mxu0 0.0
  %405 = vmatprep.subr.mxu0 0.0
  %406 = vmatpush1.msra.mxu0 0.0
  %407 = vmatprep.subr.mxu0 0.0
  %408 = vmatpush1.msra.mxu0 0.0
  %409 = vmatprep.subr.mxu0 0.0
  %410 = vmatpush1.msra.mxu0 0.0
  %411 = vmatprep.subr.mxu0 0.0
  %412 = vmatpush1.msra.mxu0 0.0
  %413 = vmatprep.subr.mxu0 0.0
  %414 = vmatpush1.msra.mxu0 0.0
  %415 = vmatprep.subr.mxu0 0.0
  %416 = vmatpush1.msra.mxu0 0.0
  %417 = vmatprep.subr.mxu0 0.0
  %418 = vmatpush1.msra.mxu0 0.0
  %419 = vmatprep.subr.mxu0 0.0
  %420 = vmatpush1.msra.mxu0 0.0
  %421 = vmatprep.subr.mxu0 0.0
  %422 = vmatpush1.msra.mxu0 0.0
  %423 = vmatprep.subr.mxu0 0.0
  %424 = vmatpush1.msra.mxu0 0.0
  %425 = vmatprep.subr.mxu0 0.0
  %426 = vmatpush1.msra.mxu0 0.0
  %427 = vmatprep.subr.mxu0 0.0
  %428 = vmatpush1.msra.mxu0 0.0
  %429 = vmatprep.subr.mxu0 0.0
  %430 = vmatpush1.msra.mxu0 0.0
  %431 = vmatprep.subr.mxu0 0.0
  %432 = vmatpush1.msra.mxu0 0.0
  %433 = vmatprep.subr.mxu0 0.0
  %434 = vmatpush1.msra.mxu0 0.0
  %435 = vmatprep.subr.mxu0 0.0
  %436 = vmatpush1.msra.mxu0 0.0
  %437 = vmatprep.subr.mxu0 0.0
  %438 = vmatpush1.msra.mxu0 0.0
  %439 = vmatprep.subr.mxu0 0.0
  %440 = vmatpush1.msra.mxu0 0.0
  %441 = vmatprep.subr.mxu0 0.0
  %442 = vmatpush1.msra.mxu0 0.0
  %443 = vmatprep.mubr.f32.mxu0 0.0
  %444 = vmatmul.mubr.f32.gmra.mrb[0].mxu0 %v377
  %v445 = vpop.f32.mrb[0].mxu0
  %v446 = vadd.f32 0.0, %v445
  %v447 = vpop.f32.mrb[0].mxu0
  %448 = vdwg.mxu0
  %v450 = vsel %vm195, %v375, 0
  %452 = vmatprep.subr.mxu0 0.0
  %453 = vmatpush1.msra.mxu0 %v117
  %454 = vmatprep.subr.mxu0 0.0
  %455 = vmatpush1.msra.mxu0 0.0
  %456 = vmatprep.subr.mxu0 0.0
  %457 = vmatpush1.msra.mxu0 0.0
  %458 = vmatprep.subr.mxu0 0.0
  %459 = vmatpush1.msra.mxu0 0.0
  %460 = vmatprep.subr.mxu0 0.0
  %461 = vmatpush1.msra.mxu0 0.0
  %462 = vmatprep.subr.mxu0 0.0
  %463 = vmatpush1.msra.mxu0 0.0
  %464 = vmatprep.subr.mxu0 0.0
  %465 = vmatpush1.msra.mxu0 0.0
  %466 = vmatprep.subr.mxu0 0.0
  %467 = vmatpush1.msra.mxu0 0.0
  %468 = vmatprep.subr.mxu0 0.0
  %469 = vmatpush1.msra.mxu0 0.0
  %470 = vmatprep.subr.mxu0 0.0
  %471 = vmatpush1.msra.mxu0 0.0
  %472 = vmatprep.subr.mxu0 0.0
  %473 = vmatpush1.msra.mxu0 0.0
  %474 = vmatprep.subr.mxu0 0.0
  %475 = vmatpush1.msra.mxu0 0.0
  %476 = vmatprep.subr.mxu0 0.0
  %477 = vmatpush1.msra.mxu0 0.0
  %478 = vmatprep.subr.mxu0 0.0
  %479 = vmatpush1.msra.mxu0 0.0
  %480 = vmatprep.subr.mxu0 0.0
  %481 = vmatpush1.msra.mxu0 0.0
  %482 = vmatprep.subr.mxu0 0.0
  %483 = vmatpush1.msra.mxu0 0.0
  %484 = vmatprep.subr.mxu0 0.0
  %485 = vmatpush1.msra.mxu0 0.0
  %486 = vmatprep.subr.mxu0 0.0
  %487 = vmatpush1.msra.mxu0 0.0
  %488 = vmatprep.subr.mxu0 0.0
  %489 = vmatpush1.msra.mxu0 0.0
  %490 = vmatprep.subr.mxu0 0.0
  %491 = vmatpush1.msra.mxu0 0.0
  %492 = vmatprep.subr.mxu0 0.0
  %493 = vmatpush1.msra.mxu0 0.0
  %494 = vmatprep.subr.mxu0 0.0
  %495 = vmatpush1.msra.mxu0 0.0
  %496 = vmatprep.subr.mxu0 0.0
  %497 = vmatpush1.msra.mxu0 0.0
  %498 = vmatprep.subr.mxu0 0.0
  %499 = vmatpush1.msra.mxu0 0.0
  %500 = vmatprep.subr.mxu0 0.0
  %501 = vmatpush1.msra.mxu0 0.0
  %502 = vmatprep.subr.mxu0 0.0
  %503 = vmatpush1.msra.mxu0 0.0
  %504 = vmatprep.subr.mxu0 0.0
  %505 = vmatpush1.msra.mxu0 0.0
  %506 = vmatprep.subr.mxu0 0.0
  %507 = vmatpush1.msra.mxu0 0.0
  %508 = vmatprep.subr.mxu0 0.0
  %509 = vmatpush1.msra.mxu0 0.0
  %510 = vmatprep.subr.mxu0 0.0
  %511 = vmatpush1.msra.mxu0 0.0
  %512 = vmatprep.subr.mxu0 0.0
  %513 = vmatpush1.msra.mxu0 0.0
  %514 = vmatprep.subr.mxu0 0.0
  %515 = vmatpush1.msra.mxu0 0.0
  %516 = vmatprep.mubr.f32.mxu0 0.0
  %517 = vmatmul.mubr.f32.gmra.mrb[0].mxu0 %v450
  %v518 = vpop.f32.mrb[0].mxu0
  %v519 = vadd.f32 0.0, %v518
  %v520 = vpop.f32.mrb[0].mxu0
  %521 = vdwg.mxu0
  %v522 = vld [vmem:[%s4] sm:$0xff]
  %s523 = scalar_lea.vmem %s2, 32
  %v524 = vld [vmem:[%s523] sm:$0xff]
  %v525 = vld [vmem:[%s523 + $0x8] sm:$0xff]
  %v526 = vld [vmem:[%s523 + $0x10] sm:$0xff]
  %v527 = vld [vmem:[%s523 + $0x18] sm:$0xff]
  %s528 = scalar_lea.vmem %s3, 32
  %v529 = vld [vmem:[%s528] sm:$0xff]
  %v530 = vld [vmem:[%s528 + $0x8] sm:$0xff]
  %v531 = vld [vmem:[%s528 + $0x10] sm:$0xff]
  %v532 = vld [vmem:[%s528 + $0x18] sm:$0xff]
  %533 = vmatprep.subr.mxu0 0.0
  %534 = vmatpush1.msra.mxu0 %v524
  %535 = vmatprep.subr.mxu0 0.0
  %536 = vmatpush1.msra.mxu0 %v525
  %537 = vmatprep.subr.mxu0 0.0
  %538 = vmatpush1.msra.mxu0 %v526
  %539 = vmatprep.subr.mxu0 0.0
  %540 = vmatpush1.msra.mxu0 %v527
  %541 = vmatprep.subr.mxu0 0.0
  %542 = vmatpush1.msra.mxu0 0.0
  %543 = vmatprep.subr.mxu0 0.0
  %544 = vmatpush1.msra.mxu0 0.0
  %545 = vmatprep.subr.mxu0 0.0
  %546 = vmatpush1.msra.mxu0 0.0
  %547 = vmatprep.subr.mxu0 0.0
  %548 = vmatpush1.msra.mxu0 0.0
  %549 = vmatprep.subr.mxu0 0.0
  %550 = vmatpush1.msra.mxu0 0.0
  %551 = vmatprep.subr.mxu0 0.0
  %552 = vmatpush1.msra.mxu0 0.0
  %553 = vmatprep.subr.mxu0 0.0
  %554 = vmatpush1.msra.mxu0 0.0
  %555 = vmatprep.subr.mxu0 0.0
  %556 = vmatpush1.msra.mxu0 0.0
  %557 = vmatprep.subr.mxu0 0.0
  %558 = vmatpush1.msra.mxu0 0.0
  %559 = vmatprep.subr.mxu0 0.0
  %560 = vmatpush1.msra.mxu0 0.0
  %561 = vmatprep.subr.mxu0 0.0
  %562 = vmatpush1.msra.mxu0 0.0
  %563 = vmatprep.subr.mxu0 0.0
  %564 = vmatpush1.msra.mxu0 0.0
  %565 = vmatprep.subr.mxu0 0.0
  %566 = vmatpush1.msra.mxu0 0.0
  %567 = vmatprep.subr.mxu0 0.0
  %568 = vmatpush1.msra.mxu0 0.0
  %569 = vmatprep.subr.mxu0 0.0
  %570 = vmatpush1.msra.mxu0 0.0
  %571 = vmatprep.subr.mxu0 0.0
  %572 = vmatpush1.msra.mxu0 0.0
  %573 = vmatprep.subr.mxu0 0.0
  %574 = vmatpush1.msra.mxu0 0.0
  %575 = vmatprep.subr.mxu0 0.0
  %576 = vmatpush1.msra.mxu0 0.0
  %577 = vmatprep.subr.mxu0 0.0
  %578 = vmatpush1.msra.mxu0 0.0
  %579 = vmatprep.subr.mxu0 0.0
  %580 = vmatpush1.msra.mxu0 0.0
  %581 = vmatprep.subr.mxu0 0.0
  %582 = vmatpush1.msra.mxu0 0.0
  %583 = vmatprep.subr.mxu0 0.0
  %584 = vmatpush1.msra.mxu0 0.0
  %585 = vmatprep.subr.mxu0 0.0
  %586 = vmatpush1.msra.mxu0 0.0
  %587 = vmatprep.subr.mxu0 0.0
  %588 = vmatpush1.msra.mxu0 0.0
  %589 = vmatprep.subr.mxu0 0.0
  %590 = vmatpush1.msra.mxu0 0.0
  %591 = vmatprep.subr.mxu0 0.0
  %592 = vmatpush1.msra.mxu0 0.0
  %593 = vmatprep.subr.mxu0 0.0
  %594 = vmatpush1.msra.mxu0 0.0
  %595 = vmatprep.subr.mxu0 0.0
  %596 = vmatpush1.msra.mxu0 0.0
  %597 = vmatprep.mubr.f32.mxu0 0.0
  %598 = vmatmul.mubr.f32.gmra.mrb[0].mxu0 %v40
  %v599 = vpop.f32.mrb[0].mxu0
  %v600 = vadd.f32 0.0, %v599
  %v601 = vpop.f32.mrb[0].mxu0
  %602 = vmatprep.mubr.f32.mxu0 0.0
  %603 = vmatmul.mubr.f32.gmra.mrb[0].mxu0 %v43
  %v604 = vpop.f32.mrb[0].mxu0
  %v605 = vadd.f32 0.0, %v604
  %v606 = vpop.f32.mrb[0].mxu0
  %607 = vdwg.mxu0
  %608 = vmatprep.subr.mxu0 0.0
  %609 = vmatpush1.msra.mxu0 %v529
  %610 = vmatprep.subr.mxu0 0.0
  %611 = vmatpush1.msra.mxu0 %v530
  %612 = vmatprep.subr.mxu0 0.0
  %613 = vmatpush1.msra.mxu0 %v531
  %614 = vmatprep.subr.mxu0 0.0
  %615 = vmatpush1.msra.mxu0 %v532
  %616 = vmatprep.subr.mxu0 0.0
  %617 = vmatpush1.msra.mxu0 0.0
  %618 = vmatprep.subr.mxu0 0.0
  %619 = vmatpush1.msra.mxu0 0.0
  %620 = vmatprep.subr.mxu0 0.0
  %621 = vmatpush1.msra.mxu0 0.0
  %622 = vmatprep.subr.mxu0 0.0
  %623 = vmatpush1.msra.mxu0 0.0
  %624 = vmatprep.subr.mxu0 0.0
  %625 = vmatpush1.msra.mxu0 0.0
  %626 = vmatprep.subr.mxu0 0.0
  %627 = vmatpush1.msra.mxu0 0.0
  %628 = vmatprep.subr.mxu0 0.0
  %629 = vmatpush1.msra.mxu0 0.0
  %630 = vmatprep.subr.mxu0 0.0
  %631 = vmatpush1.msra.mxu0 0.0
  %632 = vmatprep.subr.mxu0 0.0
  %633 = vmatpush1.msra.mxu0 0.0
  %634 = vmatprep.subr.mxu0 0.0
  %635 = vmatpush1.msra.mxu0 0.0
  %636 = vmatprep.subr.mxu0 0.0
  %637 = vmatpush1.msra.mxu0 0.0
  %638 = vmatprep.subr.mxu0 0.0
  %639 = vmatpush1.msra.mxu0 0.0
  %640 = vmatprep.subr.mxu0 0.0
  %641 = vmatpush1.msra.mxu0 0.0
  %642 = vmatprep.subr.mxu0 0.0
  %643 = vmatpush1.msra.mxu0 0.0
  %644 = vmatprep.subr.mxu0 0.0
  %645 = vmatpush1.msra.mxu0 0.0
  %646 = vmatprep.subr.mxu0 0.0
  %647 = vmatpush1.msra.mxu0 0.0
  %648 = vmatprep.subr.mxu0 0.0
  %649 = vmatpush1.msra.mxu0 0.0
  %650 = vmatprep.subr.mxu0 0.0
  %651 = vmatpush1.msra.mxu0 0.0
  %652 = vmatprep.subr.mxu0 0.0
  %653 = vmatpush1.msra.mxu0 0.0
  %654 = vmatprep.subr.mxu0 0.0
  %655 = vmatpush1.msra.mxu0 0.0
  %656 = vmatprep.subr.mxu0 0.0
  %657 = vmatpush1.msra.mxu0 0.0
  %658 = vmatprep.subr.mxu0 0.0
  %659 = vmatpush1.msra.mxu0 0.0
  %660 = vmatprep.subr.mxu0 0.0
  %661 = vmatpush1.msra.mxu0 0.0
  %662 = vmatprep.subr.mxu0 0.0
  %663 = vmatpush1.msra.mxu0 0.0
  %664 = vmatprep.subr.mxu0 0.0
  %665 = vmatpush1.msra.mxu0 0.0
  %666 = vmatprep.subr.mxu0 0.0
  %667 = vmatpush1.msra.mxu0 0.0
  %668 = vmatprep.subr.mxu0 0.0
  %669 = vmatpush1.msra.mxu0 0.0
  %670 = vmatprep.subr.mxu0 0.0
  %671 = vmatpush1.msra.mxu0 0.0
  %672 = vmatprep.mubr.f32.mxu0 0.0
  %673 = vmatmul.mubr.f32.gmra.mrb[0].mxu0 %v40
  %v674 = vpop.f32.mrb[0].mxu0
  %v675 = vadd.f32 0.0, %v674
  %v676 = vpop.f32.mrb[0].mxu0
  %677 = vmatprep.mubr.f32.mxu0 0.0
  %678 = vmatmul.mubr.f32.gmra.mrb[0].mxu0 %v43
  %v679 = vpop.f32.mrb[0].mxu0
  %v680 = vadd.f32 0.0, %v679
  %v681 = vpop.f32.mrb[0].mxu0
  %682 = vdwg.mxu0
  %v684 = vsel %vm195, %v600, 0
  %v687 = vsel %vm195, %v675, 0
  %689 = vmatprep.subr.mxu0 0.0
  %690 = vmatpush1.xpose.msra.mxu0 %v687
  %691 = vmatprep.subr.mxu0 0.0
  %692 = vmatpush1.xpose.msra.mxu0 0.0
  %693 = vmatprep.subr.mxu0 0.0
  %694 = vmatpush1.xpose.msra.mxu0 0.0
  %695 = vmatprep.subr.mxu0 0.0
  %696 = vmatpush1.xpose.msra.mxu0 0.0
  %697 = vmatprep.subr.mxu0 0.0
  %698 = vmatpush1.xpose.msra.mxu0 0.0
  %699 = vmatprep.subr.mxu0 0.0
  %700 = vmatpush1.xpose.msra.mxu0 0.0
  %701 = vmatprep.subr.mxu0 0.0
  %702 = vmatpush1.xpose.msra.mxu0 0.0
  %703 = vmatprep.subr.mxu0 0.0
  %704 = vmatpush1.xpose.msra.mxu0 0.0
  %705 = vmatprep.subr.mxu0 0.0
  %706 = vmatpush1.xpose.msra.mxu0 0.0
  %707 = vmatprep.subr.mxu0 0.0
  %708 = vmatpush1.xpose.msra.mxu0 0.0
  %709 = vmatprep.subr.mxu0 0.0
  %710 = vmatpush1.xpose.msra.mxu0 0.0
  %711 = vmatprep.subr.mxu0 0.0
  %712 = vmatpush1.xpose.msra.mxu0 0.0
  %713 = vmatprep.subr.mxu0 0.0
  %714 = vmatpush1.xpose.msra.mxu0 0.0
  %715 = vmatprep.subr.mxu0 0.0
  %716 = vmatpush1.xpose.msra.mxu0 0.0
  %717 = vmatprep.subr.mxu0 0.0
  %718 = vmatpush1.xpose.msra.mxu0 0.0
  %719 = vmatprep.subr.mxu0 0.0
  %720 = vmatpush1.xpose.msra.mxu0 0.0
  %721 = vmatprep.subr.mxu0 0.0
  %722 = vmatpush1.xpose.msra.mxu0 0.0
  %723 = vmatprep.subr.mxu0 0.0
  %724 = vmatpush1.xpose.msra.mxu0 0.0
  %725 = vmatprep.subr.mxu0 0.0
  %726 = vmatpush1.xpose.msra.mxu0 0.0
  %727 = vmatprep.subr.mxu0 0.0
  %728 = vmatpush1.xpose.msra.mxu0 0.0
  %729 = vmatprep.subr.mxu0 0.0
  %730 = vmatpush1.xpose.msra.mxu0 0.0
  %731 = vmatprep.subr.mxu0 0.0
  %732 = vmatpush1.xpose.msra.mxu0 0.0
  %733 = vmatprep.subr.mxu0 0.0
  %734 = vmatpush1.xpose.msra.mxu0 0.0
  %735 = vmatprep.subr.mxu0 0.0
  %736 = vmatpush1.xpose.msra.mxu0 0.0
  %737 = vmatprep.subr.mxu0 0.0
  %738 = vmatpush1.xpose.msra.mxu0 0.0
  %739 = vmatprep.subr.mxu0 0.0
  %740 = vmatpush1.xpose.msra.mxu0 0.0
  %741 = vmatprep.subr.mxu0 0.0
  %742 = vmatpush1.xpose.msra.mxu0 0.0
  %743 = vmatprep.subr.mxu0 0.0
  %744 = vmatpush1.xpose.msra.mxu0 0.0
  %745 = vmatprep.subr.mxu0 0.0
  %746 = vmatpush1.xpose.msra.mxu0 0.0
  %747 = vmatprep.subr.mxu0 0.0
  %748 = vmatpush1.xpose.msra.mxu0 0.0
  %749 = vmatprep.subr.mxu0 0.0
  %750 = vmatpush1.xpose.msra.mxu0 0.0
  %751 = vmatprep.subr.mxu0 0.0
  %752 = vmatpush1.xpose.msra.mxu0 0.0
  %753 = vmatprep.mubr.f32.mxu0 0.0
  %754 = vmatmul.mubr.f32.gmra.mrb[0].mxu0 %v684
  %v755 = vpop.f32.mrb[0].mxu0
  %v756 = vadd.f32 0.0, %v755
  %v757 = vpop.f32.mrb[0].mxu0
  %758 = vdwg.mxu0
  %v760 = vsel %vm195, %v605, 0
  %v763 = vsel %vm195, %v680, 0
  %765 = vmatprep.subr.mxu0 0.0
  %766 = vmatpush1.xpose.msra.mxu0 %v763
  %767 = vmatprep.subr.mxu0 0.0
  %768 = vmatpush1.xpose.msra.mxu0 0.0
  %769 = vmatprep.subr.mxu0 0.0
  %770 = vmatpush1.xpose.msra.mxu0 0.0
  %771 = vmatprep.subr.mxu0 0.0
  %772 = vmatpush1.xpose.msra.mxu0 0.0
  %773 = vmatprep.subr.mxu0 0.0
  %774 = vmatpush1.xpose.msra.mxu0 0.0
  %775 = vmatprep.subr.mxu0 0.0
  %776 = vmatpush1.xpose.msra.mxu0 0.0
  %777 = vmatprep.subr.mxu0 0.0
  %778 = vmatpush1.xpose.msra.mxu0 0.0
  %779 = vmatprep.subr.mxu0 0.0
  %780 = vmatpush1.xpose.msra.mxu0 0.0
  %781 = vmatprep.subr.mxu0 0.0
  %782 = vmatpush1.xpose.msra.mxu0 0.0
  %783 = vmatprep.subr.mxu0 0.0
  %784 = vmatpush1.xpose.msra.mxu0 0.0
  %785 = vmatprep.subr.mxu0 0.0
  %786 = vmatpush1.xpose.msra.mxu0 0.0
  %787 = vmatprep.subr.mxu0 0.0
  %788 = vmatpush1.xpose.msra.mxu0 0.0
  %789 = vmatprep.subr.mxu0 0.0
  %790 = vmatpush1.xpose.msra.mxu0 0.0
  %791 = vmatprep.subr.mxu0 0.0
  %792 = vmatpush1.xpose.msra.mxu0 0.0
  %793 = vmatprep.subr.mxu0 0.0
  %794 = vmatpush1.xpose.msra.mxu0 0.0
  %795 = vmatprep.subr.mxu0 0.0
  %796 = vmatpush1.xpose.msra.mxu0 0.0
  %797 = vmatprep.subr.mxu0 0.0
  %798 = vmatpush1.xpose.msra.mxu0 0.0
  %799 = vmatprep.subr.mxu0 0.0
  %800 = vmatpush1.xpose.msra.mxu0 0.0
  %801 = vmatprep.subr.mxu0 0.0
  %802 = vmatpush1.xpose.msra.mxu0 0.0
  %803 = vmatprep.subr.mxu0 0.0
  %804 = vmatpush1.xpose.msra.mxu0 0.0
  %805 = vmatprep.subr.mxu0 0.0
  %806 = vmatpush1.xpose.msra.mxu0 0.0
  %807 = vmatprep.subr.mxu0 0.0
  %808 = vmatpush1.xpose.msra.mxu0 0.0
  %809 = vmatprep.subr.mxu0 0.0
  %810 = vmatpush1.xpose.msra.mxu0 0.0
  %811 = vmatprep.subr.mxu0 0.0
  %812 = vmatpush1.xpose.msra.mxu0 0.0
  %813 = vmatprep.subr.mxu0 0.0
  %814 = vmatpush1.xpose.msra.mxu0 0.0
  %815 = vmatprep.subr.mxu0 0.0
  %816 = vmatpush1.xpose.msra.mxu0 0.0
  %817 = vmatprep.subr.mxu0 0.0
  %818 = vmatpush1.xpose.msra.mxu0 0.0
  %819 = vmatprep.subr.mxu0 0.0
  %820 = vmatpush1.xpose.msra.mxu0 0.0
  %821 = vmatprep.subr.mxu0 0.0
  %822 = vmatpush1.xpose.msra.mxu0 0.0
  %823 = vmatprep.subr.mxu0 0.0
  %824 = vmatpush1.xpose.msra.mxu0 0.0
  %825 = vmatprep.subr.mxu0 0.0
  %826 = vmatpush1.xpose.msra.mxu0 0.0
  %827 = vmatprep.subr.mxu0 0.0
  %828 = vmatpush1.xpose.msra.mxu0 0.0
  %829 = vmatprep.mubr.f32.mxu0 0.0
  %830 = vmatmul.mubr.f32.gmra.mrb[0].mxu0 %v760
  %v831 = vpop.f32.mrb[0].mxu0
  %v832 = vadd.f32 0.0, %v831
  %v833 = vpop.f32.mrb[0].mxu0
  %834 = vdwg.mxu0
  %v835 = vmul.f32 %v756, 0.35355338
  %v836 = vmul.f32 %v832, 0.35355338
  %v837 = vsel %vm350, -1e+30, %v835
  %v838 = vsel %vm351, -1e+30, %v836
  %v839 = vsel %vm195, %v837, -inf
  %840 = vmax.xlane.f32.xlu0 %v839
  %v841 = vpop.xlane.xlu0 %840
  %v842 = vsel %vm195, %v838, -inf
  %843 = vmax.xlane.f32.xlu0 %v842
  %v844 = vpop.xlane.xlu0 %843
  %v845 = vsub.f32 %v837, %v841
  %v846 = vsub.f32 %v838, %v844
  %v847 = vmul.f32 %v845, 1.442695
  %v848 = vpow.pop %v847
  %v849 = vmul.f32 %v846, 1.442695
  %v850 = vpow.pop %v849
  %v851 = vsel %vm195, %v848, 0.0
  %852 = vadd.xlane.f32.xlu0 %v851
  %v853 = vpop.xlane.xlu0 %852
  %v854 = vsel %vm195, %v850, 0.0
  %855 = vadd.xlane.f32.xlu0 %v854
  %v856 = vpop.xlane.xlu0 %855
  %v857 = vrcp.pop %v853
  %v858 = vrcp.pop %v856
  %v859 = vmul.f32 %v848, %v857
  %v860 = vmul.f32 %v850, %v858
  %v862 = vsel %vm195, %v859, 0
  %864 = vmatprep.subr.mxu0 0.0
  %865 = vmatpush1.msra.mxu0 %v600
  %866 = vmatprep.subr.mxu0 0.0
  %867 = vmatpush1.msra.mxu0 0.0
  %868 = vmatprep.subr.mxu0 0.0
  %869 = vmatpush1.msra.mxu0 0.0
  %870 = vmatprep.subr.mxu0 0.0
  %871 = vmatpush1.msra.mxu0 0.0
  %872 = vmatprep.subr.mxu0 0.0
  %873 = vmatpush1.msra.mxu0 0.0
  %874 = vmatprep.subr.mxu0 0.0
  %875 = vmatpush1.msra.mxu0 0.0
  %876 = vmatprep.subr.mxu0 0.0
  %877 = vmatpush1.msra.mxu0 0.0
  %878 = vmatprep.subr.mxu0 0.0
  %879 = vmatpush1.msra.mxu0 0.0
  %880 = vmatprep.subr.mxu0 0.0
  %881 = vmatpush1.msra.mxu0 0.0
  %882 = vmatprep.subr.mxu0 0.0
  %883 = vmatpush1.msra.mxu0 0.0
  %884 = vmatprep.subr.mxu0 0.0
  %885 = vmatpush1.msra.mxu0 0.0
  %886 = vmatprep.subr.mxu0 0.0
  %887 = vmatpush1.msra.mxu0 0.0
  %888 = vmatprep.subr.mxu0 0.0
  %889 = vmatpush1.msra.mxu0 0.0
  %890 = vmatprep.subr.mxu0 0.0
  %891 = vmatpush1.msra.mxu0 0.0
  %892 = vmatprep.subr.mxu0 0.0
  %893 = vmatpush1.msra.mxu0 0.0
  %894 = vmatprep.subr.mxu0 0.0
  %895 = vmatpush1.msra.mxu0 0.0
  %896 = vmatprep.subr.mxu0 0.0
  %897 = vmatpush1.msra.mxu0 0.0
  %898 = vmatprep.subr.mxu0 0.0
  %899 = vmatpush1.msra.mxu0 0.0
  %900 = vmatprep.subr.mxu0 0.0
  %901 = vmatpush1.msra.mxu0 0.0
  %902 = vmatprep.subr.mxu0 0.0
  %903 = vmatpush1.msra.mxu0 0.0
  %904 = vmatprep.subr.mxu0 0.0
  %905 = vmatpush1.msra.mxu0 0.0
  %906 = vmatprep.subr.mxu0 0.0
  %907 = vmatpush1.msra.mxu0 0.0
  %908 = vmatprep.subr.mxu0 0.0
  %909 = vmatpush1.msra.mxu0 0.0
  %910 = vmatprep.subr.mxu0 0.0
  %911 = vmatpush1.msra.mxu0 0.0
  %912 = vmatprep.subr.mxu0 0.0
  %913 = vmatpush1.msra.mxu0 0.0
  %914 = vmatprep.subr.mxu0 0.0
  %915 = vmatpush1.msra.mxu0 0.0
  %916 = vmatprep.subr.mxu0 0.0
  %917 = vmatpush1.msra.mxu0 0.0
  %918 = vmatprep.subr.mxu0 0.0
  %919 = vmatpush1.msra.mxu0 0.0
  %920 = vmatprep.subr.mxu0 0.0
  %921 = vmatpush1.msra.mxu0 0.0
  %922 = vmatprep.subr.mxu0 0.0
  %923 = vmatpush1.msra.mxu0 0.0
  %924 = vmatprep.subr.mxu0 0.0
  %925 = vmatpush1.msra.mxu0 0.0
  %926 = vmatprep.subr.mxu0 0.0
  %927 = vmatpush1.msra.mxu0 0.0
  %928 = vmatprep.mubr.f32.mxu0 0.0
  %929 = vmatmul.mubr.f32.gmra.mrb[0].mxu0 %v862
  %v930 = vpop.f32.mrb[0].mxu0
  %v931 = vadd.f32 0.0, %v930
  %v932 = vpop.f32.mrb[0].mxu0
  %933 = vdwg.mxu0
  %v935 = vsel %vm195, %v860, 0
  %937 = vmatprep.subr.mxu0 0.0
  %938 = vmatpush1.msra.mxu0 %v605
  %939 = vmatprep.subr.mxu0 0.0
  %940 = vmatpush1.msra.mxu0 0.0
  %941 = vmatprep.subr.mxu0 0.0
  %942 = vmatpush1.msra.mxu0 0.0
  %943 = vmatprep.subr.mxu0 0.0
  %944 = vmatpush1.msra.mxu0 0.0
  %945 = vmatprep.subr.mxu0 0.0
  %946 = vmatpush1.msra.mxu0 0.0
  %947 = vmatprep.subr.mxu0 0.0
  %948 = vmatpush1.msra.mxu0 0.0
  %949 = vmatprep.subr.mxu0 0.0
  %950 = vmatpush1.msra.mxu0 0.0
  %951 = vmatprep.subr.mxu0 0.0
  %952 = vmatpush1.msra.mxu0 0.0
  %953 = vmatprep.subr.mxu0 0.0
  %954 = vmatpush1.msra.mxu0 0.0
  %955 = vmatprep.subr.mxu0 0.0
  %956 = vmatpush1.msra.mxu0 0.0
  %957 = vmatprep.subr.mxu0 0.0
  %958 = vmatpush1.msra.mxu0 0.0
  %959 = vmatprep.subr.mxu0 0.0
  %960 = vmatpush1.msra.mxu0 0.0
  %961 = vmatprep.subr.mxu0 0.0
  %962 = vmatpush1.msra.mxu0 0.0
  %963 = vmatprep.subr.mxu0 0.0
  %964 = vmatpush1.msra.mxu0 0.0
  %965 = vmatprep.subr.mxu0 0.0
  %966 = vmatpush1.msra.mxu0 0.0
  %967 = vmatprep.subr.mxu0 0.0
  %968 = vmatpush1.msra.mxu0 0.0
  %969 = vmatprep.subr.mxu0 0.0
  %970 = vmatpush1.msra.mxu0 0.0
  %971 = vmatprep.subr.mxu0 0.0
  %972 = vmatpush1.msra.mxu0 0.0
  %973 = vmatprep.subr.mxu0 0.0
  %974 = vmatpush1.msra.mxu0 0.0
  %975 = vmatprep.subr.mxu0 0.0
  %976 = vmatpush1.msra.mxu0 0.0
  %977 = vmatprep.subr.mxu0 0.0
  %978 = vmatpush1.msra.mxu0 0.0
  %979 = vmatprep.subr.mxu0 0.0
  %980 = vmatpush1.msra.mxu0 0.0
  %981 = vmatprep.subr.mxu0 0.0
  %982 = vmatpush1.msra.mxu0 0.0
  %983 = vmatprep.subr.mxu0 0.0
  %984 = vmatpush1.msra.mxu0 0.0
  %985 = vmatprep.subr.mxu0 0.0
  %986 = vmatpush1.msra.mxu0 0.0
  %987 = vmatprep.subr.mxu0 0.0
  %988 = vmatpush1.msra.mxu0 0.0
  %989 = vmatprep.subr.mxu0 0.0
  %990 = vmatpush1.msra.mxu0 0.0
  %991 = vmatprep.subr.mxu0 0.0
  %992 = vmatpush1.msra.mxu0 0.0
  %993 = vmatprep.subr.mxu0 0.0
  %994 = vmatpush1.msra.mxu0 0.0
  %995 = vmatprep.subr.mxu0 0.0
  %996 = vmatpush1.msra.mxu0 0.0
  %997 = vmatprep.subr.mxu0 0.0
  %998 = vmatpush1.msra.mxu0 0.0
  %999 = vmatprep.subr.mxu0 0.0
  %1000 = vmatpush1.msra.mxu0 0.0
  %1001 = vmatprep.mubr.f32.mxu0 0.0
  %1002 = vmatmul.mubr.f32.gmra.mrb[0].mxu0 %v935
  %v1003 = vpop.f32.mrb[0].mxu0
  %v1004 = vadd.f32 0.0, %v1003
  %v1005 = vpop.f32.mrb[0].mxu0
  %1006 = vdwg.mxu0
  %s1007 = scalar_lea.vmem %s4, 8
  %v1008 = vld [vmem:[%s1007] sm:$0xff]
  %v1010 = vsel %vm195, %v931, 0
  %v1013 = vsel %vm195, %v1004, 0
  %1015 = vmatprep.subr.mxu0 0.0
  %1016 = vmatpush1.msra.mxu0 %v1008
  %1017 = vmatprep.subr.mxu0 0.0
  %1018 = vmatpush1.msra.mxu0 0.0
  %1019 = vmatprep.subr.mxu0 0.0
  %1020 = vmatpush1.msra.mxu0 0.0
  %1021 = vmatprep.subr.mxu0 0.0
  %1022 = vmatpush1.msra.mxu0 0.0
  %1023 = vmatprep.subr.mxu0 0.0
  %1024 = vmatpush1.msra.mxu0 0.0
  %1025 = vmatprep.subr.mxu0 0.0
  %1026 = vmatpush1.msra.mxu0 0.0
  %1027 = vmatprep.subr.mxu0 0.0
  %1028 = vmatpush1.msra.mxu0 0.0
  %1029 = vmatprep.subr.mxu0 0.0
  %1030 = vmatpush1.msra.mxu0 0.0
  %1031 = vmatprep.subr.mxu0 0.0
  %1032 = vmatpush1.msra.mxu0 0.0
  %1033 = vmatprep.subr.mxu0 0.0
  %1034 = vmatpush1.msra.mxu0 0.0
  %1035 = vmatprep.subr.mxu0 0.0
  %1036 = vmatpush1.msra.mxu0 0.0
  %1037 = vmatprep.subr.mxu0 0.0
  %1038 = vmatpush1.msra.mxu0 0.0
  %1039 = vmatprep.subr.mxu0 0.0
  %1040 = vmatpush1.msra.mxu0 0.0
  %1041 = vmatprep.subr.mxu0 0.0
  %1042 = vmatpush1.msra.mxu0 0.0
  %1043 = vmatprep.subr.mxu0 0.0
  %1044 = vmatpush1.msra.mxu0 0.0
  %1045 = vmatprep.subr.mxu0 0.0
  %1046 = vmatpush1.msra.mxu0 0.0
  %1047 = vmatprep.subr.mxu0 0.0
  %1048 = vmatpush1.msra.mxu0 0.0
  %1049 = vmatprep.subr.mxu0 0.0
  %1050 = vmatpush1.msra.mxu0 0.0
  %1051 = vmatprep.subr.mxu0 0.0
  %1052 = vmatpush1.msra.mxu0 0.0
  %1053 = vmatprep.subr.mxu0 0.0
  %1054 = vmatpush1.msra.mxu0 0.0
  %1055 = vmatprep.subr.mxu0 0.0
  %1056 = vmatpush1.msra.mxu0 0.0
  %1057 = vmatprep.subr.mxu0 0.0
  %1058 = vmatpush1.msra.mxu0 0.0
  %1059 = vmatprep.subr.mxu0 0.0
  %1060 = vmatpush1.msra.mxu0 0.0
  %1061 = vmatprep.subr.mxu0 0.0
  %1062 = vmatpush1.msra.mxu0 0.0
  %1063 = vmatprep.subr.mxu0 0.0
  %1064 = vmatpush1.msra.mxu0 0.0
  %1065 = vmatprep.subr.mxu0 0.0
  %1066 = vmatpush1.msra.mxu0 0.0
  %1067 = vmatprep.subr.mxu0 0.0
  %1068 = vmatpush1.msra.mxu0 0.0
  %1069 = vmatprep.subr.mxu0 0.0
  %1070 = vmatpush1.msra.mxu0 0.0
  %1071 = vmatprep.subr.mxu0 0.0
  %1072 = vmatpush1.msra.mxu0 0.0
  %1073 = vmatprep.subr.mxu0 0.0
  %1074 = vmatpush1.msra.mxu0 0.0
  %1075 = vmatprep.subr.mxu0 0.0
  %1076 = vmatpush1.msra.mxu0 0.0
  %1077 = vmatprep.subr.mxu0 0.0
  %1078 = vmatpush1.msra.mxu0 0.0
  %1079 = vmatprep.mubr.f32.mxu0 0.0
  %1080 = vmatmul.mubr.f32.gmra.mrb[0].mxu0 %v1010
  %v1081 = vpop.f32.mrb[0].mxu0
  %v1082 = vadd.f32 0.0, %v1081
  %v1083 = vpop.f32.mrb[0].mxu0
  %1084 = vmatprep.mubr.f32.mxu0 0.0
  %1085 = vmatmul.mubr.f32.gmra.mrb[0].mxu0 %v1013
  %v1086 = vpop.f32.mrb[0].mxu0
  %v1087 = vadd.f32 0.0, %v1086
  %v1088 = vpop.f32.mrb[0].mxu0
  %1089 = vdwg.mxu0
  %v1091 = vsel %vm195, %v446, 0
  %v1094 = vsel %vm195, %v519, 0
  %1096 = vmatprep.subr.mxu0 0.0
  %1097 = vmatpush1.msra.mxu0 %v522
  %1098 = vmatprep.subr.mxu0 0.0
  %1099 = vmatpush1.msra.mxu0 0.0
  %1100 = vmatprep.subr.mxu0 0.0
  %1101 = vmatpush1.msra.mxu0 0.0
  %1102 = vmatprep.subr.mxu0 0.0
  %1103 = vmatpush1.msra.mxu0 0.0
  %1104 = vmatprep.subr.mxu0 0.0
  %1105 = vmatpush1.msra.mxu0 0.0
  %1106 = vmatprep.subr.mxu0 0.0
  %1107 = vmatpush1.msra.mxu0 0.0
  %1108 = vmatprep.subr.mxu0 0.0
  %1109 = vmatpush1.msra.mxu0 0.0
  %1110 = vmatprep.subr.mxu0 0.0
  %1111 = vmatpush1.msra.mxu0 0.0
  %1112 = vmatprep.subr.mxu0 0.0
  %1113 = vmatpush1.msra.mxu0 0.0
  %1114 = vmatprep.subr.mxu0 0.0
  %1115 = vmatpush1.msra.mxu0 0.0
  %1116 = vmatprep.subr.mxu0 0.0
  %1117 = vmatpush1.msra.mxu0 0.0
  %1118 = vmatprep.subr.mxu0 0.0
  %1119 = vmatpush1.msra.mxu0 0.0
  %1120 = vmatprep.subr.mxu0 0.0
  %1121 = vmatpush1.msra.mxu0 0.0
  %1122 = vmatprep.subr.mxu0 0.0
  %1123 = vmatpush1.msra.mxu0 0.0
  %1124 = vmatprep.subr.mxu0 0.0
  %1125 = vmatpush1.msra.mxu0 0.0
  %1126 = vmatprep.subr.mxu0 0.0
  %1127 = vmatpush1.msra.mxu0 0.0
  %1128 = vmatprep.subr.mxu0 0.0
  %1129 = vmatpush1.msra.mxu0 0.0
  %1130 = vmatprep.subr.mxu0 0.0
  %1131 = vmatpush1.msra.mxu0 0.0
  %1132 = vmatprep.subr.mxu0 0.0
  %1133 = vmatpush1.msra.mxu0 0.0
  %1134 = vmatprep.subr.mxu0 0.0
  %1135 = vmatpush1.msra.mxu0 0.0
  %1136 = vmatprep.subr.mxu0 0.0
  %1137 = vmatpush1.msra.mxu0 0.0
  %1138 = vmatprep.subr.mxu0 0.0
  %1139 = vmatpush1.msra.mxu0 0.0
  %1140 = vmatprep.subr.mxu0 0.0
  %1141 = vmatpush1.msra.mxu0 0.0
  %1142 = vmatprep.subr.mxu0 0.0
  %1143 = vmatpush1.msra.mxu0 0.0
  %1144 = vmatprep.subr.mxu0 0.0
  %1145 = vmatpush1.msra.mxu0 0.0
  %1146 = vmatprep.subr.mxu0 0.0
  %1147 = vmatpush1.msra.mxu0 0.0
  %1148 = vmatprep.subr.mxu0 0.0
  %1149 = vmatpush1.msra.mxu0 0.0
  %1150 = vmatprep.subr.mxu0 0.0
  %1151 = vmatpush1.msra.mxu0 0.0
  %1152 = vmatprep.subr.mxu0 0.0
  %1153 = vmatpush1.msra.mxu0 0.0
  %1154 = vmatprep.subr.mxu0 0.0
  %1155 = vmatpush1.msra.mxu0 0.0
  %1156 = vmatprep.subr.mxu0 0.0
  %1157 = vmatpush1.msra.mxu0 0.0
  %1158 = vmatprep.subr.mxu0 0.0
  %1159 = vmatpush1.msra.mxu0 0.0
  %1160 = vmatprep.mubr.f32.mxu0 0.0
  %1161 = vmatmul.mubr.f32.gmra.mrb[0].mxu0 %v1091
  %v1162 = vpop.f32.mrb[0].mxu0
  %v1163 = vadd.f32 %v1082, %v1162
  %v1164 = vpop.f32.mrb[0].mxu0
  %1165 = vmatprep.mubr.f32.mxu0 0.0
  %1166 = vmatmul.mubr.f32.gmra.mrb[0].mxu0 %v1094
  %v1167 = vpop.f32.mrb[0].mxu0
  %v1168 = vadd.f32 %v1087, %v1167
  %v1169 = vpop.f32.mrb[0].mxu0
  %1170 = vdwg.mxu0
  %s1171 = scalar_lea.vmem %s2, 64
  %v1172 = vld [vmem:[%s1171] sm:$0xff]
  %v1173 = vld [vmem:[%s1171 + $0x8] sm:$0xff]
  %v1174 = vld [vmem:[%s1171 + $0x10] sm:$0xff]
  %v1175 = vld [vmem:[%s1171 + $0x18] sm:$0xff]
  %s1176 = scalar_lea.vmem %s3, 64
  %v1177 = vld [vmem:[%s1176] sm:$0xff]
  %v1178 = vld [vmem:[%s1176 + $0x8] sm:$0xff]
  %v1179 = vld [vmem:[%s1176 + $0x10] sm:$0xff]
  %v1180 = vld [vmem:[%s1176 + $0x18] sm:$0xff]
  %1181 = vmatprep.subr.mxu0 0.0
  %1182 = vmatpush1.msra.mxu0 %v1172
  %1183 = vmatprep.subr.mxu0 0.0
  %1184 = vmatpush1.msra.mxu0 %v1173
  %1185 = vmatprep.subr.mxu0 0.0
  %1186 = vmatpush1.msra.mxu0 %v1174
  %1187 = vmatprep.subr.mxu0 0.0
  %1188 = vmatpush1.msra.mxu0 %v1175
  %1189 = vmatprep.subr.mxu0 0.0
  %1190 = vmatpush1.msra.mxu0 0.0
  %1191 = vmatprep.subr.mxu0 0.0
  %1192 = vmatpush1.msra.mxu0 0.0
  %1193 = vmatprep.subr.mxu0 0.0
  %1194 = vmatpush1.msra.mxu0 0.0
  %1195 = vmatprep.subr.mxu0 0.0
  %1196 = vmatpush1.msra.mxu0 0.0
  %1197 = vmatprep.subr.mxu0 0.0
  %1198 = vmatpush1.msra.mxu0 0.0
  %1199 = vmatprep.subr.mxu0 0.0
  %1200 = vmatpush1.msra.mxu0 0.0
  %1201 = vmatprep.subr.mxu0 0.0
  %1202 = vmatpush1.msra.mxu0 0.0
  %1203 = vmatprep.subr.mxu0 0.0
  %1204 = vmatpush1.msra.mxu0 0.0
  %1205 = vmatprep.subr.mxu0 0.0
  %1206 = vmatpush1.msra.mxu0 0.0
  %1207 = vmatprep.subr.mxu0 0.0
  %1208 = vmatpush1.msra.mxu0 0.0
  %1209 = vmatprep.subr.mxu0 0.0
  %1210 = vmatpush1.msra.mxu0 0.0
  %1211 = vmatprep.subr.mxu0 0.0
  %1212 = vmatpush1.msra.mxu0 0.0
  %1213 = vmatprep.subr.mxu0 0.0
  %1214 = vmatpush1.msra.mxu0 0.0
  %1215 = vmatprep.subr.mxu0 0.0
  %1216 = vmatpush1.msra.mxu0 0.0
  %1217 = vmatprep.subr.mxu0 0.0
  %1218 = vmatpush1.msra.mxu0 0.0
  %1219 = vmatprep.subr.mxu0 0.0
  %1220 = vmatpush1.msra.mxu0 0.0
  %1221 = vmatprep.subr.mxu0 0.0
  %1222 = vmatpush1.msra.mxu0 0.0
  %1223 = vmatprep.subr.mxu0 0.0
  %1224 = vmatpush1.msra.mxu0 0.0
  %1225 = vmatprep.subr.mxu0 0.0
  %1226 = vmatpush1.msra.mxu0 0.0
  %1227 = vmatprep.subr.mxu0 0.0
  %1228 = vmatpush1.msra.mxu0 0.0
  %1229 = vmatprep.subr.mxu0 0.0
  %1230 = vmatpush1.msra.mxu0 0.0
  %1231 = vmatprep.subr.mxu0 0.0
  %1232 = vmatpush1.msra.mxu0 0.0
  %1233 = vmatprep.subr.mxu0 0.0
  %1234 = vmatpush1.msra.mxu0 0.0
  %1235 = vmatprep.subr.mxu0 0.0
  %1236 = vmatpush1.msra.mxu0 0.0
  %1237 = vmatprep.subr.mxu0 0.0
  %1238 = vmatpush1.msra.mxu0 0.0
  %1239 = vmatprep.subr.mxu0 0.0
  %1240 = vmatpush1.msra.mxu0 0.0
  %1241 = vmatprep.subr.mxu0 0.0
  %1242 = vmatpush1.msra.mxu0 0.0
  %1243 = vmatprep.subr.mxu0 0.0
  %1244 = vmatpush1.msra.mxu0 0.0
  %1245 = vmatprep.mubr.f32.mxu0 0.0
  %1246 = vmatmul.mubr.f32.gmra.mrb[0].mxu0 %v40
  %v1247 = vpop.f32.mrb[0].mxu0
  %v1248 = vadd.f32 0.0, %v1247
  %v1249 = vpop.f32.mrb[0].mxu0
  %1250 = vmatprep.mubr.f32.mxu0 0.0
  %1251 = vmatmul.mubr.f32.gmra.mrb[0].mxu0 %v43
  %v1252 = vpop.f32.mrb[0].mxu0
  %v1253 = vadd.f32 0.0, %v1252
  %v1254 = vpop.f32.mrb[0].mxu0
  %1255 = vdwg.mxu0
  %1256 = vmatprep.subr.mxu0 0.0
  %1257 = vmatpush1.msra.mxu0 %v1177
  %1258 = vmatprep.subr.mxu0 0.0
  %1259 = vmatpush1.msra.mxu0 %v1178
  %1260 = vmatprep.subr.mxu0 0.0
  %1261 = vmatpush1.msra.mxu0 %v1179
  %1262 = vmatprep.subr.mxu0 0.0
  %1263 = vmatpush1.msra.mxu0 %v1180
  %1264 = vmatprep.subr.mxu0 0.0
  %1265 = vmatpush1.msra.mxu0 0.0
  %1266 = vmatprep.subr.mxu0 0.0
  %1267 = vmatpush1.msra.mxu0 0.0
  %1268 = vmatprep.subr.mxu0 0.0
  %1269 = vmatpush1.msra.mxu0 0.0
  %1270 = vmatprep.subr.mxu0 0.0
  %1271 = vmatpush1.msra.mxu0 0.0
  %1272 = vmatprep.subr.mxu0 0.0
  %1273 = vmatpush1.msra.mxu0 0.0
  %1274 = vmatprep.subr.mxu0 0.0
  %1275 = vmatpush1.msra.mxu0 0.0
  %1276 = vmatprep.subr.mxu0 0.0
  %1277 = vmatpush1.msra.mxu0 0.0
  %1278 = vmatprep.subr.mxu0 0.0
  %1279 = vmatpush1.msra.mxu0 0.0
  %1280 = vmatprep.subr.mxu0 0.0
  %1281 = vmatpush1.msra.mxu0 0.0
  %1282 = vmatprep.subr.mxu0 0.0
  %1283 = vmatpush1.msra.mxu0 0.0
  %1284 = vmatprep.subr.mxu0 0.0
  %1285 = vmatpush1.msra.mxu0 0.0
  %1286 = vmatprep.subr.mxu0 0.0
  %1287 = vmatpush1.msra.mxu0 0.0
  %1288 = vmatprep.subr.mxu0 0.0
  %1289 = vmatpush1.msra.mxu0 0.0
  %1290 = vmatprep.subr.mxu0 0.0
  %1291 = vmatpush1.msra.mxu0 0.0
  %1292 = vmatprep.subr.mxu0 0.0
  %1293 = vmatpush1.msra.mxu0 0.0
  %1294 = vmatprep.subr.mxu0 0.0
  %1295 = vmatpush1.msra.mxu0 0.0
  %1296 = vmatprep.subr.mxu0 0.0
  %1297 = vmatpush1.msra.mxu0 0.0
  %1298 = vmatprep.subr.mxu0 0.0
  %1299 = vmatpush1.msra.mxu0 0.0
  %1300 = vmatprep.subr.mxu0 0.0
  %1301 = vmatpush1.msra.mxu0 0.0
  %1302 = vmatprep.subr.mxu0 0.0
  %1303 = vmatpush1.msra.mxu0 0.0
  %1304 = vmatprep.subr.mxu0 0.0
  %1305 = vmatpush1.msra.mxu0 0.0
  %1306 = vmatprep.subr.mxu0 0.0
  %1307 = vmatpush1.msra.mxu0 0.0
  %1308 = vmatprep.subr.mxu0 0.0
  %1309 = vmatpush1.msra.mxu0 0.0
  %1310 = vmatprep.subr.mxu0 0.0
  %1311 = vmatpush1.msra.mxu0 0.0
  %1312 = vmatprep.subr.mxu0 0.0
  %1313 = vmatpush1.msra.mxu0 0.0
  %1314 = vmatprep.subr.mxu0 0.0
  %1315 = vmatpush1.msra.mxu0 0.0
  %1316 = vmatprep.subr.mxu0 0.0
  %1317 = vmatpush1.msra.mxu0 0.0
  %1318 = vmatprep.subr.mxu0 0.0
  %1319 = vmatpush1.msra.mxu0 0.0
  %1320 = vmatprep.mubr.f32.mxu0 0.0
  %1321 = vmatmul.mubr.f32.gmra.mrb[0].mxu0 %v40
  %v1322 = vpop.f32.mrb[0].mxu0
  %v1323 = vadd.f32 0.0, %v1322
  %v1324 = vpop.f32.mrb[0].mxu0
  %1325 = vmatprep.mubr.f32.mxu0 0.0
  %1326 = vmatmul.mubr.f32.gmra.mrb[0].mxu0 %v43
  %v1327 = vpop.f32.mrb[0].mxu0
  %v1328 = vadd.f32 0.0, %v1327
  %v1329 = vpop.f32.mrb[0].mxu0
  %1330 = vdwg.mxu0
  %v1332 = vsel %vm195, %v1248, 0
  %v1335 = vsel %vm195, %v1323, 0
  %1337 = vmatprep.subr.mxu0 0.0
  %1338 = vmatpush1.xpose.msra.mxu0 %v1335
  %1339 = vmatprep.subr.mxu0 0.0
  %1340 = vmatpush1.xpose.msra.mxu0 0.0
  %1341 = vmatprep.subr.mxu0 0.0
  %1342 = vmatpush1.xpose.msra.mxu0 0.0
  %1343 = vmatprep.subr.mxu0 0.0
  %1344 = vmatpush1.xpose.msra.mxu0 0.0
  %1345 = vmatprep.subr.mxu0 0.0
  %1346 = vmatpush1.xpose.msra.mxu0 0.0
  %1347 = vmatprep.subr.mxu0 0.0
  %1348 = vmatpush1.xpose.msra.mxu0 0.0
  %1349 = vmatprep.subr.mxu0 0.0
  %1350 = vmatpush1.xpose.msra.mxu0 0.0
  %1351 = vmatprep.subr.mxu0 0.0
  %1352 = vmatpush1.xpose.msra.mxu0 0.0
  %1353 = vmatprep.subr.mxu0 0.0
  %1354 = vmatpush1.xpose.msra.mxu0 0.0
  %1355 = vmatprep.subr.mxu0 0.0
  %1356 = vmatpush1.xpose.msra.mxu0 0.0
  %1357 = vmatprep.subr.mxu0 0.0
  %1358 = vmatpush1.xpose.msra.mxu0 0.0
  %1359 = vmatprep.subr.mxu0 0.0
  %1360 = vmatpush1.xpose.msra.mxu0 0.0
  %1361 = vmatprep.subr.mxu0 0.0
  %1362 = vmatpush1.xpose.msra.mxu0 0.0
  %1363 = vmatprep.subr.mxu0 0.0
  %1364 = vmatpush1.xpose.msra.mxu0 0.0
  %1365 = vmatprep.subr.mxu0 0.0
  %1366 = vmatpush1.xpose.msra.mxu0 0.0
  %1367 = vmatprep.subr.mxu0 0.0
  %1368 = vmatpush1.xpose.msra.mxu0 0.0
  %1369 = vmatprep.subr.mxu0 0.0
  %1370 = vmatpush1.xpose.msra.mxu0 0.0
  %1371 = vmatprep.subr.mxu0 0.0
  %1372 = vmatpush1.xpose.msra.mxu0 0.0
  %1373 = vmatprep.subr.mxu0 0.0
  %1374 = vmatpush1.xpose.msra.mxu0 0.0
  %1375 = vmatprep.subr.mxu0 0.0
  %1376 = vmatpush1.xpose.msra.mxu0 0.0
  %1377 = vmatprep.subr.mxu0 0.0
  %1378 = vmatpush1.xpose.msra.mxu0 0.0
  %1379 = vmatprep.subr.mxu0 0.0
  %1380 = vmatpush1.xpose.msra.mxu0 0.0
  %1381 = vmatprep.subr.mxu0 0.0
  %1382 = vmatpush1.xpose.msra.mxu0 0.0
  %1383 = vmatprep.subr.mxu0 0.0
  %1384 = vmatpush1.xpose.msra.mxu0 0.0
  %1385 = vmatprep.subr.mxu0 0.0
  %1386 = vmatpush1.xpose.msra.mxu0 0.0
  %1387 = vmatprep.subr.mxu0 0.0
  %1388 = vmatpush1.xpose.msra.mxu0 0.0
  %1389 = vmatprep.subr.mxu0 0.0
  %1390 = vmatpush1.xpose.msra.mxu0 0.0
  %1391 = vmatprep.subr.mxu0 0.0
  %1392 = vmatpush1.xpose.msra.mxu0 0.0
  %1393 = vmatprep.subr.mxu0 0.0
  %1394 = vmatpush1.xpose.msra.mxu0 0.0
  %1395 = vmatprep.subr.mxu0 0.0
  %1396 = vmatpush1.xpose.msra.mxu0 0.0
  %1397 = vmatprep.subr.mxu0 0.0
  %1398 = vmatpush1.xpose.msra.mxu0 0.0
  %1399 = vmatprep.subr.mxu0 0.0
  %1400 = vmatpush1.xpose.msra.mxu0 0.0
  %1401 = vmatprep.mubr.f32.mxu0 0.0
  %1402 = vmatmul.mubr.f32.gmra.mrb[0].mxu0 %v1332
  %v1403 = vpop.f32.mrb[0].mxu0
  %v1404 = vadd.f32 0.0, %v1403
  %v1405 = vpop.f32.mrb[0].mxu0
  %1406 = vdwg.mxu0
  %v1408 = vsel %vm195, %v1253, 0
  %v1411 = vsel %vm195, %v1328, 0
  %1413 = vmatprep.subr.mxu0 0.0
  %1414 = vmatpush1.xpose.msra.mxu0 %v1411
  %1415 = vmatprep.subr.mxu0 0.0
  %1416 = vmatpush1.xpose.msra.mxu0 0.0
  %1417 = vmatprep.subr.mxu0 0.0
  %1418 = vmatpush1.xpose.msra.mxu0 0.0
  %1419 = vmatprep.subr.mxu0 0.0
  %1420 = vmatpush1.xpose.msra.mxu0 0.0
  %1421 = vmatprep.subr.mxu0 0.0
  %1422 = vmatpush1.xpose.msra.mxu0 0.0
  %1423 = vmatprep.subr.mxu0 0.0
  %1424 = vmatpush1.xpose.msra.mxu0 0.0
  %1425 = vmatprep.subr.mxu0 0.0
  %1426 = vmatpush1.xpose.msra.mxu0 0.0
  %1427 = vmatprep.subr.mxu0 0.0
  %1428 = vmatpush1.xpose.msra.mxu0 0.0
  %1429 = vmatprep.subr.mxu0 0.0
  %1430 = vmatpush1.xpose.msra.mxu0 0.0
  %1431 = vmatprep.subr.mxu0 0.0
  %1432 = vmatpush1.xpose.msra.mxu0 0.0
  %1433 = vmatprep.subr.mxu0 0.0
  %1434 = vmatpush1.xpose.msra.mxu0 0.0
  %1435 = vmatprep.subr.mxu0 0.0
  %1436 = vmatpush1.xpose.msra.mxu0 0.0
  %1437 = vmatprep.subr.mxu0 0.0
  %1438 = vmatpush1.xpose.msra.mxu0 0.0
  %1439 = vmatprep.subr.mxu0 0.0
  %1440 = vmatpush1.xpose.msra.mxu0 0.0
  %1441 = vmatprep.subr.mxu0 0.0
  %1442 = vmatpush1.xpose.msra.mxu0 0.0
  %1443 = vmatprep.subr.mxu0 0.0
  %1444 = vmatpush1.xpose.msra.mxu0 0.0
  %1445 = vmatprep.subr.mxu0 0.0
  %1446 = vmatpush1.xpose.msra.mxu0 0.0
  %1447 = vmatprep.subr.mxu0 0.0
  %1448 = vmatpush1.xpose.msra.mxu0 0.0
  %1449 = vmatprep.subr.mxu0 0.0
  %1450 = vmatpush1.xpose.msra.mxu0 0.0
  %1451 = vmatprep.subr.mxu0 0.0
  %1452 = vmatpush1.xpose.msra.mxu0 0.0
  %1453 = vmatprep.subr.mxu0 0.0
  %1454 = vmatpush1.xpose.msra.mxu0 0.0
  %1455 = vmatprep.subr.mxu0 0.0
  %1456 = vmatpush1.xpose.msra.mxu0 0.0
  %1457 = vmatprep.subr.mxu0 0.0
  %1458 = vmatpush1.xpose.msra.mxu0 0.0
  %1459 = vmatprep.subr.mxu0 0.0
  %1460 = vmatpush1.xpose.msra.mxu0 0.0
  %1461 = vmatprep.subr.mxu0 0.0
  %1462 = vmatpush1.xpose.msra.mxu0 0.0
  %1463 = vmatprep.subr.mxu0 0.0
  %1464 = vmatpush1.xpose.msra.mxu0 0.0
  %1465 = vmatprep.subr.mxu0 0.0
  %1466 = vmatpush1.xpose.msra.mxu0 0.0
  %1467 = vmatprep.subr.mxu0 0.0
  %1468 = vmatpush1.xpose.msra.mxu0 0.0
  %1469 = vmatprep.subr.mxu0 0.0
  %1470 = vmatpush1.xpose.msra.mxu0 0.0
  %1471 = vmatprep.subr.mxu0 0.0
  %1472 = vmatpush1.xpose.msra.mxu0 0.0
  %1473 = vmatprep.subr.mxu0 0.0
  %1474 = vmatpush1.xpose.msra.mxu0 0.0
  %1475 = vmatprep.subr.mxu0 0.0
  %1476 = vmatpush1.xpose.msra.mxu0 0.0
  %1477 = vmatprep.mubr.f32.mxu0 0.0
  %1478 = vmatmul.mubr.f32.gmra.mrb[0].mxu0 %v1408
  %v1479 = vpop.f32.mrb[0].mxu0
  %v1480 = vadd.f32 0.0, %v1479
  %v1481 = vpop.f32.mrb[0].mxu0
  %1482 = vdwg.mxu0
  %v1483 = vmul.f32 %v1404, 0.35355338
  %v1484 = vmul.f32 %v1480, 0.35355338
  %v1485 = vsel %vm350, -1e+30, %v1483
  %v1486 = vsel %vm351, -1e+30, %v1484
  %v1487 = vsel %vm195, %v1485, -inf
  %1488 = vmax.xlane.f32.xlu0 %v1487
  %v1489 = vpop.xlane.xlu0 %1488
  %v1490 = vsel %vm195, %v1486, -inf
  %1491 = vmax.xlane.f32.xlu0 %v1490
  %v1492 = vpop.xlane.xlu0 %1491
  %v1493 = vsub.f32 %v1485, %v1489
  %v1494 = vsub.f32 %v1486, %v1492
  %v1495 = vmul.f32 %v1493, 1.442695
  %v1496 = vpow.pop %v1495
  %v1497 = vmul.f32 %v1494, 1.442695
  %v1498 = vpow.pop %v1497
  %v1499 = vsel %vm195, %v1496, 0.0
  %1500 = vadd.xlane.f32.xlu0 %v1499
  %v1501 = vpop.xlane.xlu0 %1500
  %v1502 = vsel %vm195, %v1498, 0.0
  %1503 = vadd.xlane.f32.xlu0 %v1502
  %v1504 = vpop.xlane.xlu0 %1503
  %v1505 = vrcp.pop %v1501
  %v1506 = vrcp.pop %v1504
  %v1507 = vmul.f32 %v1496, %v1505
  %v1508 = vmul.f32 %v1498, %v1506
  %v1510 = vsel %vm195, %v1507, 0
  %1512 = vmatprep.subr.mxu0 0.0
  %1513 = vmatpush1.msra.mxu0 %v1248
  %1514 = vmatprep.subr.mxu0 0.0
  %1515 = vmatpush1.msra.mxu0 0.0
  %1516 = vmatprep.subr.mxu0 0.0
  %1517 = vmatpush1.msra.mxu0 0.0
  %1518 = vmatprep.subr.mxu0 0.0
  %1519 = vmatpush1.msra.mxu0 0.0
  %1520 = vmatprep.subr.mxu0 0.0
  %1521 = vmatpush1.msra.mxu0 0.0
  %1522 = vmatprep.subr.mxu0 0.0
  %1523 = vmatpush1.msra.mxu0 0.0
  %1524 = vmatprep.subr.mxu0 0.0
  %1525 = vmatpush1.msra.mxu0 0.0
  %1526 = vmatprep.subr.mxu0 0.0
  %1527 = vmatpush1.msra.mxu0 0.0
  %1528 = vmatprep.subr.mxu0 0.0
  %1529 = vmatpush1.msra.mxu0 0.0
  %1530 = vmatprep.subr.mxu0 0.0
  %1531 = vmatpush1.msra.mxu0 0.0
  %1532 = vmatprep.subr.mxu0 0.0
  %1533 = vmatpush1.msra.mxu0 0.0
  %1534 = vmatprep.subr.mxu0 0.0
  %1535 = vmatpush1.msra.mxu0 0.0
  %1536 = vmatprep.subr.mxu0 0.0
  %1537 = vmatpush1.msra.mxu0 0.0
  %1538 = vmatprep.subr.mxu0 0.0
  %1539 = vmatpush1.msra.mxu0 0.0
  %1540 = vmatprep.subr.mxu0 0.0
  %1541 = vmatpush1.msra.mxu0 0.0
  %1542 = vmatprep.subr.mxu0 0.0
  %1543 = vmatpush1.msra.mxu0 0.0
  %1544 = vmatprep.subr.mxu0 0.0
  %1545 = vmatpush1.msra.mxu0 0.0
  %1546 = vmatprep.subr.mxu0 0.0
  %1547 = vmatpush1.msra.mxu0 0.0
  %1548 = vmatprep.subr.mxu0 0.0
  %1549 = vmatpush1.msra.mxu0 0.0
  %1550 = vmatprep.subr.mxu0 0.0
  %1551 = vmatpush1.msra.mxu0 0.0
  %1552 = vmatprep.subr.mxu0 0.0
  %1553 = vmatpush1.msra.mxu0 0.0
  %1554 = vmatprep.subr.mxu0 0.0
  %1555 = vmatpush1.msra.mxu0 0.0
  %1556 = vmatprep.subr.mxu0 0.0
  %1557 = vmatpush1.msra.mxu0 0.0
  %1558 = vmatprep.subr.mxu0 0.0
  %1559 = vmatpush1.msra.mxu0 0.0
  %1560 = vmatprep.subr.mxu0 0.0
  %1561 = vmatpush1.msra.mxu0 0.0
  %1562 = vmatprep.subr.mxu0 0.0
  %1563 = vmatpush1.msra.mxu0 0.0
  %1564 = vmatprep.subr.mxu0 0.0
  %1565 = vmatpush1.msra.mxu0 0.0
  %1566 = vmatprep.subr.mxu0 0.0
  %1567 = vmatpush1.msra.mxu0 0.0
  %1568 = vmatprep.subr.mxu0 0.0
  %1569 = vmatpush1.msra.mxu0 0.0
  %1570 = vmatprep.subr.mxu0 0.0
  %1571 = vmatpush1.msra.mxu0 0.0
  %1572 = vmatprep.subr.mxu0 0.0
  %1573 = vmatpush1.msra.mxu0 0.0
  %1574 = vmatprep.subr.mxu0 0.0
  %1575 = vmatpush1.msra.mxu0 0.0
  %1576 = vmatprep.mubr.f32.mxu0 0.0
  %1577 = vmatmul.mubr.f32.gmra.mrb[0].mxu0 %v1510
  %v1578 = vpop.f32.mrb[0].mxu0
  %v1579 = vadd.f32 0.0, %v1578
  %v1580 = vpop.f32.mrb[0].mxu0
  %1581 = vdwg.mxu0
  %v1583 = vsel %vm195, %v1508, 0
  %1585 = vmatprep.subr.mxu0 0.0
  %1586 = vmatpush1.msra.mxu0 %v1253
  %1587 = vmatprep.subr.mxu0 0.0
  %1588 = vmatpush1.msra.mxu0 0.0
  %1589 = vmatprep.subr.mxu0 0.0
  %1590 = vmatpush1.msra.mxu0 0.0
  %1591 = vmatprep.subr.mxu0 0.0
  %1592 = vmatpush1.msra.mxu0 0.0
  %1593 = vmatprep.subr.mxu0 0.0
  %1594 = vmatpush1.msra.mxu0 0.0
  %1595 = vmatprep.subr.mxu0 0.0
  %1596 = vmatpush1.msra.mxu0 0.0
  %1597 = vmatprep.subr.mxu0 0.0
  %1598 = vmatpush1.msra.mxu0 0.0
  %1599 = vmatprep.subr.mxu0 0.0
  %1600 = vmatpush1.msra.mxu0 0.0
  %1601 = vmatprep.subr.mxu0 0.0
  %1602 = vmatpush1.msra.mxu0 0.0
  %1603 = vmatprep.subr.mxu0 0.0
  %1604 = vmatpush1.msra.mxu0 0.0
  %1605 = vmatprep.subr.mxu0 0.0
  %1606 = vmatpush1.msra.mxu0 0.0
  %1607 = vmatprep.subr.mxu0 0.0
  %1608 = vmatpush1.msra.mxu0 0.0
  %1609 = vmatprep.subr.mxu0 0.0
  %1610 = vmatpush1.msra.mxu0 0.0
  %1611 = vmatprep.subr.mxu0 0.0
  %1612 = vmatpush1.msra.mxu0 0.0
  %1613 = vmatprep.subr.mxu0 0.0
  %1614 = vmatpush1.msra.mxu0 0.0
  %1615 = vmatprep.subr.mxu0 0.0
  %1616 = vmatpush1.msra.mxu0 0.0
  %1617 = vmatprep.subr.mxu0 0.0
  %1618 = vmatpush1.msra.mxu0 0.0
  %1619 = vmatprep.subr.mxu0 0.0
  %1620 = vmatpush1.msra.mxu0 0.0
  %1621 = vmatprep.subr.mxu0 0.0
  %1622 = vmatpush1.msra.mxu0 0.0
  %1623 = vmatprep.subr.mxu0 0.0
  %1624 = vmatpush1.msra.mxu0 0.0
  %1625 = vmatprep.subr.mxu0 0.0
  %1626 = vmatpush1.msra.mxu0 0.0
  %1627 = vmatprep.subr.mxu0 0.0
  %1628 = vmatpush1.msra.mxu0 0.0
  %1629 = vmatprep.subr.mxu0 0.0
  %1630 = vmatpush1.msra.mxu0 0.0
  %1631 = vmatprep.subr.mxu0 0.0
  %1632 = vmatpush1.msra.mxu0 0.0
  %1633 = vmatprep.subr.mxu0 0.0
  %1634 = vmatpush1.msra.mxu0 0.0
  %1635 = vmatprep.subr.mxu0 0.0
  %1636 = vmatpush1.msra.mxu0 0.0
  %1637 = vmatprep.subr.mxu0 0.0
  %1638 = vmatpush1.msra.mxu0 0.0
  %1639 = vmatprep.subr.mxu0 0.0
  %1640 = vmatpush1.msra.mxu0 0.0
  %1641 = vmatprep.subr.mxu0 0.0
  %1642 = vmatpush1.msra.mxu0 0.0
  %1643 = vmatprep.subr.mxu0 0.0
  %1644 = vmatpush1.msra.mxu0 0.0
  %1645 = vmatprep.subr.mxu0 0.0
  %1646 = vmatpush1.msra.mxu0 0.0
  %1647 = vmatprep.subr.mxu0 0.0
  %1648 = vmatpush1.msra.mxu0 0.0
  %1649 = vmatprep.mubr.f32.mxu0 0.0
  %1650 = vmatmul.mubr.f32.gmra.mrb[0].mxu0 %v1583
  %v1651 = vpop.f32.mrb[0].mxu0
  %v1652 = vadd.f32 0.0, %v1651
  %v1653 = vpop.f32.mrb[0].mxu0
  %1654 = vdwg.mxu0
  %s1655 = scalar_lea.vmem %s4, 16
  %v1656 = vld [vmem:[%s1655] sm:$0xff]
  %v1658 = vsel %vm195, %v1579, 0
  %v1661 = vsel %vm195, %v1652, 0
  %1663 = vmatprep.subr.mxu0 0.0
  %1664 = vmatpush1.msra.mxu0 %v1656
  %1665 = vmatprep.subr.mxu0 0.0
  %1666 = vmatpush1.msra.mxu0 0.0
  %1667 = vmatprep.subr.mxu0 0.0
  %1668 = vmatpush1.msra.mxu0 0.0
  %1669 = vmatprep.subr.mxu0 0.0
  %1670 = vmatpush1.msra.mxu0 0.0
  %1671 = vmatprep.subr.mxu0 0.0
  %1672 = vmatpush1.msra.mxu0 0.0
  %1673 = vmatprep.subr.mxu0 0.0
  %1674 = vmatpush1.msra.mxu0 0.0
  %1675 = vmatprep.subr.mxu0 0.0
  %1676 = vmatpush1.msra.mxu0 0.0
  %1677 = vmatprep.subr.mxu0 0.0
  %1678 = vmatpush1.msra.mxu0 0.0
  %1679 = vmatprep.subr.mxu0 0.0
  %1680 = vmatpush1.msra.mxu0 0.0
  %1681 = vmatprep.subr.mxu0 0.0
  %1682 = vmatpush1.msra.mxu0 0.0
  %1683 = vmatprep.subr.mxu0 0.0
  %1684 = vmatpush1.msra.mxu0 0.0
  %1685 = vmatprep.subr.mxu0 0.0
  %1686 = vmatpush1.msra.mxu0 0.0
  %1687 = vmatprep.subr.mxu0 0.0
  %1688 = vmatpush1.msra.mxu0 0.0
  %1689 = vmatprep.subr.mxu0 0.0
  %1690 = vmatpush1.msra.mxu0 0.0
  %1691 = vmatprep.subr.mxu0 0.0
  %1692 = vmatpush1.msra.mxu0 0.0
  %1693 = vmatprep.subr.mxu0 0.0
  %1694 = vmatpush1.msra.mxu0 0.0
  %1695 = vmatprep.subr.mxu0 0.0
  %1696 = vmatpush1.msra.mxu0 0.0
  %1697 = vmatprep.subr.mxu0 0.0
  %1698 = vmatpush1.msra.mxu0 0.0
  %1699 = vmatprep.subr.mxu0 0.0
  %1700 = vmatpush1.msra.mxu0 0.0
  %1701 = vmatprep.subr.mxu0 0.0
  %1702 = vmatpush1.msra.mxu0 0.0
  %1703 = vmatprep.subr.mxu0 0.0
  %1704 = vmatpush1.msra.mxu0 0.0
  %1705 = vmatprep.subr.mxu0 0.0
  %1706 = vmatpush1.msra.mxu0 0.0
  %1707 = vmatprep.subr.mxu0 0.0
  %1708 = vmatpush1.msra.mxu0 0.0
  %1709 = vmatprep.subr.mxu0 0.0
  %1710 = vmatpush1.msra.mxu0 0.0
  %1711 = vmatprep.subr.mxu0 0.0
  %1712 = vmatpush1.msra.mxu0 0.0
  %1713 = vmatprep.subr.mxu0 0.0
  %1714 = vmatpush1.msra.mxu0 0.0
  %1715 = vmatprep.subr.mxu0 0.0
  %1716 = vmatpush1.msra.mxu0 0.0
  %1717 = vmatprep.subr.mxu0 0.0
  %1718 = vmatpush1.msra.mxu0 0.0
  %1719 = vmatprep.subr.mxu0 0.0
  %1720 = vmatpush1.msra.mxu0 0.0
  %1721 = vmatprep.subr.mxu0 0.0
  %1722 = vmatpush1.msra.mxu0 0.0
  %1723 = vmatprep.subr.mxu0 0.0
  %1724 = vmatpush1.msra.mxu0 0.0
  %1725 = vmatprep.subr.mxu0 0.0
  %1726 = vmatpush1.msra.mxu0 0.0
  %1727 = vmatprep.mubr.f32.mxu0 0.0
  %1728 = vmatmul.mubr.f32.gmra.mrb[0].mxu0 %v1658
  %v1729 = vpop.f32.mrb[0].mxu0
  %v1730 = vadd.f32 0.0, %v1729
  %v1731 = vpop.f32.mrb[0].mxu0
  %1732 = vmatprep.mubr.f32.mxu0 0.0
  %1733 = vmatmul.mubr.f32.gmra.mrb[0].mxu0 %v1661
  %v1734 = vpop.f32.mrb[0].mxu0
  %v1735 = vadd.f32 0.0, %v1734
  %v1736 = vpop.f32.mrb[0].mxu0
  %1737 = vdwg.mxu0
  %v1738 = vadd.f32 %v1163, %v1730
  %v1739 = vadd.f32 %v1168, %v1735
  %s1740 = scalar_lea.vmem %s2, 96
  %v1741 = vld [vmem:[%s1740] sm:$0xff]
  %v1742 = vld [vmem:[%s1740 + $0x8] sm:$0xff]
  %v1743 = vld [vmem:[%s1740 + $0x10] sm:$0xff]
  %v1744 = vld [vmem:[%s1740 + $0x18] sm:$0xff]
  %s1745 = scalar_lea.vmem %s3, 96
  %v1746 = vld [vmem:[%s1745] sm:$0xff]
  %v1747 = vld [vmem:[%s1745 + $0x8] sm:$0xff]
  %v1748 = vld [vmem:[%s1745 + $0x10] sm:$0xff]
  %v1749 = vld [vmem:[%s1745 + $0x18] sm:$0xff]
  %1750 = vmatprep.subr.mxu0 0.0
  %1751 = vmatpush1.msra.mxu0 %v1741
  %1752 = vmatprep.subr.mxu0 0.0
  %1753 = vmatpush1.msra.mxu0 %v1742
  %1754 = vmatprep.subr.mxu0 0.0
  %1755 = vmatpush1.msra.mxu0 %v1743
  %1756 = vmatprep.subr.mxu0 0.0
  %1757 = vmatpush1.msra.mxu0 %v1744
  %1758 = vmatprep.subr.mxu0 0.0
  %1759 = vmatpush1.msra.mxu0 0.0
  %1760 = vmatprep.subr.mxu0 0.0
  %1761 = vmatpush1.msra.mxu0 0.0
  %1762 = vmatprep.subr.mxu0 0.0
  %1763 = vmatpush1.msra.mxu0 0.0
  %1764 = vmatprep.subr.mxu0 0.0
  %1765 = vmatpush1.msra.mxu0 0.0
  %1766 = vmatprep.subr.mxu0 0.0
  %1767 = vmatpush1.msra.mxu0 0.0
  %1768 = vmatprep.subr.mxu0 0.0
  %1769 = vmatpush1.msra.mxu0 0.0
  %1770 = vmatprep.subr.mxu0 0.0
  %1771 = vmatpush1.msra.mxu0 0.0
  %1772 = vmatprep.subr.mxu0 0.0
  %1773 = vmatpush1.msra.mxu0 0.0
  %1774 = vmatprep.subr.mxu0 0.0
  %1775 = vmatpush1.msra.mxu0 0.0
  %1776 = vmatprep.subr.mxu0 0.0
  %1777 = vmatpush1.msra.mxu0 0.0
  %1778 = vmatprep.subr.mxu0 0.0
  %1779 = vmatpush1.msra.mxu0 0.0
  %1780 = vmatprep.subr.mxu0 0.0
  %1781 = vmatpush1.msra.mxu0 0.0
  %1782 = vmatprep.subr.mxu0 0.0
  %1783 = vmatpush1.msra.mxu0 0.0
  %1784 = vmatprep.subr.mxu0 0.0
  %1785 = vmatpush1.msra.mxu0 0.0
  %1786 = vmatprep.subr.mxu0 0.0
  %1787 = vmatpush1.msra.mxu0 0.0
  %1788 = vmatprep.subr.mxu0 0.0
  %1789 = vmatpush1.msra.mxu0 0.0
  %1790 = vmatprep.subr.mxu0 0.0
  %1791 = vmatpush1.msra.mxu0 0.0
  %1792 = vmatprep.subr.mxu0 0.0
  %1793 = vmatpush1.msra.mxu0 0.0
  %1794 = vmatprep.subr.mxu0 0.0
  %1795 = vmatpush1.msra.mxu0 0.0
  %1796 = vmatprep.subr.mxu0 0.0
  %1797 = vmatpush1.msra.mxu0 0.0
  %1798 = vmatprep.subr.mxu0 0.0
  %1799 = vmatpush1.msra.mxu0 0.0
  %1800 = vmatprep.subr.mxu0 0.0
  %1801 = vmatpush1.msra.mxu0 0.0
  %1802 = vmatprep.subr.mxu0 0.0
  %1803 = vmatpush1.msra.mxu0 0.0
  %1804 = vmatprep.subr.mxu0 0.0
  %1805 = vmatpush1.msra.mxu0 0.0
  %1806 = vmatprep.subr.mxu0 0.0
  %1807 = vmatpush1.msra.mxu0 0.0
  %1808 = vmatprep.subr.mxu0 0.0
  %1809 = vmatpush1.msra.mxu0 0.0
  %1810 = vmatprep.subr.mxu0 0.0
  %1811 = vmatpush1.msra.mxu0 0.0
  %1812 = vmatprep.subr.mxu0 0.0
  %1813 = vmatpush1.msra.mxu0 0.0
  %1814 = vmatprep.mubr.f32.mxu0 0.0
  %1815 = vmatmul.mubr.f32.gmra.mrb[0].mxu0 %v40
  %v1816 = vpop.f32.mrb[0].mxu0
  %v1817 = vadd.f32 0.0, %v1816
  %v1818 = vpop.f32.mrb[0].mxu0
  %1819 = vmatprep.mubr.f32.mxu0 0.0
  %1820 = vmatmul.mubr.f32.gmra.mrb[0].mxu0 %v43
  %v1821 = vpop.f32.mrb[0].mxu0
  %v1822 = vadd.f32 0.0, %v1821
  %v1823 = vpop.f32.mrb[0].mxu0
  %1824 = vdwg.mxu0
  %1825 = vmatprep.subr.mxu0 0.0
  %1826 = vmatpush1.msra.mxu0 %v1746
  %1827 = vmatprep.subr.mxu0 0.0
  %1828 = vmatpush1.msra.mxu0 %v1747
  %1829 = vmatprep.subr.mxu0 0.0
  %1830 = vmatpush1.msra.mxu0 %v1748
  %1831 = vmatprep.subr.mxu0 0.0
  %1832 = vmatpush1.msra.mxu0 %v1749
  %1833 = vmatprep.subr.mxu0 0.0
  %1834 = vmatpush1.msra.mxu0 0.0
  %1835 = vmatprep.subr.mxu0 0.0
  %1836 = vmatpush1.msra.mxu0 0.0
  %1837 = vmatprep.subr.mxu0 0.0
  %1838 = vmatpush1.msra.mxu0 0.0
  %1839 = vmatprep.subr.mxu0 0.0
  %1840 = vmatpush1.msra.mxu0 0.0
  %1841 = vmatprep.subr.mxu0 0.0
  %1842 = vmatpush1.msra.mxu0 0.0
  %1843 = vmatprep.subr.mxu0 0.0
  %1844 = vmatpush1.msra.mxu0 0.0
  %1845 = vmatprep.subr.mxu0 0.0
  %1846 = vmatpush1.msra.mxu0 0.0
  %1847 = vmatprep.subr.mxu0 0.0
  %1848 = vmatpush1.msra.mxu0 0.0
  %1849 = vmatprep.subr.mxu0 0.0
  %1850 = vmatpush1.msra.mxu0 0.0
  %1851 = vmatprep.subr.mxu0 0.0
  %1852 = vmatpush1.msra.mxu0 0.0
  %1853 = vmatprep.subr.mxu0 0.0
  %1854 = vmatpush1.msra.mxu0 0.0
  %1855 = vmatprep.subr.mxu0 0.0
  %1856 = vmatpush1.msra.mxu0 0.0
  %1857 = vmatprep.subr.mxu0 0.0
  %1858 = vmatpush1.msra.mxu0 0.0
  %1859 = vmatprep.subr.mxu0 0.0
  %1860 = vmatpush1.msra.mxu0 0.0
  %1861 = vmatprep.subr.mxu0 0.0
  %1862 = vmatpush1.msra.mxu0 0.0
  %1863 = vmatprep.subr.mxu0 0.0
  %1864 = vmatpush1.msra.mxu0 0.0
  %1865 = vmatprep.subr.mxu0 0.0
  %1866 = vmatpush1.msra.mxu0 0.0
  %1867 = vmatprep.subr.mxu0 0.0
  %1868 = vmatpush1.msra.mxu0 0.0
  %1869 = vmatprep.subr.mxu0 0.0
  %1870 = vmatpush1.msra.mxu0 0.0
  %1871 = vmatprep.subr.mxu0 0.0
  %1872 = vmatpush1.msra.mxu0 0.0
  %1873 = vmatprep.subr.mxu0 0.0
  %1874 = vmatpush1.msra.mxu0 0.0
  %1875 = vmatprep.subr.mxu0 0.0
  %1876 = vmatpush1.msra.mxu0 0.0
  %1877 = vmatprep.subr.mxu0 0.0
  %1878 = vmatpush1.msra.mxu0 0.0
  %1879 = vmatprep.subr.mxu0 0.0
  %1880 = vmatpush1.msra.mxu0 0.0
  %1881 = vmatprep.subr.mxu0 0.0
  %1882 = vmatpush1.msra.mxu0 0.0
  %1883 = vmatprep.subr.mxu0 0.0
  %1884 = vmatpush1.msra.mxu0 0.0
  %1885 = vmatprep.subr.mxu0 0.0
  %1886 = vmatpush1.msra.mxu0 0.0
  %1887 = vmatprep.subr.mxu0 0.0
  %1888 = vmatpush1.msra.mxu0 0.0
  %1889 = vmatprep.mubr.f32.mxu0 0.0
  %1890 = vmatmul.mubr.f32.gmra.mrb[0].mxu0 %v40
  %v1891 = vpop.f32.mrb[0].mxu0
  %v1892 = vadd.f32 0.0, %v1891
  %v1893 = vpop.f32.mrb[0].mxu0
  %1894 = vmatprep.mubr.f32.mxu0 0.0
  %1895 = vmatmul.mubr.f32.gmra.mrb[0].mxu0 %v43
  %v1896 = vpop.f32.mrb[0].mxu0
  %v1897 = vadd.f32 0.0, %v1896
  %v1898 = vpop.f32.mrb[0].mxu0
  %1899 = vdwg.mxu0
  %v1901 = vsel %vm195, %v1817, 0
  %v1904 = vsel %vm195, %v1892, 0
  %1906 = vmatprep.subr.mxu0 0.0
  %1907 = vmatpush1.xpose.msra.mxu0 %v1904
  %1908 = vmatprep.subr.mxu0 0.0
  %1909 = vmatpush1.xpose.msra.mxu0 0.0
  %1910 = vmatprep.subr.mxu0 0.0
  %1911 = vmatpush1.xpose.msra.mxu0 0.0
  %1912 = vmatprep.subr.mxu0 0.0
  %1913 = vmatpush1.xpose.msra.mxu0 0.0
  %1914 = vmatprep.subr.mxu0 0.0
  %1915 = vmatpush1.xpose.msra.mxu0 0.0
  %1916 = vmatprep.subr.mxu0 0.0
  %1917 = vmatpush1.xpose.msra.mxu0 0.0
  %1918 = vmatprep.subr.mxu0 0.0
  %1919 = vmatpush1.xpose.msra.mxu0 0.0
  %1920 = vmatprep.subr.mxu0 0.0
  %1921 = vmatpush1.xpose.msra.mxu0 0.0
  %1922 = vmatprep.subr.mxu0 0.0
  %1923 = vmatpush1.xpose.msra.mxu0 0.0
  %1924 = vmatprep.subr.mxu0 0.0
  %1925 = vmatpush1.xpose.msra.mxu0 0.0
  %1926 = vmatprep.subr.mxu0 0.0
  %1927 = vmatpush1.xpose.msra.mxu0 0.0
  %1928 = vmatprep.subr.mxu0 0.0
  %1929 = vmatpush1.xpose.msra.mxu0 0.0
  %1930 = vmatprep.subr.mxu0 0.0
  %1931 = vmatpush1.xpose.msra.mxu0 0.0
  %1932 = vmatprep.subr.mxu0 0.0
  %1933 = vmatpush1.xpose.msra.mxu0 0.0
  %1934 = vmatprep.subr.mxu0 0.0
  %1935 = vmatpush1.xpose.msra.mxu0 0.0
  %1936 = vmatprep.subr.mxu0 0.0
  %1937 = vmatpush1.xpose.msra.mxu0 0.0
  %1938 = vmatprep.subr.mxu0 0.0
  %1939 = vmatpush1.xpose.msra.mxu0 0.0
  %1940 = vmatprep.subr.mxu0 0.0
  %1941 = vmatpush1.xpose.msra.mxu0 0.0
  %1942 = vmatprep.subr.mxu0 0.0
  %1943 = vmatpush1.xpose.msra.mxu0 0.0
  %1944 = vmatprep.subr.mxu0 0.0
  %1945 = vmatpush1.xpose.msra.mxu0 0.0
  %1946 = vmatprep.subr.mxu0 0.0
  %1947 = vmatpush1.xpose.msra.mxu0 0.0
  %1948 = vmatprep.subr.mxu0 0.0
  %1949 = vmatpush1.xpose.msra.mxu0 0.0
  %1950 = vmatprep.subr.mxu0 0.0
  %1951 = vmatpush1.xpose.msra.mxu0 0.0
  %1952 = vmatprep.subr.mxu0 0.0
  %1953 = vmatpush1.xpose.msra.mxu0 0.0
  %1954 = vmatprep.subr.mxu0 0.0
  %1955 = vmatpush1.xpose.msra.mxu0 0.0
  %1956 = vmatprep.subr.mxu0 0.0
  %1957 = vmatpush1.xpose.msra.mxu0 0.0
  %1958 = vmatprep.subr.mxu0 0.0
  %1959 = vmatpush1.xpose.msra.mxu0 0.0
  %1960 = vmatprep.subr.mxu0 0.0
  %1961 = vmatpush1.xpose.msra.mxu0 0.0
  %1962 = vmatprep.subr.mxu0 0.0
  %1963 = vmatpush1.xpose.msra.mxu0 0.0
  %1964 = vmatprep.subr.mxu0 0.0
  %1965 = vmatpush1.xpose.msra.mxu0 0.0
  %1966 = vmatprep.subr.mxu0 0.0
  %1967 = vmatpush1.xpose.msra.mxu0 0.0
  %1968 = vmatprep.subr.mxu0 0.0
  %1969 = vmatpush1.xpose.msra.mxu0 0.0
  %1970 = vmatprep.mubr.f32.mxu0 0.0
  %1971 = vmatmul.mubr.f32.gmra.mrb[0].mxu0 %v1901
  %v1972 = vpop.f32.mrb[0].mxu0
  %v1973 = vadd.f32 0.0, %v1972
  %v1974 = vpop.f32.mrb[0].mxu0
  %1975 = vdwg.mxu0
  %v1977 = vsel %vm195, %v1822, 0
  %v1980 = vsel %vm195, %v1897, 0
  %1982 = vmatprep.subr.mxu0 0.0
  %1983 = vmatpush1.xpose.msra.mxu0 %v1980
  %1984 = vmatprep.subr.mxu0 0.0
  %1985 = vmatpush1.xpose.msra.mxu0 0.0
  %1986 = vmatprep.subr.mxu0 0.0
  %1987 = vmatpush1.xpose.msra.mxu0 0.0
  %1988 = vmatprep.subr.mxu0 0.0
  %1989 = vmatpush1.xpose.msra.mxu0 0.0
  %1990 = vmatprep.subr.mxu0 0.0
  %1991 = vmatpush1.xpose.msra.mxu0 0.0
  %1992 = vmatprep.subr.mxu0 0.0
  %1993 = vmatpush1.xpose.msra.mxu0 0.0
  %1994 = vmatprep.subr.mxu0 0.0
  %1995 = vmatpush1.xpose.msra.mxu0 0.0
  %1996 = vmatprep.subr.mxu0 0.0
  %1997 = vmatpush1.xpose.msra.mxu0 0.0
  %1998 = vmatprep.subr.mxu0 0.0
  %1999 = vmatpush1.xpose.msra.mxu0 0.0
  %2000 = vmatprep.subr.mxu0 0.0
  %2001 = vmatpush1.xpose.msra.mxu0 0.0
  %2002 = vmatprep.subr.mxu0 0.0
  %2003 = vmatpush1.xpose.msra.mxu0 0.0
  %2004 = vmatprep.subr.mxu0 0.0
  %2005 = vmatpush1.xpose.msra.mxu0 0.0
  %2006 = vmatprep.subr.mxu0 0.0
  %2007 = vmatpush1.xpose.msra.mxu0 0.0
  %2008 = vmatprep.subr.mxu0 0.0
  %2009 = vmatpush1.xpose.msra.mxu0 0.0
  %2010 = vmatprep.subr.mxu0 0.0
  %2011 = vmatpush1.xpose.msra.mxu0 0.0
  %2012 = vmatprep.subr.mxu0 0.0
  %2013 = vmatpush1.xpose.msra.mxu0 0.0
  %2014 = vmatprep.subr.mxu0 0.0
  %2015 = vmatpush1.xpose.msra.mxu0 0.0
  %2016 = vmatprep.subr.mxu0 0.0
  %2017 = vmatpush1.xpose.msra.mxu0 0.0
  %2018 = vmatprep.subr.mxu0 0.0
  %2019 = vmatpush1.xpose.msra.mxu0 0.0
  %2020 = vmatprep.subr.mxu0 0.0
  %2021 = vmatpush1.xpose.msra.mxu0 0.0
  %2022 = vmatprep.subr.mxu0 0.0
  %2023 = vmatpush1.xpose.msra.mxu0 0.0
  %2024 = vmatprep.subr.mxu0 0.0
  %2025 = vmatpush1.xpose.msra.mxu0 0.0
  %2026 = vmatprep.subr.mxu0 0.0
  %2027 = vmatpush1.xpose.msra.mxu0 0.0
  %2028 = vmatprep.subr.mxu0 0.0
  %2029 = vmatpush1.xpose.msra.mxu0 0.0
  %2030 = vmatprep.subr.mxu0 0.0
  %2031 = vmatpush1.xpose.msra.mxu0 0.0
  %2032 = vmatprep.subr.mxu0 0.0
  %2033 = vmatpush1.xpose.msra.mxu0 0.0
  %2034 = vmatprep.subr.mxu0 0.0
  %2035 = vmatpush1.xpose.msra.mxu0 0.0
  %2036 = vmatprep.subr.mxu0 0.0
  %2037 = vmatpush1.xpose.msra.mxu0 0.0
  %2038 = vmatprep.subr.mxu0 0.0
  %2039 = vmatpush1.xpose.msra.mxu0 0.0
  %2040 = vmatprep.subr.mxu0 0.0
  %2041 = vmatpush1.xpose.msra.mxu0 0.0
  %2042 = vmatprep.subr.mxu0 0.0
  %2043 = vmatpush1.xpose.msra.mxu0 0.0
  %2044 = vmatprep.subr.mxu0 0.0
  %2045 = vmatpush1.xpose.msra.mxu0 0.0
  %2046 = vmatprep.mubr.f32.mxu0 0.0
  %2047 = vmatmul.mubr.f32.gmra.mrb[0].mxu0 %v1977
  %v2048 = vpop.f32.mrb[0].mxu0
  %v2049 = vadd.f32 0.0, %v2048
  %v2050 = vpop.f32.mrb[0].mxu0
  %2051 = vdwg.mxu0
  %v2052 = vmul.f32 %v1973, 0.35355338
  %v2053 = vmul.f32 %v2049, 0.35355338
  %v2054 = vsel %vm350, -1e+30, %v2052
  %v2055 = vsel %vm351, -1e+30, %v2053
  %v2056 = vsel %vm195, %v2054, -inf
  %2057 = vmax.xlane.f32.xlu0 %v2056
  %v2058 = vpop.xlane.xlu0 %2057
  %v2059 = vsel %vm195, %v2055, -inf
  %2060 = vmax.xlane.f32.xlu0 %v2059
  %v2061 = vpop.xlane.xlu0 %2060
  %v2062 = vsub.f32 %v2054, %v2058
  %v2063 = vsub.f32 %v2055, %v2061
  %v2064 = vmul.f32 %v2062, 1.442695
  %v2065 = vpow.pop %v2064
  %v2066 = vmul.f32 %v2063, 1.442695
  %v2067 = vpow.pop %v2066
  %v2068 = vsel %vm195, %v2065, 0.0
  %2069 = vadd.xlane.f32.xlu0 %v2068
  %v2070 = vpop.xlane.xlu0 %2069
  %v2071 = vsel %vm195, %v2067, 0.0
  %2072 = vadd.xlane.f32.xlu0 %v2071
  %v2073 = vpop.xlane.xlu0 %2072
  %v2074 = vrcp.pop %v2070
  %v2075 = vrcp.pop %v2073
  %v2076 = vmul.f32 %v2065, %v2074
  %v2077 = vmul.f32 %v2067, %v2075
  %v2079 = vsel %vm195, %v2076, 0
  %2081 = vmatprep.subr.mxu0 0.0
  %2082 = vmatpush1.msra.mxu0 %v1817
  %2083 = vmatprep.subr.mxu0 0.0
  %2084 = vmatpush1.msra.mxu0 0.0
  %2085 = vmatprep.subr.mxu0 0.0
  %2086 = vmatpush1.msra.mxu0 0.0
  %2087 = vmatprep.subr.mxu0 0.0
  %2088 = vmatpush1.msra.mxu0 0.0
  %2089 = vmatprep.subr.mxu0 0.0
  %2090 = vmatpush1.msra.mxu0 0.0
  %2091 = vmatprep.subr.mxu0 0.0
  %2092 = vmatpush1.msra.mxu0 0.0
  %2093 = vmatprep.subr.mxu0 0.0
  %2094 = vmatpush1.msra.mxu0 0.0
  %2095 = vmatprep.subr.mxu0 0.0
  %2096 = vmatpush1.msra.mxu0 0.0
  %2097 = vmatprep.subr.mxu0 0.0
  %2098 = vmatpush1.msra.mxu0 0.0
  %2099 = vmatprep.subr.mxu0 0.0
  %2100 = vmatpush1.msra.mxu0 0.0
  %2101 = vmatprep.subr.mxu0 0.0
  %2102 = vmatpush1.msra.mxu0 0.0
  %2103 = vmatprep.subr.mxu0 0.0
  %2104 = vmatpush1.msra.mxu0 0.0
  %2105 = vmatprep.subr.mxu0 0.0
  %2106 = vmatpush1.msra.mxu0 0.0
  %2107 = vmatprep.subr.mxu0 0.0
  %2108 = vmatpush1.msra.mxu0 0.0
  %2109 = vmatprep.subr.mxu0 0.0
  %2110 = vmatpush1.msra.mxu0 0.0
  %2111 = vmatprep.subr.mxu0 0.0
  %2112 = vmatpush1.msra.mxu0 0.0
  %2113 = vmatprep.subr.mxu0 0.0
  %2114 = vmatpush1.msra.mxu0 0.0
  %2115 = vmatprep.subr.mxu0 0.0
  %2116 = vmatpush1.msra.mxu0 0.0
  %2117 = vmatprep.subr.mxu0 0.0
  %2118 = vmatpush1.msra.mxu0 0.0
  %2119 = vmatprep.subr.mxu0 0.0
  %2120 = vmatpush1.msra.mxu0 0.0
  %2121 = vmatprep.subr.mxu0 0.0
  %2122 = vmatpush1.msra.mxu0 0.0
  %2123 = vmatprep.subr.mxu0 0.0
  %2124 = vmatpush1.msra.mxu0 0.0
  %2125 = vmatprep.subr.mxu0 0.0
  %2126 = vmatpush1.msra.mxu0 0.0
  %2127 = vmatprep.subr.mxu0 0.0
  %2128 = vmatpush1.msra.mxu0 0.0
  %2129 = vmatprep.subr.mxu0 0.0
  %2130 = vmatpush1.msra.mxu0 0.0
  %2131 = vmatprep.subr.mxu0 0.0
  %2132 = vmatpush1.msra.mxu0 0.0
  %2133 = vmatprep.subr.mxu0 0.0
  %2134 = vmatpush1.msra.mxu0 0.0
  %2135 = vmatprep.subr.mxu0 0.0
  %2136 = vmatpush1.msra.mxu0 0.0
  %2137 = vmatprep.subr.mxu0 0.0
  %2138 = vmatpush1.msra.mxu0 0.0
  %2139 = vmatprep.subr.mxu0 0.0
  %2140 = vmatpush1.msra.mxu0 0.0
  %2141 = vmatprep.subr.mxu0 0.0
  %2142 = vmatpush1.msra.mxu0 0.0
  %2143 = vmatprep.subr.mxu0 0.0
  %2144 = vmatpush1.msra.mxu0 0.0
  %2145 = vmatprep.mubr.f32.mxu0 0.0
  %2146 = vmatmul.mubr.f32.gmra.mrb[0].mxu0 %v2079
  %v2147 = vpop.f32.mrb[0].mxu0
  %v2148 = vadd.f32 0.0, %v2147
  %v2149 = vpop.f32.mrb[0].mxu0
  %2150 = vdwg.mxu0
  %v2152 = vsel %vm195, %v2077, 0
  %2154 = vmatprep.subr.mxu0 0.0
  %2155 = vmatpush1.msra.mxu0 %v1822
  %2156 = vmatprep.subr.mxu0 0.0
  %2157 = vmatpush1.msra.mxu0 0.0
  %2158 = vmatprep.subr.mxu0 0.0
  %2159 = vmatpush1.msra.mxu0 0.0
  %2160 = vmatprep.subr.mxu0 0.0
  %2161 = vmatpush1.msra.mxu0 0.0
  %2162 = vmatprep.subr.mxu0 0.0
  %2163 = vmatpush1.msra.mxu0 0.0
  %2164 = vmatprep.subr.mxu0 0.0
  %2165 = vmatpush1.msra.mxu0 0.0
  %2166 = vmatprep.subr.mxu0 0.0
  %2167 = vmatpush1.msra.mxu0 0.0
  %2168 = vmatprep.subr.mxu0 0.0
  %2169 = vmatpush1.msra.mxu0 0.0
  %2170 = vmatprep.subr.mxu0 0.0
  %2171 = vmatpush1.msra.mxu0 0.0
  %2172 = vmatprep.subr.mxu0 0.0
  %2173 = vmatpush1.msra.mxu0 0.0
  %2174 = vmatprep.subr.mxu0 0.0
  %2175 = vmatpush1.msra.mxu0 0.0
  %2176 = vmatprep.subr.mxu0 0.0
  %2177 = vmatpush1.msra.mxu0 0.0
  %2178 = vmatprep.subr.mxu0 0.0
  %2179 = vmatpush1.msra.mxu0 0.0
  %2180 = vmatprep.subr.mxu0 0.0
  %2181 = vmatpush1.msra.mxu0 0.0
  %2182 = vmatprep.subr.mxu0 0.0
  %2183 = vmatpush1.msra.mxu0 0.0
  %2184 = vmatprep.subr.mxu0 0.0
  %2185 = vmatpush1.msra.mxu0 0.0
  %2186 = vmatprep.subr.mxu0 0.0
  %2187 = vmatpush1.msra.mxu0 0.0
  %2188 = vmatprep.subr.mxu0 0.0
  %2189 = vmatpush1.msra.mxu0 0.0
  %2190 = vmatprep.subr.mxu0 0.0
  %2191 = vmatpush1.msra.mxu0 0.0
  %2192 = vmatprep.subr.mxu0 0.0
  %2193 = vmatpush1.msra.mxu0 0.0
  %2194 = vmatprep.subr.mxu0 0.0
  %2195 = vmatpush1.msra.mxu0 0.0
  %2196 = vmatprep.subr.mxu0 0.0
  %2197 = vmatpush1.msra.mxu0 0.0
  %2198 = vmatprep.subr.mxu0 0.0
  %2199 = vmatpush1.msra.mxu0 0.0
  %2200 = vmatprep.subr.mxu0 0.0
  %2201 = vmatpush1.msra.mxu0 0.0
  %2202 = vmatprep.subr.mxu0 0.0
  %2203 = vmatpush1.msra.mxu0 0.0
  %2204 = vmatprep.subr.mxu0 0.0
  %2205 = vmatpush1.msra.mxu0 0.0
  %2206 = vmatprep.subr.mxu0 0.0
  %2207 = vmatpush1.msra.mxu0 0.0
  %2208 = vmatprep.subr.mxu0 0.0
  %2209 = vmatpush1.msra.mxu0 0.0
  %2210 = vmatprep.subr.mxu0 0.0
  %2211 = vmatpush1.msra.mxu0 0.0
  %2212 = vmatprep.subr.mxu0 0.0
  %2213 = vmatpush1.msra.mxu0 0.0
  %2214 = vmatprep.subr.mxu0 0.0
  %2215 = vmatpush1.msra.mxu0 0.0
  %2216 = vmatprep.subr.mxu0 0.0
  %2217 = vmatpush1.msra.mxu0 0.0
  %2218 = vmatprep.mubr.f32.mxu0 0.0
  %2219 = vmatmul.mubr.f32.gmra.mrb[0].mxu0 %v2152
  %v2220 = vpop.f32.mrb[0].mxu0
  %v2221 = vadd.f32 0.0, %v2220
  %v2222 = vpop.f32.mrb[0].mxu0
  %2223 = vdwg.mxu0
  %s2224 = scalar_lea.vmem %s4, 24
  %v2225 = vld [vmem:[%s2224] sm:$0xff]
  %v2227 = vsel %vm195, %v2148, 0
  %v2230 = vsel %vm195, %v2221, 0
  %2232 = vmatprep.subr.mxu0 0.0
  %2233 = vmatpush1.msra.mxu0 %v2225
  %2234 = vmatprep.subr.mxu0 0.0
  %2235 = vmatpush1.msra.mxu0 0.0
  %2236 = vmatprep.subr.mxu0 0.0
  %2237 = vmatpush1.msra.mxu0 0.0
  %2238 = vmatprep.subr.mxu0 0.0
  %2239 = vmatpush1.msra.mxu0 0.0
  %2240 = vmatprep.subr.mxu0 0.0
  %2241 = vmatpush1.msra.mxu0 0.0
  %2242 = vmatprep.subr.mxu0 0.0
  %2243 = vmatpush1.msra.mxu0 0.0
  %2244 = vmatprep.subr.mxu0 0.0
  %2245 = vmatpush1.msra.mxu0 0.0
  %2246 = vmatprep.subr.mxu0 0.0
  %2247 = vmatpush1.msra.mxu0 0.0
  %2248 = vmatprep.subr.mxu0 0.0
  %2249 = vmatpush1.msra.mxu0 0.0
  %2250 = vmatprep.subr.mxu0 0.0
  %2251 = vmatpush1.msra.mxu0 0.0
  %2252 = vmatprep.subr.mxu0 0.0
  %2253 = vmatpush1.msra.mxu0 0.0
  %2254 = vmatprep.subr.mxu0 0.0
  %2255 = vmatpush1.msra.mxu0 0.0
  %2256 = vmatprep.subr.mxu0 0.0
  %2257 = vmatpush1.msra.mxu0 0.0
  %2258 = vmatprep.subr.mxu0 0.0
  %2259 = vmatpush1.msra.mxu0 0.0
  %2260 = vmatprep.subr.mxu0 0.0
  %2261 = vmatpush1.msra.mxu0 0.0
  %2262 = vmatprep.subr.mxu0 0.0
  %2263 = vmatpush1.msra.mxu0 0.0
  %2264 = vmatprep.subr.mxu0 0.0
  %2265 = vmatpush1.msra.mxu0 0.0
  %2266 = vmatprep.subr.mxu0 0.0
  %2267 = vmatpush1.msra.mxu0 0.0
  %2268 = vmatprep.subr.mxu0 0.0
  %2269 = vmatpush1.msra.mxu0 0.0
  %2270 = vmatprep.subr.mxu0 0.0
  %2271 = vmatpush1.msra.mxu0 0.0
  %2272 = vmatprep.subr.mxu0 0.0
  %2273 = vmatpush1.msra.mxu0 0.0
  %2274 = vmatprep.subr.mxu0 0.0
  %2275 = vmatpush1.msra.mxu0 0.0
  %2276 = vmatprep.subr.mxu0 0.0
  %2277 = vmatpush1.msra.mxu0 0.0
  %2278 = vmatprep.subr.mxu0 0.0
  %2279 = vmatpush1.msra.mxu0 0.0
  %2280 = vmatprep.subr.mxu0 0.0
  %2281 = vmatpush1.msra.mxu0 0.0
  %2282 = vmatprep.subr.mxu0 0.0
  %2283 = vmatpush1.msra.mxu0 0.0
  %2284 = vmatprep.subr.mxu0 0.0
  %2285 = vmatpush1.msra.mxu0 0.0
  %2286 = vmatprep.subr.mxu0 0.0
  %2287 = vmatpush1.msra.mxu0 0.0
  %2288 = vmatprep.subr.mxu0 0.0
  %2289 = vmatpush1.msra.mxu0 0.0
  %2290 = vmatprep.subr.mxu0 0.0
  %2291 = vmatpush1.msra.mxu0 0.0
  %2292 = vmatprep.subr.mxu0 0.0
  %2293 = vmatpush1.msra.mxu0 0.0
  %2294 = vmatprep.subr.mxu0 0.0
  %2295 = vmatpush1.msra.mxu0 0.0
  %2296 = vmatprep.mubr.f32.mxu0 0.0
  %2297 = vmatmul.mubr.f32.gmra.mrb[0].mxu0 %v2227
  %v2298 = vpop.f32.mrb[0].mxu0
  %v2299 = vadd.f32 0.0, %v2298
  %v2300 = vpop.f32.mrb[0].mxu0
  %2301 = vmatprep.mubr.f32.mxu0 0.0
  %2302 = vmatmul.mubr.f32.gmra.mrb[0].mxu0 %v2230
  %v2303 = vpop.f32.mrb[0].mxu0
  %v2304 = vadd.f32 0.0, %v2303
  %v2305 = vpop.f32.mrb[0].mxu0
  %2306 = vdwg.mxu0
  %v2307 = vadd.f32 %v1738, %v2299
  %v2308 = vadd.f32 %v1739, %v2304
  %v2309 = vadd.f32 %v2307, %v26
  %v2310 = vadd.f32 %v2308, %v27
  %v2311 = vsel %vm38, %v2309, 0.0
  %2312 = vadd.xlane.f32.xlu0 %v2311
  %v2313 = vpop.xlane.xlu0 %2312
  %v2314 = vsel %vm38, %v2310, 0.0
  %2315 = vadd.xlane.f32.xlu0 %v2314
  %v2316 = vpop.xlane.xlu0 %2315
  %v2317 = vrcp.pop 32.0
  %v2318 = vmul.f32 %v2313, %v2317
  %v2319 = vmul.f32 %v2316, %v2317
  %v2320 = vsub.f32 %v2309, %v2318
  %v2321 = vsub.f32 %v2310, %v2319
  %v2322 = vmul.f32 %v2320, %v2320
  %v2323 = vmul.f32 %v2321, %v2321
  %v2324 = vsel %vm38, %v2322, 0.0
  %2325 = vadd.xlane.f32.xlu0 %v2324
  %v2326 = vpop.xlane.xlu0 %2325
  %v2327 = vsel %vm38, %v2323, 0.0
  %2328 = vadd.xlane.f32.xlu0 %v2327
  %v2329 = vpop.xlane.xlu0 %2328
  %v2330 = vmul.f32 %v2326, %v2317
  %v2331 = vmul.f32 %v2329, %v2317
  %v2332 = vadd.f32 %v2330, 1e-05
  %v2333 = vadd.f32 %v2331, 1e-05
  %v2334 = vrsqrt.pop %v2332
  %v2335 = vrsqrt.pop %v2333
  %v2336 = vmul.f32 %v2320, %v2334
  %v2337 = vmul.f32 %v2321, %v2335
  %v2338 = vld [vmem:[%s5] sm:$0x1]
  %v2340 = vlaneseq
  %v2341 = vshrl.u32 %v2340, 7
  %v2342 = vsub.s32 0, %v2341
  %v2343 = vrot.slane %v2338, %v2342
  %v2345 = vmul.f32 %v2336, %v2343
  %v2346 = vmul.f32 %v2337, %v2343
  %v2347 = vld [vmem:[%s6] sm:$0x1]
  %v2349 = vlaneseq
  %v2350 = vshrl.u32 %v2349, 7
  %v2351 = vsub.s32 0, %v2350
  %v2352 = vrot.slane %v2347, %v2351
  %v2354 = vadd.f32 %v2345, %v2352
  %v2355 = vadd.f32 %v2346, %v2352
  %2356 = vst.msk [vmem:[%s7] sm:$0xff] %vm38, %v2354
  %2357 = vst.msk [vmem:[%s7 + $0x8] sm:$0xff] %vm38, %v2355
  // Predicated region
  $region30: #{transformer_forward.15} parent=0 // pred_check
    _
  $region31: #{transformer_forward.15} parent=0 // pred_check_branch
    %2359 = sbr.rel (0) target = $region33
  $region32: #{transformer_forward.15} parent=0 // pred_region
    _
  $region33: #{transformer_forward.15} parent=0 // pred_fallthru
    _
  // Predicated region
  $region34: #{transformer_forward.15} parent=0 // pred_check
    _
  $region35: #{transformer_forward.15} parent=0 // pred_check_branch
    %2361 = sbr.rel (0) target = $region37
  $region36: #{transformer_forward.15} parent=0 // pred_region
    _
  $region37: #{transformer_forward.15} parent=0 // pred_fallthru
    _

// kernel: transformer_forward.16
$region0: #{transformer_forward.16}
  #allocation0 [shape = 'u32[]', space=smem, size = 0x4, offset = 0x4, fixed_abs, tag = 'smem constant byte address 0x4 - core index']
  #allocation1 [shape = 'u32[144,128]{1,0:T(1,128)}', space=vmem, size = 0x12000, scoped, tag = 'internal scratch']
  %s0 = inlined_call_operand.vmem [shape: f32[2,8,32], index: 0, kind: input, shape index: {}]
  %s1 = inlined_call_operand.vmem [shape: f32[2,8,32], index: 1, kind: input, shape index: {}]
  %s2 = inlined_call_operand.vmem [shape: f32[2,8,8], index: 2, kind: input, shape index: {}]
  %s3 = inlined_call_operand.vmem [shape: f32[4,32,8], index: 3, kind: input, shape index: {}]
  %s4 = inlined_call_operand.vmem [shape: f32[4,32,8], index: 4, kind: input, shape index: {}]
  %s5 = inlined_call_operand.vmem [shape: f32[4,8,32], index: 5, kind: input, shape index: {}]
  %s6 = inlined_call_operand.vmem [shape: f32[1,32], index: 6, kind: input, shape index: {}]
  %s7 = inlined_call_operand.vmem [shape: f32[1,32], index: 7, kind: input, shape index: {}]
  %s8 = inlined_call_operand.vmem [shape: f32[2,8,32], index: 8, kind: output, shape index: {}]
  %s9 = sld [smem:[#allocation0]]
  $region42: #{transformer_forward.16} parent=0
    _
  %s11 = ssub.s32 1, %s9
  %s12 = scalar_select 0, %s11, %s9
  // Predicated region
  $region2: #{transformer_forward.16} parent=0 // pred_check
    _
  $region3: #{transformer_forward.16} parent=0 // pred_check_branch
    %14 = sbr.rel (0) target = $region5
  $region4: #{transformer_forward.16} parent=0 // pred_region
    _
  $region5: #{transformer_forward.16} parent=0 // pred_fallthru
    _
  // Predicated region
  $region6: #{transformer_forward.16} parent=0 // pred_check
    _
  $region7: #{transformer_forward.16} parent=0 // pred_check_branch
    %16 = sbr.rel (0) target = $region9
  $region8: #{transformer_forward.16} parent=0 // pred_region
    _
  $region9: #{transformer_forward.16} parent=0 // pred_fallthru
    _
  // Predicated region
  $region10: #{transformer_forward.16} parent=0 // pred_check
    _
  $region11: #{transformer_forward.16} parent=0 // pred_check_branch
    %18 = sbr.rel (0) target = $region13
  $region12: #{transformer_forward.16} parent=0 // pred_region
    _
  $region13: #{transformer_forward.16} parent=0 // pred_fallthru
    _
  // Predicated region
  $region14: #{transformer_forward.16} parent=0 // pred_check
    _
  $region15: #{transformer_forward.16} parent=0 // pred_check_branch
    %20 = sbr.rel (0) target = $region17
  $region16: #{transformer_forward.16} parent=0 // pred_region
    _
  $region17: #{transformer_forward.16} parent=0 // pred_fallthru
    _
  // Predicated region
  $region18: #{transformer_forward.16} parent=0 // pred_check
    _
  $region19: #{transformer_forward.16} parent=0 // pred_check_branch
    %22 = sbr.rel (0) target = $region21
  $region20: #{transformer_forward.16} parent=0 // pred_region
    _
  $region21: #{transformer_forward.16} parent=0 // pred_fallthru
    _
  // Predicated region
  $region22: #{transformer_forward.16} parent=0 // pred_check
    _
  $region23: #{transformer_forward.16} parent=0 // pred_check_branch
    %24 = sbr.rel (0) target = $region25
  $region24: #{transformer_forward.16} parent=0 // pred_region
    _
  $region25: #{transformer_forward.16} parent=0 // pred_fallthru
    _
  // Predicated region
  $region26: #{transformer_forward.16} parent=0 // pred_check
    _
  $region27: #{transformer_forward.16} parent=0 // pred_check_branch
    %26 = sbr.rel (0) target = $region29
  $region28: #{transformer_forward.16} parent=0 // pred_region
    _
  $region29: #{transformer_forward.16} parent=0 // pred_fallthru
    _
  // Predicated region
  $region30: #{transformer_forward.16} parent=0 // pred_check
    _
  $region31: #{transformer_forward.16} parent=0 // pred_check_branch
    %28 = sbr.rel (0) target = $region33
  $region32: #{transformer_forward.16} parent=0 // pred_region
    _
  $region33: #{transformer_forward.16} parent=0 // pred_fallthru
    _
  %v29 = vld [vmem:[%s0] sm:$0xff]
  %v30 = vld [vmem:[%s0 + $0x8] sm:$0xff]
  %v31 = vld [vmem:[%s1] sm:$0xff]
  %v32 = vld [vmem:[%s1 + $0x8] sm:$0xff]
  %v33 = vld [vmem:[%s2] sm:$0xff]
  %v34 = vld [vmem:[%s2 + $0x8] sm:$0xff]
  %v35 = vld [vmem:[%s3] sm:$0xff]
  %v36 = vld [vmem:[%s3 + $0x8] sm:$0xff]
  %v37 = vld [vmem:[%s3 + $0x10] sm:$0xff]
  %v38 = vld [vmem:[%s3 + $0x18] sm:$0xff]
  %v39 = vld [vmem:[%s4] sm:$0xff]
  %v40 = vld [vmem:[%s4 + $0x8] sm:$0xff]
  %v41 = vld [vmem:[%s4 + $0x10] sm:$0xff]
  %v42 = vld [vmem:[%s4 + $0x18] sm:$0xff]
  %vm43 = vcmask 261120
  %v45 = vsel %vm43, %v29, 0
  %v48 = vsel %vm43, %v30, 0
  %50 = vmatprep.subr.mxu0 0.0
  %51 = vmatpush1.msra.mxu0 %v35
  %52 = vmatprep.subr.mxu0 0.0
  %53 = vmatpush1.msra.mxu0 %v36
  %54 = vmatprep.subr.mxu0 0.0
  %55 = vmatpush1.msra.mxu0 %v37
  %56 = vmatprep.subr.mxu0 0.0
  %57 = vmatpush1.msra.mxu0 %v38
  %58 = vmatprep.subr.mxu0 0.0
  %59 = vmatpush1.msra.mxu0 0.0
  %60 = vmatprep.subr.mxu0 0.0
  %61 = vmatpush1.msra.mxu0 0.0
  %62 = vmatprep.subr.mxu0 0.0
  %63 = vmatpush1.msra.mxu0 0.0
  %64 = vmatprep.subr.mxu0 0.0
  %65 = vmatpush1.msra.mxu0 0.0
  %66 = vmatprep.subr.mxu0 0.0
  %67 = vmatpush1.msra.mxu0 0.0
  %68 = vmatprep.subr.mxu0 0.0
  %69 = vmatpush1.msra.mxu0 0.0
  %70 = vmatprep.subr.mxu0 0.0
  %71 = vmatpush1.msra.mxu0 0.0
  %72 = vmatprep.subr.mxu0 0.0
  %73 = vmatpush1.msra.mxu0 0.0
  %74 = vmatprep.subr.mxu0 0.0
  %75 = vmatpush1.msra.mxu0 0.0
  %76 = vmatprep.subr.mxu0 0.0
  %77 = vmatpush1.msra.mxu0 0.0
  %78 = vmatprep.subr.mxu0 0.0
  %79 = vmatpush1.msra.mxu0 0.0
  %80 = vmatprep.subr.mxu0 0.0
  %81 = vmatpush1.msra.mxu0 0.0
  %82 = vmatprep.subr.mxu0 0.0
  %83 = vmatpush1.msra.mxu0 0.0
  %84 = vmatprep.subr.mxu0 0.0
  %85 = vmatpush1.msra.mxu0 0.0
  %86 = vmatprep.subr.mxu0 0.0
  %87 = vmatpush1.msra.mxu0 0.0
  %88 = vmatprep.subr.mxu0 0.0
  %89 = vmatpush1.msra.mxu0 0.0
  %90 = vmatprep.subr.mxu0 0.0
  %91 = vmatpush1.msra.mxu0 0.0
  %92 = vmatprep.subr.mxu0 0.0
  %93 = vmatpush1.msra.mxu0 0.0
  %94 = vmatprep.subr.mxu0 0.0
  %95 = vmatpush1.msra.mxu0 0.0
  %96 = vmatprep.subr.mxu0 0.0
  %97 = vmatpush1.msra.mxu0 0.0
  %98 = vmatprep.subr.mxu0 0.0
  %99 = vmatpush1.msra.mxu0 0.0
  %100 = vmatprep.subr.mxu0 0.0
  %101 = vmatpush1.msra.mxu0 0.0
  %102 = vmatprep.subr.mxu0 0.0
  %103 = vmatpush1.msra.mxu0 0.0
  %104 = vmatprep.subr.mxu0 0.0
  %105 = vmatpush1.msra.mxu0 0.0
  %106 = vmatprep.subr.mxu0 0.0
  %107 = vmatpush1.msra.mxu0 0.0
  %108 = vmatprep.subr.mxu0 0.0
  %109 = vmatpush1.msra.mxu0 0.0
  %110 = vmatprep.subr.mxu0 0.0
  %111 = vmatpush1.msra.mxu0 0.0
  %112 = vmatprep.subr.mxu0 0.0
  %113 = vmatpush1.msra.mxu0 0.0
  %114 = vmatprep.mubr.f32.mxu0 0.0
  %115 = vmatmul.mubr.f32.gmra.mrb[0].mxu0 %v45
  %v116 = vpop.f32.mrb[0].mxu0
  %v117 = vadd.f32 0.0, %v116
  %v118 = vpop.f32.mrb[0].mxu0
  %119 = vmatprep.mubr.f32.mxu0 0.0
  %120 = vmatmul.mubr.f32.gmra.mrb[0].mxu0 %v48
  %v121 = vpop.f32.mrb[0].mxu0
  %v122 = vadd.f32 0.0, %v121
  %v123 = vpop.f32.mrb[0].mxu0
  %124 = vdwg.mxu0
  %v126 = vsel %vm43, %v31, 0
  %v129 = vsel %vm43, %v32, 0
  %131 = vmatprep.subr.mxu0 0.0
  %132 = vmatpush1.msra.mxu0 %v39
  %133 = vmatprep.subr.mxu0 0.0
  %134 = vmatpush1.msra.mxu0 %v40
  %135 = vmatprep.subr.mxu0 0.0
  %136 = vmatpush1.msra.mxu0 %v41
  %137 = vmatprep.subr.mxu0 0.0
  %138 = vmatpush1.msra.mxu0 %v42
  %139 = vmatprep.subr.mxu0 0.0
  %140 = vmatpush1.msra.mxu0 0.0
  %141 = vmatprep.subr.mxu0 0.0
  %142 = vmatpush1.msra.mxu0 0.0
  %143 = vmatprep.subr.mxu0 0.0
  %144 = vmatpush1.msra.mxu0 0.0
  %145 = vmatprep.subr.mxu0 0.0
  %146 = vmatpush1.msra.mxu0 0.0
  %147 = vmatprep.subr.mxu0 0.0
  %148 = vmatpush1.msra.mxu0 0.0
  %149 = vmatprep.subr.mxu0 0.0
  %150 = vmatpush1.msra.mxu0 0.0
  %151 = vmatprep.subr.mxu0 0.0
  %152 = vmatpush1.msra.mxu0 0.0
  %153 = vmatprep.subr.mxu0 0.0
  %154 = vmatpush1.msra.mxu0 0.0
  %155 = vmatprep.subr.mxu0 0.0
  %156 = vmatpush1.msra.mxu0 0.0
  %157 = vmatprep.subr.mxu0 0.0
  %158 = vmatpush1.msra.mxu0 0.0
  %159 = vmatprep.subr.mxu0 0.0
  %160 = vmatpush1.msra.mxu0 0.0
  %161 = vmatprep.subr.mxu0 0.0
  %162 = vmatpush1.msra.mxu0 0.0
  %163 = vmatprep.subr.mxu0 0.0
  %164 = vmatpush1.msra.mxu0 0.0
  %165 = vmatprep.subr.mxu0 0.0
  %166 = vmatpush1.msra.mxu0 0.0
  %167 = vmatprep.subr.mxu0 0.0
  %168 = vmatpush1.msra.mxu0 0.0
  %169 = vmatprep.subr.mxu0 0.0
  %170 = vmatpush1.msra.mxu0 0.0
  %171 = vmatprep.subr.mxu0 0.0
  %172 = vmatpush1.msra.mxu0 0.0
  %173 = vmatprep.subr.mxu0 0.0
  %174 = vmatpush1.msra.mxu0 0.0
  %175 = vmatprep.subr.mxu0 0.0
  %176 = vmatpush1.msra.mxu0 0.0
  %177 = vmatprep.subr.mxu0 0.0
  %178 = vmatpush1.msra.mxu0 0.0
  %179 = vmatprep.subr.mxu0 0.0
  %180 = vmatpush1.msra.mxu0 0.0
  %181 = vmatprep.subr.mxu0 0.0
  %182 = vmatpush1.msra.mxu0 0.0
  %183 = vmatprep.subr.mxu0 0.0
  %184 = vmatpush1.msra.mxu0 0.0
  %185 = vmatprep.subr.mxu0 0.0
  %186 = vmatpush1.msra.mxu0 0.0
  %187 = vmatprep.subr.mxu0 0.0
  %188 = vmatpush1.msra.mxu0 0.0
  %189 = vmatprep.subr.mxu0 0.0
  %190 = vmatpush1.msra.mxu0 0.0
  %191 = vmatprep.subr.mxu0 0.0
  %192 = vmatpush1.msra.mxu0 0.0
  %193 = vmatprep.subr.mxu0 0.0
  %194 = vmatpush1.msra.mxu0 0.0
  %195 = vmatprep.mubr.f32.mxu0 0.0
  %196 = vmatmul.mubr.f32.gmra.mrb[0].mxu0 %v126
  %v197 = vpop.f32.mrb[0].mxu0
  %v198 = vadd.f32 0.0, %v197
  %v199 = vpop.f32.mrb[0].mxu0
  %200 = vmatprep.mubr.f32.mxu0 0.0
  %201 = vmatmul.mubr.f32.gmra.mrb[0].mxu0 %v129
  %v202 = vpop.f32.mrb[0].mxu0
  %v203 = vadd.f32 0.0, %v202
  %v204 = vpop.f32.mrb[0].mxu0
  %205 = vdwg.mxu0
  %206 = vmatprep.subr.mxu0 0.0
  %207 = vmatpush1.msra.mxu0 %v35
  %208 = vmatprep.subr.mxu0 0.0
  %209 = vmatpush1.msra.mxu0 %v36
  %210 = vmatprep.subr.mxu0 0.0
  %211 = vmatpush1.msra.mxu0 %v37
  %212 = vmatprep.subr.mxu0 0.0
  %213 = vmatpush1.msra.mxu0 %v38
  %214 = vmatprep.subr.mxu0 0.0
  %215 = vmatpush1.msra.mxu0 0.0
  %216 = vmatprep.subr.mxu0 0.0
  %217 = vmatpush1.msra.mxu0 0.0
  %218 = vmatprep.subr.mxu0 0.0
  %219 = vmatpush1.msra.mxu0 0.0
  %220 = vmatprep.subr.mxu0 0.0
  %221 = vmatpush1.msra.mxu0 0.0
  %222 = vmatprep.subr.mxu0 0.0
  %223 = vmatpush1.msra.mxu0 0.0
  %224 = vmatprep.subr.mxu0 0.0
  %225 = vmatpush1.msra.mxu0 0.0
  %226 = vmatprep.subr.mxu0 0.0
  %227 = vmatpush1.msra.mxu0 0.0
  %228 = vmatprep.subr.mxu0 0.0
  %229 = vmatpush1.msra.mxu0 0.0
  %230 = vmatprep.subr.mxu0 0.0
  %231 = vmatpush1.msra.mxu0 0.0
  %232 = vmatprep.subr.mxu0 0.0
  %233 = vmatpush1.msra.mxu0 0.0
  %234 = vmatprep.subr.mxu0 0.0
  %235 = vmatpush1.msra.mxu0 0.0
  %236 = vmatprep.subr.mxu0 0.0
  %237 = vmatpush1.msra.mxu0 0.0
  %238 = vmatprep.subr.mxu0 0.0
  %239 = vmatpush1.msra.mxu0 0.0
  %240 = vmatprep.subr.mxu0 0.0
  %241 = vmatpush1.msra.mxu0 0.0
  %242 = vmatprep.subr.mxu0 0.0
  %243 = vmatpush1.msra.mxu0 0.0
  %244 = vmatprep.subr.mxu0 0.0
  %245 = vmatpush1.msra.mxu0 0.0
  %246 = vmatprep.subr.mxu0 0.0
  %247 = vmatpush1.msra.mxu0 0.0
  %248 = vmatprep.subr.mxu0 0.0
  %249 = vmatpush1.msra.mxu0 0.0
  %250 = vmatprep.subr.mxu0 0.0
  %251 = vmatpush1.msra.mxu0 0.0
  %252 = vmatprep.subr.mxu0 0.0
  %253 = vmatpush1.msra.mxu0 0.0
  %254 = vmatprep.subr.mxu0 0.0
  %255 = vmatpush1.msra.mxu0 0.0
  %256 = vmatprep.subr.mxu0 0.0
  %257 = vmatpush1.msra.mxu0 0.0
  %258 = vmatprep.subr.mxu0 0.0
  %259 = vmatpush1.msra.mxu0 0.0
  %260 = vmatprep.subr.mxu0 0.0
  %261 = vmatpush1.msra.mxu0 0.0
  %262 = vmatprep.subr.mxu0 0.0
  %263 = vmatpush1.msra.mxu0 0.0
  %264 = vmatprep.subr.mxu0 0.0
  %265 = vmatpush1.msra.mxu0 0.0
  %266 = vmatprep.subr.mxu0 0.0
  %267 = vmatpush1.msra.mxu0 0.0
  %268 = vmatprep.subr.mxu0 0.0
  %269 = vmatpush1.msra.mxu0 0.0
  %270 = vmatprep.mubr.f32.mxu0 0.0
  %271 = vmatmul.mubr.f32.gmra.mrb[0].mxu0 %v126
  %v272 = vpop.f32.mrb[0].mxu0
  %v273 = vadd.f32 0.0, %v272
  %v274 = vpop.f32.mrb[0].mxu0
  %275 = vmatprep.mubr.f32.mxu0 0.0
  %276 = vmatmul.mubr.f32.gmra.mrb[0].mxu0 %v129
  %v277 = vpop.f32.mrb[0].mxu0
  %v278 = vadd.f32 0.0, %v277
  %v279 = vpop.f32.mrb[0].mxu0
  %280 = vdwg.mxu0
  %vm281 = vcmask 64512
  %v283 = vsel %vm281, %v117, 0
  %v286 = vsel %vm281, %v198, 0
  %288 = vmatprep.subr.mxu0 0.0
  %289 = vmatpush1.xpose.msra.mxu0 %v286
  %290 = vmatprep.subr.mxu0 0.0
  %291 = vmatpush1.xpose.msra.mxu0 0.0
  %292 = vmatprep.subr.mxu0 0.0
  %293 = vmatpush1.xpose.msra.mxu0 0.0
  %294 = vmatprep.subr.mxu0 0.0
  %295 = vmatpush1.xpose.msra.mxu0 0.0
  %296 = vmatprep.subr.mxu0 0.0
  %297 = vmatpush1.xpose.msra.mxu0 0.0
  %298 = vmatprep.subr.mxu0 0.0
  %299 = vmatpush1.xpose.msra.mxu0 0.0
  %300 = vmatprep.subr.mxu0 0.0
  %301 = vmatpush1.xpose.msra.mxu0 0.0
  %302 = vmatprep.subr.mxu0 0.0
  %303 = vmatpush1.xpose.msra.mxu0 0.0
  %304 = vmatprep.subr.mxu0 0.0
  %305 = vmatpush1.xpose.msra.mxu0 0.0
  %306 = vmatprep.subr.mxu0 0.0
  %307 = vmatpush1.xpose.msra.mxu0 0.0
  %308 = vmatprep.subr.mxu0 0.0
  %309 = vmatpush1.xpose.msra.mxu0 0.0
  %310 = vmatprep.subr.mxu0 0.0
  %311 = vmatpush1.xpose.msra.mxu0 0.0
  %312 = vmatprep.subr.mxu0 0.0
  %313 = vmatpush1.xpose.msra.mxu0 0.0
  %314 = vmatprep.subr.mxu0 0.0
  %315 = vmatpush1.xpose.msra.mxu0 0.0
  %316 = vmatprep.subr.mxu0 0.0
  %317 = vmatpush1.xpose.msra.mxu0 0.0
  %318 = vmatprep.subr.mxu0 0.0
  %319 = vmatpush1.xpose.msra.mxu0 0.0
  %320 = vmatprep.subr.mxu0 0.0
  %321 = vmatpush1.xpose.msra.mxu0 0.0
  %322 = vmatprep.subr.mxu0 0.0
  %323 = vmatpush1.xpose.msra.mxu0 0.0
  %324 = vmatprep.subr.mxu0 0.0
  %325 = vmatpush1.xpose.msra.mxu0 0.0
  %326 = vmatprep.subr.mxu0 0.0
  %327 = vmatpush1.xpose.msra.mxu0 0.0
  %328 = vmatprep.subr.mxu0 0.0
  %329 = vmatpush1.xpose.msra.mxu0 0.0
  %330 = vmatprep.subr.mxu0 0.0
  %331 = vmatpush1.xpose.msra.mxu0 0.0
  %332 = vmatprep.subr.mxu0 0.0
  %333 = vmatpush1.xpose.msra.mxu0 0.0
  %334 = vmatprep.subr.mxu0 0.0
  %335 = vmatpush1.xpose.msra.mxu0 0.0
  %336 = vmatprep.subr.mxu0 0.0
  %337 = vmatpush1.xpose.msra.mxu0 0.0
  %338 = vmatprep.subr.mxu0 0.0
  %339 = vmatpush1.xpose.msra.mxu0 0.0
  %340 = vmatprep.subr.mxu0 0.0
  %341 = vmatpush1.xpose.msra.mxu0 0.0
  %342 = vmatprep.subr.mxu0 0.0
  %343 = vmatpush1.xpose.msra.mxu0 0.0
  %344 = vmatprep.subr.mxu0 0.0
  %345 = vmatpush1.xpose.msra.mxu0 0.0
  %346 = vmatprep.subr.mxu0 0.0
  %347 = vmatpush1.xpose.msra.mxu0 0.0
  %348 = vmatprep.subr.mxu0 0.0
  %349 = vmatpush1.xpose.msra.mxu0 0.0
  %350 = vmatprep.subr.mxu0 0.0
  %351 = vmatpush1.xpose.msra.mxu0 0.0
  %352 = vmatprep.mubr.f32.mxu0 0.0
  %353 = vmatmul.mubr.f32.gmra.mrb[0].mxu0 %v283
  %v354 = vpop.f32.mrb[0].mxu0
  %v355 = vadd.f32 0.0, %v354
  %v356 = vpop.f32.mrb[0].mxu0
  %357 = vdwg.mxu0
  %v359 = vsel %vm281, %v122, 0
  %v362 = vsel %vm281, %v203, 0
  %364 = vmatprep.subr.mxu0 0.0
  %365 = vmatpush1.xpose.msra.mxu0 %v362
  %366 = vmatprep.subr.mxu0 0.0
  %367 = vmatpush1.xpose.msra.mxu0 0.0
  %368 = vmatprep.subr.mxu0 0.0
  %369 = vmatpush1.xpose.msra.mxu0 0.0
  %370 = vmatprep.subr.mxu0 0.0
  %371 = vmatpush1.xpose.msra.mxu0 0.0
  %372 = vmatprep.subr.mxu0 0.0
  %373 = vmatpush1.xpose.msra.mxu0 0.0
  %374 = vmatprep.subr.mxu0 0.0
  %375 = vmatpush1.xpose.msra.mxu0 0.0
  %376 = vmatprep.subr.mxu0 0.0
  %377 = vmatpush1.xpose.msra.mxu0 0.0
  %378 = vmatprep.subr.mxu0 0.0
  %379 = vmatpush1.xpose.msra.mxu0 0.0
  %380 = vmatprep.subr.mxu0 0.0
  %381 = vmatpush1.xpose.msra.mxu0 0.0
  %382 = vmatprep.subr.mxu0 0.0
  %383 = vmatpush1.xpose.msra.mxu0 0.0
  %384 = vmatprep.subr.mxu0 0.0
  %385 = vmatpush1.xpose.msra.mxu0 0.0
  %386 = vmatprep.subr.mxu0 0.0
  %387 = vmatpush1.xpose.msra.mxu0 0.0
  %388 = vmatprep.subr.mxu0 0.0
  %389 = vmatpush1.xpose.msra.mxu0 0.0
  %390 = vmatprep.subr.mxu0 0.0
  %391 = vmatpush1.xpose.msra.mxu0 0.0
  %392 = vmatprep.subr.mxu0 0.0
  %393 = vmatpush1.xpose.msra.mxu0 0.0
  %394 = vmatprep.subr.mxu0 0.0
  %395 = vmatpush1.xpose.msra.mxu0 0.0
  %396 = vmatprep.subr.mxu0 0.0
  %397 = vmatpush1.xpose.msra.mxu0 0.0
  %398 = vmatprep.subr.mxu0 0.0
  %399 = vmatpush1.xpose.msra.mxu0 0.0
  %400 = vmatprep.subr.mxu0 0.0
  %401 = vmatpush1.xpose.msra.mxu0 0.0
  %402 = vmatprep.subr.mxu0 0.0
  %403 = vmatpush1.xpose.msra.mxu0 0.0
  %404 = vmatprep.subr.mxu0 0.0
  %405 = vmatpush1.xpose.msra.mxu0 0.0
  %406 = vmatprep.subr.mxu0 0.0
  %407 = vmatpush1.xpose.msra.mxu0 0.0
  %408 = vmatprep.subr.mxu0 0.0
  %409 = vmatpush1.xpose.msra.mxu0 0.0
  %410 = vmatprep.subr.mxu0 0.0
  %411 = vmatpush1.xpose.msra.mxu0 0.0
  %412 = vmatprep.subr.mxu0 0.0
  %413 = vmatpush1.xpose.msra.mxu0 0.0
  %414 = vmatprep.subr.mxu0 0.0
  %415 = vmatpush1.xpose.msra.mxu0 0.0
  %416 = vmatprep.subr.mxu0 0.0
  %417 = vmatpush1.xpose.msra.mxu0 0.0
  %418 = vmatprep.subr.mxu0 0.0
  %419 = vmatpush1.xpose.msra.mxu0 0.0
  %420 = vmatprep.subr.mxu0 0.0
  %421 = vmatpush1.xpose.msra.mxu0 0.0
  %422 = vmatprep.subr.mxu0 0.0
  %423 = vmatpush1.xpose.msra.mxu0 0.0
  %424 = vmatprep.subr.mxu0 0.0
  %425 = vmatpush1.xpose.msra.mxu0 0.0
  %426 = vmatprep.subr.mxu0 0.0
  %427 = vmatpush1.xpose.msra.mxu0 0.0
  %428 = vmatprep.mubr.f32.mxu0 0.0
  %429 = vmatmul.mubr.f32.gmra.mrb[0].mxu0 %v359
  %v430 = vpop.f32.mrb[0].mxu0
  %v431 = vadd.f32 0.0, %v430
  %v432 = vpop.f32.mrb[0].mxu0
  %433 = vdwg.mxu0
  %v434 = vmul.f32 %v355, 0.35355338
  %v435 = vmul.f32 %v431, 0.35355338
  %vm436 = vcmp.gt.f32.partialorder %v33, 0.5
  %vm437 = vcmp.gt.f32.partialorder %v34, 0.5
  %v438 = vsel %vm436, -1e+30, %v434
  %v439 = vsel %vm437, -1e+30, %v435
  %v440 = vsel %vm281, %v438, -inf
  %441 = vmax.xlane.f32.xlu0 %v440
  %v442 = vpop.xlane.xlu0 %441
  %v443 = vsel %vm281, %v439, -inf
  %444 = vmax.xlane.f32.xlu0 %v443
  %v445 = vpop.xlane.xlu0 %444
  %v446 = vsub.f32 %v438, %v442
  %v447 = vsub.f32 %v439, %v445
  %v448 = vmul.f32 %v446, 1.442695
  %v449 = vpow.pop %v448
  %v450 = vmul.f32 %v447, 1.442695
  %v451 = vpow.pop %v450
  %v452 = vsel %vm281, %v449, 0.0
  %453 = vadd.xlane.f32.xlu0 %v452
  %v454 = vpop.xlane.xlu0 %453
  %v455 = vsel %vm281, %v451, 0.0
  %456 = vadd.xlane.f32.xlu0 %v455
  %v457 = vpop.xlane.xlu0 %456
  %v458 = vrcp.pop %v454
  %v459 = vrcp.pop %v457
  %v460 = vmul.f32 %v449, %v458
  %v461 = vmul.f32 %v451, %v459
  %v463 = vsel %vm281, %v460, 0
  %465 = vmatprep.subr.mxu0 0.0
  %466 = vmatpush1.msra.mxu0 %v273
  %467 = vmatprep.subr.mxu0 0.0
  %468 = vmatpush1.msra.mxu0 0.0
  %469 = vmatprep.subr.mxu0 0.0
  %470 = vmatpush1.msra.mxu0 0.0
  %471 = vmatprep.subr.mxu0 0.0
  %472 = vmatpush1.msra.mxu0 0.0
  %473 = vmatprep.subr.mxu0 0.0
  %474 = vmatpush1.msra.mxu0 0.0
  %475 = vmatprep.subr.mxu0 0.0
  %476 = vmatpush1.msra.mxu0 0.0
  %477 = vmatprep.subr.mxu0 0.0
  %478 = vmatpush1.msra.mxu0 0.0
  %479 = vmatprep.subr.mxu0 0.0
  %480 = vmatpush1.msra.mxu0 0.0
  %481 = vmatprep.subr.mxu0 0.0
  %482 = vmatpush1.msra.mxu0 0.0
  %483 = vmatprep.subr.mxu0 0.0
  %484 = vmatpush1.msra.mxu0 0.0
  %485 = vmatprep.subr.mxu0 0.0
  %486 = vmatpush1.msra.mxu0 0.0
  %487 = vmatprep.subr.mxu0 0.0
  %488 = vmatpush1.msra.mxu0 0.0
  %489 = vmatprep.subr.mxu0 0.0
  %490 = vmatpush1.msra.mxu0 0.0
  %491 = vmatprep.subr.mxu0 0.0
  %492 = vmatpush1.msra.mxu0 0.0
  %493 = vmatprep.subr.mxu0 0.0
  %494 = vmatpush1.msra.mxu0 0.0
  %495 = vmatprep.subr.mxu0 0.0
  %496 = vmatpush1.msra.mxu0 0.0
  %497 = vmatprep.subr.mxu0 0.0
  %498 = vmatpush1.msra.mxu0 0.0
  %499 = vmatprep.subr.mxu0 0.0
  %500 = vmatpush1.msra.mxu0 0.0
  %501 = vmatprep.subr.mxu0 0.0
  %502 = vmatpush1.msra.mxu0 0.0
  %503 = vmatprep.subr.mxu0 0.0
  %504 = vmatpush1.msra.mxu0 0.0
  %505 = vmatprep.subr.mxu0 0.0
  %506 = vmatpush1.msra.mxu0 0.0
  %507 = vmatprep.subr.mxu0 0.0
  %508 = vmatpush1.msra.mxu0 0.0
  %509 = vmatprep.subr.mxu0 0.0
  %510 = vmatpush1.msra.mxu0 0.0
  %511 = vmatprep.subr.mxu0 0.0
  %512 = vmatpush1.msra.mxu0 0.0
  %513 = vmatprep.subr.mxu0 0.0
  %514 = vmatpush1.msra.mxu0 0.0
  %515 = vmatprep.subr.mxu0 0.0
  %516 = vmatpush1.msra.mxu0 0.0
  %517 = vmatprep.subr.mxu0 0.0
  %518 = vmatpush1.msra.mxu0 0.0
  %519 = vmatprep.subr.mxu0 0.0
  %520 = vmatpush1.msra.mxu0 0.0
  %521 = vmatprep.subr.mxu0 0.0
  %522 = vmatpush1.msra.mxu0 0.0
  %523 = vmatprep.subr.mxu0 0.0
  %524 = vmatpush1.msra.mxu0 0.0
  %525 = vmatprep.subr.mxu0 0.0
  %526 = vmatpush1.msra.mxu0 0.0
  %527 = vmatprep.subr.mxu0 0.0
  %528 = vmatpush1.msra.mxu0 0.0
  %529 = vmatprep.mubr.f32.mxu0 0.0
  %530 = vmatmul.mubr.f32.gmra.mrb[0].mxu0 %v463
  %v531 = vpop.f32.mrb[0].mxu0
  %v532 = vadd.f32 0.0, %v531
  %v533 = vpop.f32.mrb[0].mxu0
  %534 = vdwg.mxu0
  %v536 = vsel %vm281, %v461, 0
  %538 = vmatprep.subr.mxu0 0.0
  %539 = vmatpush1.msra.mxu0 %v278
  %540 = vmatprep.subr.mxu0 0.0
  %541 = vmatpush1.msra.mxu0 0.0
  %542 = vmatprep.subr.mxu0 0.0
  %543 = vmatpush1.msra.mxu0 0.0
  %544 = vmatprep.subr.mxu0 0.0
  %545 = vmatpush1.msra.mxu0 0.0
  %546 = vmatprep.subr.mxu0 0.0
  %547 = vmatpush1.msra.mxu0 0.0
  %548 = vmatprep.subr.mxu0 0.0
  %549 = vmatpush1.msra.mxu0 0.0
  %550 = vmatprep.subr.mxu0 0.0
  %551 = vmatpush1.msra.mxu0 0.0
  %552 = vmatprep.subr.mxu0 0.0
  %553 = vmatpush1.msra.mxu0 0.0
  %554 = vmatprep.subr.mxu0 0.0
  %555 = vmatpush1.msra.mxu0 0.0
  %556 = vmatprep.subr.mxu0 0.0
  %557 = vmatpush1.msra.mxu0 0.0
  %558 = vmatprep.subr.mxu0 0.0
  %559 = vmatpush1.msra.mxu0 0.0
  %560 = vmatprep.subr.mxu0 0.0
  %561 = vmatpush1.msra.mxu0 0.0
  %562 = vmatprep.subr.mxu0 0.0
  %563 = vmatpush1.msra.mxu0 0.0
  %564 = vmatprep.subr.mxu0 0.0
  %565 = vmatpush1.msra.mxu0 0.0
  %566 = vmatprep.subr.mxu0 0.0
  %567 = vmatpush1.msra.mxu0 0.0
  %568 = vmatprep.subr.mxu0 0.0
  %569 = vmatpush1.msra.mxu0 0.0
  %570 = vmatprep.subr.mxu0 0.0
  %571 = vmatpush1.msra.mxu0 0.0
  %572 = vmatprep.subr.mxu0 0.0
  %573 = vmatpush1.msra.mxu0 0.0
  %574 = vmatprep.subr.mxu0 0.0
  %575 = vmatpush1.msra.mxu0 0.0
  %576 = vmatprep.subr.mxu0 0.0
  %577 = vmatpush1.msra.mxu0 0.0
  %578 = vmatprep.subr.mxu0 0.0
  %579 = vmatpush1.msra.mxu0 0.0
  %580 = vmatprep.subr.mxu0 0.0
  %581 = vmatpush1.msra.mxu0 0.0
  %582 = vmatprep.subr.mxu0 0.0
  %583 = vmatpush1.msra.mxu0 0.0
  %584 = vmatprep.subr.mxu0 0.0
  %585 = vmatpush1.msra.mxu0 0.0
  %586 = vmatprep.subr.mxu0 0.0
  %587 = vmatpush1.msra.mxu0 0.0
  %588 = vmatprep.subr.mxu0 0.0
  %589 = vmatpush1.msra.mxu0 0.0
  %590 = vmatprep.subr.mxu0 0.0
  %591 = vmatpush1.msra.mxu0 0.0
  %592 = vmatprep.subr.mxu0 0.0
  %593 = vmatpush1.msra.mxu0 0.0
  %594 = vmatprep.subr.mxu0 0.0
  %595 = vmatpush1.msra.mxu0 0.0
  %596 = vmatprep.subr.mxu0 0.0
  %597 = vmatpush1.msra.mxu0 0.0
  %598 = vmatprep.subr.mxu0 0.0
  %599 = vmatpush1.msra.mxu0 0.0
  %600 = vmatprep.subr.mxu0 0.0
  %601 = vmatpush1.msra.mxu0 0.0
  %602 = vmatprep.mubr.f32.mxu0 0.0
  %603 = vmatmul.mubr.f32.gmra.mrb[0].mxu0 %v536
  %v604 = vpop.f32.mrb[0].mxu0
  %v605 = vadd.f32 0.0, %v604
  %v606 = vpop.f32.mrb[0].mxu0
  %607 = vdwg.mxu0
  %v608 = vld [vmem:[%s5] sm:$0xff]
  %s609 = scalar_lea.vmem %s3, 32
  %v610 = vld [vmem:[%s609] sm:$0xff]
  %v611 = vld [vmem:[%s609 + $0x8] sm:$0xff]
  %v612 = vld [vmem:[%s609 + $0x10] sm:$0xff]
  %v613 = vld [vmem:[%s609 + $0x18] sm:$0xff]
  %s614 = scalar_lea.vmem %s4, 32
  %v615 = vld [vmem:[%s614] sm:$0xff]
  %v616 = vld [vmem:[%s614 + $0x8] sm:$0xff]
  %v617 = vld [vmem:[%s614 + $0x10] sm:$0xff]
  %v618 = vld [vmem:[%s614 + $0x18] sm:$0xff]
  %619 = vmatprep.subr.mxu0 0.0
  %620 = vmatpush1.msra.mxu0 %v610
  %621 = vmatprep.subr.mxu0 0.0
  %622 = vmatpush1.msra.mxu0 %v611
  %623 = vmatprep.subr.mxu0 0.0
  %624 = vmatpush1.msra.mxu0 %v612
  %625 = vmatprep.subr.mxu0 0.0
  %626 = vmatpush1.msra.mxu0 %v613
  %627 = vmatprep.subr.mxu0 0.0
  %628 = vmatpush1.msra.mxu0 0.0
  %629 = vmatprep.subr.mxu0 0.0
  %630 = vmatpush1.msra.mxu0 0.0
  %631 = vmatprep.subr.mxu0 0.0
  %632 = vmatpush1.msra.mxu0 0.0
  %633 = vmatprep.subr.mxu0 0.0
  %634 = vmatpush1.msra.mxu0 0.0
  %635 = vmatprep.subr.mxu0 0.0
  %636 = vmatpush1.msra.mxu0 0.0
  %637 = vmatprep.subr.mxu0 0.0
  %638 = vmatpush1.msra.mxu0 0.0
  %639 = vmatprep.subr.mxu0 0.0
  %640 = vmatpush1.msra.mxu0 0.0
  %641 = vmatprep.subr.mxu0 0.0
  %642 = vmatpush1.msra.mxu0 0.0
  %643 = vmatprep.subr.mxu0 0.0
  %644 = vmatpush1.msra.mxu0 0.0
  %645 = vmatprep.subr.mxu0 0.0
  %646 = vmatpush1.msra.mxu0 0.0
  %647 = vmatprep.subr.mxu0 0.0
  %648 = vmatpush1.msra.mxu0 0.0
  %649 = vmatprep.subr.mxu0 0.0
  %650 = vmatpush1.msra.mxu0 0.0
  %651 = vmatprep.subr.mxu0 0.0
  %652 = vmatpush1.msra.mxu0 0.0
  %653 = vmatprep.subr.mxu0 0.0
  %654 = vmatpush1.msra.mxu0 0.0
  %655 = vmatprep.subr.mxu0 0.0
  %656 = vmatpush1.msra.mxu0 0.0
  %657 = vmatprep.subr.mxu0 0.0
  %658 = vmatpush1.msra.mxu0 0.0
  %659 = vmatprep.subr.mxu0 0.0
  %660 = vmatpush1.msra.mxu0 0.0
  %661 = vmatprep.subr.mxu0 0.0
  %662 = vmatpush1.msra.mxu0 0.0
  %663 = vmatprep.subr.mxu0 0.0
  %664 = vmatpush1.msra.mxu0 0.0
  %665 = vmatprep.subr.mxu0 0.0
  %666 = vmatpush1.msra.mxu0 0.0
  %667 = vmatprep.subr.mxu0 0.0
  %668 = vmatpush1.msra.mxu0 0.0
  %669 = vmatprep.subr.mxu0 0.0
  %670 = vmatpush1.msra.mxu0 0.0
  %671 = vmatprep.subr.mxu0 0.0
  %672 = vmatpush1.msra.mxu0 0.0
  %673 = vmatprep.subr.mxu0 0.0
  %674 = vmatpush1.msra.mxu0 0.0
  %675 = vmatprep.subr.mxu0 0.0
  %676 = vmatpush1.msra.mxu0 0.0
  %677 = vmatprep.subr.mxu0 0.0
  %678 = vmatpush1.msra.mxu0 0.0
  %679 = vmatprep.subr.mxu0 0.0
  %680 = vmatpush1.msra.mxu0 0.0
  %681 = vmatprep.subr.mxu0 0.0
  %682 = vmatpush1.msra.mxu0 0.0
  %683 = vmatprep.mubr.f32.mxu0 0.0
  %684 = vmatmul.mubr.f32.gmra.mrb[0].mxu0 %v45
  %v685 = vpop.f32.mrb[0].mxu0
  %v686 = vadd.f32 0.0, %v685
  %v687 = vpop.f32.mrb[0].mxu0
  %688 = vmatprep.mubr.f32.mxu0 0.0
  %689 = vmatmul.mubr.f32.gmra.mrb[0].mxu0 %v48
  %v690 = vpop.f32.mrb[0].mxu0
  %v691 = vadd.f32 0.0, %v690
  %v692 = vpop.f32.mrb[0].mxu0
  %693 = vdwg.mxu0
  %694 = vmatprep.subr.mxu0 0.0
  %695 = vmatpush1.msra.mxu0 %v615
  %696 = vmatprep.subr.mxu0 0.0
  %697 = vmatpush1.msra.mxu0 %v616
  %698 = vmatprep.subr.mxu0 0.0
  %699 = vmatpush1.msra.mxu0 %v617
  %700 = vmatprep.subr.mxu0 0.0
  %701 = vmatpush1.msra.mxu0 %v618
  %702 = vmatprep.subr.mxu0 0.0
  %703 = vmatpush1.msra.mxu0 0.0
  %704 = vmatprep.subr.mxu0 0.0
  %705 = vmatpush1.msra.mxu0 0.0
  %706 = vmatprep.subr.mxu0 0.0
  %707 = vmatpush1.msra.mxu0 0.0
  %708 = vmatprep.subr.mxu0 0.0
  %709 = vmatpush1.msra.mxu0 0.0
  %710 = vmatprep.subr.mxu0 0.0
  %711 = vmatpush1.msra.mxu0 0.0
  %712 = vmatprep.subr.mxu0 0.0
  %713 = vmatpush1.msra.mxu0 0.0
  %714 = vmatprep.subr.mxu0 0.0
  %715 = vmatpush1.msra.mxu0 0.0
  %716 = vmatprep.subr.mxu0 0.0
  %717 = vmatpush1.msra.mxu0 0.0
  %718 = vmatprep.subr.mxu0 0.0
  %719 = vmatpush1.msra.mxu0 0.0
  %720 = vmatprep.subr.mxu0 0.0
  %721 = vmatpush1.msra.mxu0 0.0
  %722 = vmatprep.subr.mxu0 0.0
  %723 = vmatpush1.msra.mxu0 0.0
  %724 = vmatprep.subr.mxu0 0.0
  %725 = vmatpush1.msra.mxu0 0.0
  %726 = vmatprep.subr.mxu0 0.0
  %727 = vmatpush1.msra.mxu0 0.0
  %728 = vmatprep.subr.mxu0 0.0
  %729 = vmatpush1.msra.mxu0 0.0
  %730 = vmatprep.subr.mxu0 0.0
  %731 = vmatpush1.msra.mxu0 0.0
  %732 = vmatprep.subr.mxu0 0.0
  %733 = vmatpush1.msra.mxu0 0.0
  %734 = vmatprep.subr.mxu0 0.0
  %735 = vmatpush1.msra.mxu0 0.0
  %736 = vmatprep.subr.mxu0 0.0
  %737 = vmatpush1.msra.mxu0 0.0
  %738 = vmatprep.subr.mxu0 0.0
  %739 = vmatpush1.msra.mxu0 0.0
  %740 = vmatprep.subr.mxu0 0.0
  %741 = vmatpush1.msra.mxu0 0.0
  %742 = vmatprep.subr.mxu0 0.0
  %743 = vmatpush1.msra.mxu0 0.0
  %744 = vmatprep.subr.mxu0 0.0
  %745 = vmatpush1.msra.mxu0 0.0
  %746 = vmatprep.subr.mxu0 0.0
  %747 = vmatpush1.msra.mxu0 0.0
  %748 = vmatprep.subr.mxu0 0.0
  %749 = vmatpush1.msra.mxu0 0.0
  %750 = vmatprep.subr.mxu0 0.0
  %751 = vmatpush1.msra.mxu0 0.0
  %752 = vmatprep.subr.mxu0 0.0
  %753 = vmatpush1.msra.mxu0 0.0
  %754 = vmatprep.subr.mxu0 0.0
  %755 = vmatpush1.msra.mxu0 0.0
  %756 = vmatprep.subr.mxu0 0.0
  %757 = vmatpush1.msra.mxu0 0.0
  %758 = vmatprep.mubr.f32.mxu0 0.0
  %759 = vmatmul.mubr.f32.gmra.mrb[0].mxu0 %v126
  %v760 = vpop.f32.mrb[0].mxu0
  %v761 = vadd.f32 0.0, %v760
  %v762 = vpop.f32.mrb[0].mxu0
  %763 = vmatprep.mubr.f32.mxu0 0.0
  %764 = vmatmul.mubr.f32.gmra.mrb[0].mxu0 %v129
  %v765 = vpop.f32.mrb[0].mxu0
  %v766 = vadd.f32 0.0, %v765
  %v767 = vpop.f32.mrb[0].mxu0
  %768 = vdwg.mxu0
  %769 = vmatprep.subr.mxu0 0.0
  %770 = vmatpush1.msra.mxu0 %v610
  %771 = vmatprep.subr.mxu0 0.0
  %772 = vmatpush1.msra.mxu0 %v611
  %773 = vmatprep.subr.mxu0 0.0
  %774 = vmatpush1.msra.mxu0 %v612
  %775 = vmatprep.subr.mxu0 0.0
  %776 = vmatpush1.msra.mxu0 %v613
  %777 = vmatprep.subr.mxu0 0.0
  %778 = vmatpush1.msra.mxu0 0.0
  %779 = vmatprep.subr.mxu0 0.0
  %780 = vmatpush1.msra.mxu0 0.0
  %781 = vmatprep.subr.mxu0 0.0
  %782 = vmatpush1.msra.mxu0 0.0
  %783 = vmatprep.subr.mxu0 0.0
  %784 = vmatpush1.msra.mxu0 0.0
  %785 = vmatprep.subr.mxu0 0.0
  %786 = vmatpush1.msra.mxu0 0.0
  %787 = vmatprep.subr.mxu0 0.0
  %788 = vmatpush1.msra.mxu0 0.0
  %789 = vmatprep.subr.mxu0 0.0
  %790 = vmatpush1.msra.mxu0 0.0
  %791 = vmatprep.subr.mxu0 0.0
  %792 = vmatpush1.msra.mxu0 0.0
  %793 = vmatprep.subr.mxu0 0.0
  %794 = vmatpush1.msra.mxu0 0.0
  %795 = vmatprep.subr.mxu0 0.0
  %796 = vmatpush1.msra.mxu0 0.0
  %797 = vmatprep.subr.mxu0 0.0
  %798 = vmatpush1.msra.mxu0 0.0
  %799 = vmatprep.subr.mxu0 0.0
  %800 = vmatpush1.msra.mxu0 0.0
  %801 = vmatprep.subr.mxu0 0.0
  %802 = vmatpush1.msra.mxu0 0.0
  %803 = vmatprep.subr.mxu0 0.0
  %804 = vmatpush1.msra.mxu0 0.0
  %805 = vmatprep.subr.mxu0 0.0
  %806 = vmatpush1.msra.mxu0 0.0
  %807 = vmatprep.subr.mxu0 0.0
  %808 = vmatpush1.msra.mxu0 0.0
  %809 = vmatprep.subr.mxu0 0.0
  %810 = vmatpush1.msra.mxu0 0.0
  %811 = vmatprep.subr.mxu0 0.0
  %812 = vmatpush1.msra.mxu0 0.0
  %813 = vmatprep.subr.mxu0 0.0
  %814 = vmatpush1.msra.mxu0 0.0
  %815 = vmatprep.subr.mxu0 0.0
  %816 = vmatpush1.msra.mxu0 0.0
  %817 = vmatprep.subr.mxu0 0.0
  %818 = vmatpush1.msra.mxu0 0.0
  %819 = vmatprep.subr.mxu0 0.0
  %820 = vmatpush1.msra.mxu0 0.0
  %821 = vmatprep.subr.mxu0 0.0
  %822 = vmatpush1.msra.mxu0 0.0
  %823 = vmatprep.subr.mxu0 0.0
  %824 = vmatpush1.msra.mxu0 0.0
  %825 = vmatprep.subr.mxu0 0.0
  %826 = vmatpush1.msra.mxu0 0.0
  %827 = vmatprep.subr.mxu0 0.0
  %828 = vmatpush1.msra.mxu0 0.0
  %829 = vmatprep.subr.mxu0 0.0
  %830 = vmatpush1.msra.mxu0 0.0
  %831 = vmatprep.subr.mxu0 0.0
  %832 = vmatpush1.msra.mxu0 0.0
  %833 = vmatprep.mubr.f32.mxu0 0.0
  %834 = vmatmul.mubr.f32.gmra.mrb[0].mxu0 %v126
  %v835 = vpop.f32.mrb[0].mxu0
  %v836 = vadd.f32 0.0, %v835
  %v837 = vpop.f32.mrb[0].mxu0
  %838 = vmatprep.mubr.f32.mxu0 0.0
  %839 = vmatmul.mubr.f32.gmra.mrb[0].mxu0 %v129
  %v840 = vpop.f32.mrb[0].mxu0
  %v841 = vadd.f32 0.0, %v840
  %v842 = vpop.f32.mrb[0].mxu0
  %843 = vdwg.mxu0
  %v845 = vsel %vm281, %v686, 0
  %v848 = vsel %vm281, %v761, 0
  %850 = vmatprep.subr.mxu0 0.0
  %851 = vmatpush1.xpose.msra.mxu0 %v848
  %852 = vmatprep.subr.mxu0 0.0
  %853 = vmatpush1.xpose.msra.mxu0 0.0
  %854 = vmatprep.subr.mxu0 0.0
  %855 = vmatpush1.xpose.msra.mxu0 0.0
  %856 = vmatprep.subr.mxu0 0.0
  %857 = vmatpush1.xpose.msra.mxu0 0.0
  %858 = vmatprep.subr.mxu0 0.0
  %859 = vmatpush1.xpose.msra.mxu0 0.0
  %860 = vmatprep.subr.mxu0 0.0
  %861 = vmatpush1.xpose.msra.mxu0 0.0
  %862 = vmatprep.subr.mxu0 0.0
  %863 = vmatpush1.xpose.msra.mxu0 0.0
  %864 = vmatprep.subr.mxu0 0.0
  %865 = vmatpush1.xpose.msra.mxu0 0.0
  %866 = vmatprep.subr.mxu0 0.0
  %867 = vmatpush1.xpose.msra.mxu0 0.0
  %868 = vmatprep.subr.mxu0 0.0
  %869 = vmatpush1.xpose.msra.mxu0 0.0
  %870 = vmatprep.subr.mxu0 0.0
  %871 = vmatpush1.xpose.msra.mxu0 0.0
  %872 = vmatprep.subr.mxu0 0.0
  %873 = vmatpush1.xpose.msra.mxu0 0.0
  %874 = vmatprep.subr.mxu0 0.0
  %875 = vmatpush1.xpose.msra.mxu0 0.0
  %876 = vmatprep.subr.mxu0 0.0
  %877 = vmatpush1.xpose.msra.mxu0 0.0
  %878 = vmatprep.subr.mxu0 0.0
  %879 = vmatpush1.xpose.msra.mxu0 0.0
  %880 = vmatprep.subr.mxu0 0.0
  %881 = vmatpush1.xpose.msra.mxu0 0.0
  %882 = vmatprep.subr.mxu0 0.0
  %883 = vmatpush1.xpose.msra.mxu0 0.0
  %884 = vmatprep.subr.mxu0 0.0
  %885 = vmatpush1.xpose.msra.mxu0 0.0
  %886 = vmatprep.subr.mxu0 0.0
  %887 = vmatpush1.xpose.msra.mxu0 0.0
  %888 = vmatprep.subr.mxu0 0.0
  %889 = vmatpush1.xpose.msra.mxu0 0.0
  %890 = vmatprep.subr.mxu0 0.0
  %891 = vmatpush1.xpose.msra.mxu0 0.0
  %892 = vmatprep.subr.mxu0 0.0
  %893 = vmatpush1.xpose.msra.mxu0 0.0
  %894 = vmatprep.subr.mxu0 0.0
  %895 = vmatpush1.xpose.msra.mxu0 0.0
  %896 = vmatprep.subr.mxu0 0.0
  %897 = vmatpush1.xpose.msra.mxu0 0.0
  %898 = vmatprep.subr.mxu0 0.0
  %899 = vmatpush1.xpose.msra.mxu0 0.0
  %900 = vmatprep.subr.mxu0 0.0
  %901 = vmatpush1.xpose.msra.mxu0 0.0
  %902 = vmatprep.subr.mxu0 0.0
  %903 = vmatpush1.xpose.msra.mxu0 0.0
  %904 = vmatprep.subr.mxu0 0.0
  %905 = vmatpush1.xpose.msra.mxu0 0.0
  %906 = vmatprep.subr.mxu0 0.0
  %907 = vmatpush1.xpose.msra.mxu0 0.0
  %908 = vmatprep.subr.mxu0 0.0
  %909 = vmatpush1.xpose.msra.mxu0 0.0
  %910 = vmatprep.subr.mxu0 0.0
  %911 = vmatpush1.xpose.msra.mxu0 0.0
  %912 = vmatprep.subr.mxu0 0.0
  %913 = vmatpush1.xpose.msra.mxu0 0.0
  %914 = vmatprep.mubr.f32.mxu0 0.0
  %915 = vmatmul.mubr.f32.gmra.mrb[0].mxu0 %v845
  %v916 = vpop.f32.mrb[0].mxu0
  %v917 = vadd.f32 0.0, %v916
  %v918 = vpop.f32.mrb[0].mxu0
  %919 = vdwg.mxu0
  %v921 = vsel %vm281, %v691, 0
  %v924 = vsel %vm281, %v766, 0
  %926 = vmatprep.subr.mxu0 0.0
  %927 = vmatpush1.xpose.msra.mxu0 %v924
  %928 = vmatprep.subr.mxu0 0.0
  %929 = vmatpush1.xpose.msra.mxu0 0.0
  %930 = vmatprep.subr.mxu0 0.0
  %931 = vmatpush1.xpose.msra.mxu0 0.0
  %932 = vmatprep.subr.mxu0 0.0
  %933 = vmatpush1.xpose.msra.mxu0 0.0
  %934 = vmatprep.subr.mxu0 0.0
  %935 = vmatpush1.xpose.msra.mxu0 0.0
  %936 = vmatprep.subr.mxu0 0.0
  %937 = vmatpush1.xpose.msra.mxu0 0.0
  %938 = vmatprep.subr.mxu0 0.0
  %939 = vmatpush1.xpose.msra.mxu0 0.0
  %940 = vmatprep.subr.mxu0 0.0
  %941 = vmatpush1.xpose.msra.mxu0 0.0
  %942 = vmatprep.subr.mxu0 0.0
  %943 = vmatpush1.xpose.msra.mxu0 0.0
  %944 = vmatprep.subr.mxu0 0.0
  %945 = vmatpush1.xpose.msra.mxu0 0.0
  %946 = vmatprep.subr.mxu0 0.0
  %947 = vmatpush1.xpose.msra.mxu0 0.0
  %948 = vmatprep.subr.mxu0 0.0
  %949 = vmatpush1.xpose.msra.mxu0 0.0
  %950 = vmatprep.subr.mxu0 0.0
  %951 = vmatpush1.xpose.msra.mxu0 0.0
  %952 = vmatprep.subr.mxu0 0.0
  %953 = vmatpush1.xpose.msra.mxu0 0.0
  %954 = vmatprep.subr.mxu0 0.0
  %955 = vmatpush1.xpose.msra.mxu0 0.0
  %956 = vmatprep.subr.mxu0 0.0
  %957 = vmatpush1.xpose.msra.mxu0 0.0
  %958 = vmatprep.subr.mxu0 0.0
  %959 = vmatpush1.xpose.msra.mxu0 0.0
  %960 = vmatprep.subr.mxu0 0.0
  %961 = vmatpush1.xpose.msra.mxu0 0.0
  %962 = vmatprep.subr.mxu0 0.0
  %963 = vmatpush1.xpose.msra.mxu0 0.0
  %964 = vmatprep.subr.mxu0 0.0
  %965 = vmatpush1.xpose.msra.mxu0 0.0
  %966 = vmatprep.subr.mxu0 0.0
  %967 = vmatpush1.xpose.msra.mxu0 0.0
  %968 = vmatprep.subr.mxu0 0.0
  %969 = vmatpush1.xpose.msra.mxu0 0.0
  %970 = vmatprep.subr.mxu0 0.0
  %971 = vmatpush1.xpose.msra.mxu0 0.0
  %972 = vmatprep.subr.mxu0 0.0
  %973 = vmatpush1.xpose.msra.mxu0 0.0
  %974 = vmatprep.subr.mxu0 0.0
  %975 = vmatpush1.xpose.msra.mxu0 0.0
  %976 = vmatprep.subr.mxu0 0.0
  %977 = vmatpush1.xpose.msra.mxu0 0.0
  %978 = vmatprep.subr.mxu0 0.0
  %979 = vmatpush1.xpose.msra.mxu0 0.0
  %980 = vmatprep.subr.mxu0 0.0
  %981 = vmatpush1.xpose.msra.mxu0 0.0
  %982 = vmatprep.subr.mxu0 0.0
  %983 = vmatpush1.xpose.msra.mxu0 0.0
  %984 = vmatprep.subr.mxu0 0.0
  %985 = vmatpush1.xpose.msra.mxu0 0.0
  %986 = vmatprep.subr.mxu0 0.0
  %987 = vmatpush1.xpose.msra.mxu0 0.0
  %988 = vmatprep.subr.mxu0 0.0
  %989 = vmatpush1.xpose.msra.mxu0 0.0
  %990 = vmatprep.mubr.f32.mxu0 0.0
  %991 = vmatmul.mubr.f32.gmra.mrb[0].mxu0 %v921
  %v992 = vpop.f32.mrb[0].mxu0
  %v993 = vadd.f32 0.0, %v992
  %v994 = vpop.f32.mrb[0].mxu0
  %995 = vdwg.mxu0
  %v996 = vmul.f32 %v917, 0.35355338
  %v997 = vmul.f32 %v993, 0.35355338
  %v998 = vsel %vm436, -1e+30, %v996
  %v999 = vsel %vm437, -1e+30, %v997
  %v1000 = vsel %vm281, %v998, -inf
  %1001 = vmax.xlane.f32.xlu0 %v1000
  %v1002 = vpop.xlane.xlu0 %1001
  %v1003 = vsel %vm281, %v999, -inf
  %1004 = vmax.xlane.f32.xlu0 %v1003
  %v1005 = vpop.xlane.xlu0 %1004
  %v1006 = vsub.f32 %v998, %v1002
  %v1007 = vsub.f32 %v999, %v1005
  %v1008 = vmul.f32 %v1006, 1.442695
  %v1009 = vpow.pop %v1008
  %v1010 = vmul.f32 %v1007, 1.442695
  %v1011 = vpow.pop %v1010
  %v1012 = vsel %vm281, %v1009, 0.0
  %1013 = vadd.xlane.f32.xlu0 %v1012
  %v1014 = vpop.xlane.xlu0 %1013
  %v1015 = vsel %vm281, %v1011, 0.0
  %1016 = vadd.xlane.f32.xlu0 %v1015
  %v1017 = vpop.xlane.xlu0 %1016
  %v1018 = vrcp.pop %v1014
  %v1019 = vrcp.pop %v1017
  %v1020 = vmul.f32 %v1009, %v1018
  %v1021 = vmul.f32 %v1011, %v1019
  %v1023 = vsel %vm281, %v1020, 0
  %1025 = vmatprep.subr.mxu0 0.0
  %1026 = vmatpush1.msra.mxu0 %v836
  %1027 = vmatprep.subr.mxu0 0.0
  %1028 = vmatpush1.msra.mxu0 0.0
  %1029 = vmatprep.subr.mxu0 0.0
  %1030 = vmatpush1.msra.mxu0 0.0
  %1031 = vmatprep.subr.mxu0 0.0
  %1032 = vmatpush1.msra.mxu0 0.0
  %1033 = vmatprep.subr.mxu0 0.0
  %1034 = vmatpush1.msra.mxu0 0.0
  %1035 = vmatprep.subr.mxu0 0.0
  %1036 = vmatpush1.msra.mxu0 0.0
  %1037 = vmatprep.subr.mxu0 0.0
  %1038 = vmatpush1.msra.mxu0 0.0
  %1039 = vmatprep.subr.mxu0 0.0
  %1040 = vmatpush1.msra.mxu0 0.0
  %1041 = vmatprep.subr.mxu0 0.0
  %1042 = vmatpush1.msra.mxu0 0.0
  %1043 = vmatprep.subr.mxu0 0.0
  %1044 = vmatpush1.msra.mxu0 0.0
  %1045 = vmatprep.subr.mxu0 0.0
  %1046 = vmatpush1.msra.mxu0 0.0
  %1047 = vmatprep.subr.mxu0 0.0
  %1048 = vmatpush1.msra.mxu0 0.0
  %1049 = vmatprep.subr.mxu0 0.0
  %1050 = vmatpush1.msra.mxu0 0.0
  %1051 = vmatprep.subr.mxu0 0.0
  %1052 = vmatpush1.msra.mxu0 0.0
  %1053 = vmatprep.subr.mxu0 0.0
  %1054 = vmatpush1.msra.mxu0 0.0
  %1055 = vmatprep.subr.mxu0 0.0
  %1056 = vmatpush1.msra.mxu0 0.0
  %1057 = vmatprep.subr.mxu0 0.0
  %1058 = vmatpush1.msra.mxu0 0.0
  %1059 = vmatprep.subr.mxu0 0.0
  %1060 = vmatpush1.msra.mxu0 0.0
  %1061 = vmatprep.subr.mxu0 0.0
  %1062 = vmatpush1.msra.mxu0 0.0
  %1063 = vmatprep.subr.mxu0 0.0
  %1064 = vmatpush1.msra.mxu0 0.0
  %1065 = vmatprep.subr.mxu0 0.0
  %1066 = vmatpush1.msra.mxu0 0.0
  %1067 = vmatprep.subr.mxu0 0.0
  %1068 = vmatpush1.msra.mxu0 0.0
  %1069 = vmatprep.subr.mxu0 0.0
  %1070 = vmatpush1.msra.mxu0 0.0
  %1071 = vmatprep.subr.mxu0 0.0
  %1072 = vmatpush1.msra.mxu0 0.0
  %1073 = vmatprep.subr.mxu0 0.0
  %1074 = vmatpush1.msra.mxu0 0.0
  %1075 = vmatprep.subr.mxu0 0.0
  %1076 = vmatpush1.msra.mxu0 0.0
  %1077 = vmatprep.subr.mxu0 0.0
  %1078 = vmatpush1.msra.mxu0 0.0
  %1079 = vmatprep.subr.mxu0 0.0
  %1080 = vmatpush1.msra.mxu0 0.0
  %1081 = vmatprep.subr.mxu0 0.0
  %1082 = vmatpush1.msra.mxu0 0.0
  %1083 = vmatprep.subr.mxu0 0.0
  %1084 = vmatpush1.msra.mxu0 0.0
  %1085 = vmatprep.subr.mxu0 0.0
  %1086 = vmatpush1.msra.mxu0 0.0
  %1087 = vmatprep.subr.mxu0 0.0
  %1088 = vmatpush1.msra.mxu0 0.0
  %1089 = vmatprep.mubr.f32.mxu0 0.0
  %1090 = vmatmul.mubr.f32.gmra.mrb[0].mxu0 %v1023
  %v1091 = vpop.f32.mrb[0].mxu0
  %v1092 = vadd.f32 0.0, %v1091
  %v1093 = vpop.f32.mrb[0].mxu0
  %1094 = vdwg.mxu0
  %v1096 = vsel %vm281, %v1021, 0
  %1098 = vmatprep.subr.mxu0 0.0
  %1099 = vmatpush1.msra.mxu0 %v841
  %1100 = vmatprep.subr.mxu0 0.0
  %1101 = vmatpush1.msra.mxu0 0.0
  %1102 = vmatprep.subr.mxu0 0.0
  %1103 = vmatpush1.msra.mxu0 0.0
  %1104 = vmatprep.subr.mxu0 0.0
  %1105 = vmatpush1.msra.mxu0 0.0
  %1106 = vmatprep.subr.mxu0 0.0
  %1107 = vmatpush1.msra.mxu0 0.0
  %1108 = vmatprep.subr.mxu0 0.0
  %1109 = vmatpush1.msra.mxu0 0.0
  %1110 = vmatprep.subr.mxu0 0.0
  %1111 = vmatpush1.msra.mxu0 0.0
  %1112 = vmatprep.subr.mxu0 0.0
  %1113 = vmatpush1.msra.mxu0 0.0
  %1114 = vmatprep.subr.mxu0 0.0
  %1115 = vmatpush1.msra.mxu0 0.0
  %1116 = vmatprep.subr.mxu0 0.0
  %1117 = vmatpush1.msra.mxu0 0.0
  %1118 = vmatprep.subr.mxu0 0.0
  %1119 = vmatpush1.msra.mxu0 0.0
  %1120 = vmatprep.subr.mxu0 0.0
  %1121 = vmatpush1.msra.mxu0 0.0
  %1122 = vmatprep.subr.mxu0 0.0
  %1123 = vmatpush1.msra.mxu0 0.0
  %1124 = vmatprep.subr.mxu0 0.0
  %1125 = vmatpush1.msra.mxu0 0.0
  %1126 = vmatprep.subr.mxu0 0.0
  %1127 = vmatpush1.msra.mxu0 0.0
  %1128 = vmatprep.subr.mxu0 0.0
  %1129 = vmatpush1.msra.mxu0 0.0
  %1130 = vmatprep.subr.mxu0 0.0
  %1131 = vmatpush1.msra.mxu0 0.0
  %1132 = vmatprep.subr.mxu0 0.0
  %1133 = vmatpush1.msra.mxu0 0.0
  %1134 = vmatprep.subr.mxu0 0.0
  %1135 = vmatpush1.msra.mxu0 0.0
  %1136 = vmatprep.subr.mxu0 0.0
  %1137 = vmatpush1.msra.mxu0 0.0
  %1138 = vmatprep.subr.mxu0 0.0
  %1139 = vmatpush1.msra.mxu0 0.0
  %1140 = vmatprep.subr.mxu0 0.0
  %1141 = vmatpush1.msra.mxu0 0.0
  %1142 = vmatprep.subr.mxu0 0.0
  %1143 = vmatpush1.msra.mxu0 0.0
  %1144 = vmatprep.subr.mxu0 0.0
  %1145 = vmatpush1.msra.mxu0 0.0
  %1146 = vmatprep.subr.mxu0 0.0
  %1147 = vmatpush1.msra.mxu0 0.0
  %1148 = vmatprep.subr.mxu0 0.0
  %1149 = vmatpush1.msra.mxu0 0.0
  %1150 = vmatprep.subr.mxu0 0.0
  %1151 = vmatpush1.msra.mxu0 0.0
  %1152 = vmatprep.subr.mxu0 0.0
  %1153 = vmatpush1.msra.mxu0 0.0
  %1154 = vmatprep.subr.mxu0 0.0
  %1155 = vmatpush1.msra.mxu0 0.0
  %1156 = vmatprep.subr.mxu0 0.0
  %1157 = vmatpush1.msra.mxu0 0.0
  %1158 = vmatprep.subr.mxu0 0.0
  %1159 = vmatpush1.msra.mxu0 0.0
  %1160 = vmatprep.subr.mxu0 0.0
  %1161 = vmatpush1.msra.mxu0 0.0
  %1162 = vmatprep.mubr.f32.mxu0 0.0
  %1163 = vmatmul.mubr.f32.gmra.mrb[0].mxu0 %v1096
  %v1164 = vpop.f32.mrb[0].mxu0
  %v1165 = vadd.f32 0.0, %v1164
  %v1166 = vpop.f32.mrb[0].mxu0
  %1167 = vdwg.mxu0
  %s1168 = scalar_lea.vmem %s5, 8
  %v1169 = vld [vmem:[%s1168] sm:$0xff]
  %v1171 = vsel %vm281, %v1092, 0
  %v1174 = vsel %vm281, %v1165, 0
  %1176 = vmatprep.subr.mxu0 0.0
  %1177 = vmatpush1.msra.mxu0 %v1169
  %1178 = vmatprep.subr.mxu0 0.0
  %1179 = vmatpush1.msra.mxu0 0.0
  %1180 = vmatprep.subr.mxu0 0.0
  %1181 = vmatpush1.msra.mxu0 0.0
  %1182 = vmatprep.subr.mxu0 0.0
  %1183 = vmatpush1.msra.mxu0 0.0
  %1184 = vmatprep.subr.mxu0 0.0
  %1185 = vmatpush1.msra.mxu0 0.0
  %1186 = vmatprep.subr.mxu0 0.0
  %1187 = vmatpush1.msra.mxu0 0.0
  %1188 = vmatprep.subr.mxu0 0.0
  %1189 = vmatpush1.msra.mxu0 0.0
  %1190 = vmatprep.subr.mxu0 0.0
  %1191 = vmatpush1.msra.mxu0 0.0
  %1192 = vmatprep.subr.mxu0 0.0
  %1193 = vmatpush1.msra.mxu0 0.0
  %1194 = vmatprep.subr.mxu0 0.0
  %1195 = vmatpush1.msra.mxu0 0.0
  %1196 = vmatprep.subr.mxu0 0.0
  %1197 = vmatpush1.msra.mxu0 0.0
  %1198 = vmatprep.subr.mxu0 0.0
  %1199 = vmatpush1.msra.mxu0 0.0
  %1200 = vmatprep.subr.mxu0 0.0
  %1201 = vmatpush1.msra.mxu0 0.0
  %1202 = vmatprep.subr.mxu0 0.0
  %1203 = vmatpush1.msra.mxu0 0.0
  %1204 = vmatprep.subr.mxu0 0.0
  %1205 = vmatpush1.msra.mxu0 0.0
  %1206 = vmatprep.subr.mxu0 0.0
  %1207 = vmatpush1.msra.mxu0 0.0
  %1208 = vmatprep.subr.mxu0 0.0
  %1209 = vmatpush1.msra.mxu0 0.0
  %1210 = vmatprep.subr.mxu0 0.0
  %1211 = vmatpush1.msra.mxu0 0.0
  %1212 = vmatprep.subr.mxu0 0.0
  %1213 = vmatpush1.msra.mxu0 0.0
  %1214 = vmatprep.subr.mxu0 0.0
  %1215 = vmatpush1.msra.mxu0 0.0
  %1216 = vmatprep.subr.mxu0 0.0
  %1217 = vmatpush1.msra.mxu0 0.0
  %1218 = vmatprep.subr.mxu0 0.0
  %1219 = vmatpush1.msra.mxu0 0.0
  %1220 = vmatprep.subr.mxu0 0.0
  %1221 = vmatpush1.msra.mxu0 0.0
  %1222 = vmatprep.subr.mxu0 0.0
  %1223 = vmatpush1.msra.mxu0 0.0
  %1224 = vmatprep.subr.mxu0 0.0
  %1225 = vmatpush1.msra.mxu0 0.0
  %1226 = vmatprep.subr.mxu0 0.0
  %1227 = vmatpush1.msra.mxu0 0.0
  %1228 = vmatprep.subr.mxu0 0.0
  %1229 = vmatpush1.msra.mxu0 0.0
  %1230 = vmatprep.subr.mxu0 0.0
  %1231 = vmatpush1.msra.mxu0 0.0
  %1232 = vmatprep.subr.mxu0 0.0
  %1233 = vmatpush1.msra.mxu0 0.0
  %1234 = vmatprep.subr.mxu0 0.0
  %1235 = vmatpush1.msra.mxu0 0.0
  %1236 = vmatprep.subr.mxu0 0.0
  %1237 = vmatpush1.msra.mxu0 0.0
  %1238 = vmatprep.subr.mxu0 0.0
  %1239 = vmatpush1.msra.mxu0 0.0
  %1240 = vmatprep.mubr.f32.mxu0 0.0
  %1241 = vmatmul.mubr.f32.gmra.mrb[0].mxu0 %v1171
  %v1242 = vpop.f32.mrb[0].mxu0
  %v1243 = vadd.f32 0.0, %v1242
  %v1244 = vpop.f32.mrb[0].mxu0
  %1245 = vmatprep.mubr.f32.mxu0 0.0
  %1246 = vmatmul.mubr.f32.gmra.mrb[0].mxu0 %v1174
  %v1247 = vpop.f32.mrb[0].mxu0
  %v1248 = vadd.f32 0.0, %v1247
  %v1249 = vpop.f32.mrb[0].mxu0
  %1250 = vdwg.mxu0
  %v1252 = vsel %vm281, %v532, 0
  %v1255 = vsel %vm281, %v605, 0
  %1257 = vmatprep.subr.mxu0 0.0
  %1258 = vmatpush1.msra.mxu0 %v608
  %1259 = vmatprep.subr.mxu0 0.0
  %1260 = vmatpush1.msra.mxu0 0.0
  %1261 = vmatprep.subr.mxu0 0.0
  %1262 = vmatpush1.msra.mxu0 0.0
  %1263 = vmatprep.subr.mxu0 0.0
  %1264 = vmatpush1.msra.mxu0 0.0
  %1265 = vmatprep.subr.mxu0 0.0
  %1266 = vmatpush1.msra.mxu0 0.0
  %1267 = vmatprep.subr.mxu0 0.0
  %1268 = vmatpush1.msra.mxu0 0.0
  %1269 = vmatprep.subr.mxu0 0.0
  %1270 = vmatpush1.msra.mxu0 0.0
  %1271 = vmatprep.subr.mxu0 0.0
  %1272 = vmatpush1.msra.mxu0 0.0
  %1273 = vmatprep.subr.mxu0 0.0
  %1274 = vmatpush1.msra.mxu0 0.0
  %1275 = vmatprep.subr.mxu0 0.0
  %1276 = vmatpush1.msra.mxu0 0.0
  %1277 = vmatprep.subr.mxu0 0.0
  %1278 = vmatpush1.msra.mxu0 0.0
  %1279 = vmatprep.subr.mxu0 0.0
  %1280 = vmatpush1.msra.mxu0 0.0
  %1281 = vmatprep.subr.mxu0 0.0
  %1282 = vmatpush1.msra.mxu0 0.0
  %1283 = vmatprep.subr.mxu0 0.0
  %1284 = vmatpush1.msra.mxu0 0.0
  %1285 = vmatprep.subr.mxu0 0.0
  %1286 = vmatpush1.msra.mxu0 0.0
  %1287 = vmatprep.subr.mxu0 0.0
  %1288 = vmatpush1.msra.mxu0 0.0
  %1289 = vmatprep.subr.mxu0 0.0
  %1290 = vmatpush1.msra.mxu0 0.0
  %1291 = vmatprep.subr.mxu0 0.0
  %1292 = vmatpush1.msra.mxu0 0.0
  %1293 = vmatprep.subr.mxu0 0.0
  %1294 = vmatpush1.msra.mxu0 0.0
  %1295 = vmatprep.subr.mxu0 0.0
  %1296 = vmatpush1.msra.mxu0 0.0
  %1297 = vmatprep.subr.mxu0 0.0
  %1298 = vmatpush1.msra.mxu0 0.0
  %1299 = vmatprep.subr.mxu0 0.0
  %1300 = vmatpush1.msra.mxu0 0.0
  %1301 = vmatprep.subr.mxu0 0.0
  %1302 = vmatpush1.msra.mxu0 0.0
  %1303 = vmatprep.subr.mxu0 0.0
  %1304 = vmatpush1.msra.mxu0 0.0
  %1305 = vmatprep.subr.mxu0 0.0
  %1306 = vmatpush1.msra.mxu0 0.0
  %1307 = vmatprep.subr.mxu0 0.0
  %1308 = vmatpush1.msra.mxu0 0.0
  %1309 = vmatprep.subr.mxu0 0.0
  %1310 = vmatpush1.msra.mxu0 0.0
  %1311 = vmatprep.subr.mxu0 0.0
  %1312 = vmatpush1.msra.mxu0 0.0
  %1313 = vmatprep.subr.mxu0 0.0
  %1314 = vmatpush1.msra.mxu0 0.0
  %1315 = vmatprep.subr.mxu0 0.0
  %1316 = vmatpush1.msra.mxu0 0.0
  %1317 = vmatprep.subr.mxu0 0.0
  %1318 = vmatpush1.msra.mxu0 0.0
  %1319 = vmatprep.subr.mxu0 0.0
  %1320 = vmatpush1.msra.mxu0 0.0
  %1321 = vmatprep.mubr.f32.mxu0 0.0
  %1322 = vmatmul.mubr.f32.gmra.mrb[0].mxu0 %v1252
  %v1323 = vpop.f32.mrb[0].mxu0
  %v1324 = vadd.f32 %v1243, %v1323
  %v1325 = vpop.f32.mrb[0].mxu0
  %1326 = vmatprep.mubr.f32.mxu0 0.0
  %1327 = vmatmul.mubr.f32.gmra.mrb[0].mxu0 %v1255
  %v1328 = vpop.f32.mrb[0].mxu0
  %v1329 = vadd.f32 %v1248, %v1328
  %v1330 = vpop.f32.mrb[0].mxu0
  %1331 = vdwg.mxu0
  %s1332 = scalar_lea.vmem %s3, 64
  %v1333 = vld [vmem:[%s1332] sm:$0xff]
  %v1334 = vld [vmem:[%s1332 + $0x8] sm:$0xff]
  %v1335 = vld [vmem:[%s1332 + $0x10] sm:$0xff]
  %v1336 = vld [vmem:[%s1332 + $0x18] sm:$0xff]
  %s1337 = scalar_lea.vmem %s4, 64
  %v1338 = vld [vmem:[%s1337] sm:$0xff]
  %v1339 = vld [vmem:[%s1337 + $0x8] sm:$0xff]
  %v1340 = vld [vmem:[%s1337 + $0x10] sm:$0xff]
  %v1341 = vld [vmem:[%s1337 + $0x18] sm:$0xff]
  %1342 = vmatprep.subr.mxu0 0.0
  %1343 = vmatpush1.msra.mxu0 %v1333
  %1344 = vmatprep.subr.mxu0 0.0
  %1345 = vmatpush1.msra.mxu0 %v1334
  %1346 = vmatprep.subr.mxu0 0.0
  %1347 = vmatpush1.msra.mxu0 %v1335
  %1348 = vmatprep.subr.mxu0 0.0
  %1349 = vmatpush1.msra.mxu0 %v1336
  %1350 = vmatprep.subr.mxu0 0.0
  %1351 = vmatpush1.msra.mxu0 0.0
  %1352 = vmatprep.subr.mxu0 0.0
  %1353 = vmatpush1.msra.mxu0 0.0
  %1354 = vmatprep.subr.mxu0 0.0
  %1355 = vmatpush1.msra.mxu0 0.0
  %1356 = vmatprep.subr.mxu0 0.0
  %1357 = vmatpush1.msra.mxu0 0.0
  %1358 = vmatprep.subr.mxu0 0.0
  %1359 = vmatpush1.msra.mxu0 0.0
  %1360 = vmatprep.subr.mxu0 0.0
  %1361 = vmatpush1.msra.mxu0 0.0
  %1362 = vmatprep.subr.mxu0 0.0
  %1363 = vmatpush1.msra.mxu0 0.0
  %1364 = vmatprep.subr.mxu0 0.0
  %1365 = vmatpush1.msra.mxu0 0.0
  %1366 = vmatprep.subr.mxu0 0.0
  %1367 = vmatpush1.msra.mxu0 0.0
  %1368 = vmatprep.subr.mxu0 0.0
  %1369 = vmatpush1.msra.mxu0 0.0
  %1370 = vmatprep.subr.mxu0 0.0
  %1371 = vmatpush1.msra.mxu0 0.0
  %1372 = vmatprep.subr.mxu0 0.0
  %1373 = vmatpush1.msra.mxu0 0.0
  %1374 = vmatprep.subr.mxu0 0.0
  %1375 = vmatpush1.msra.mxu0 0.0
  %1376 = vmatprep.subr.mxu0 0.0
  %1377 = vmatpush1.msra.mxu0 0.0
  %1378 = vmatprep.subr.mxu0 0.0
  %1379 = vmatpush1.msra.mxu0 0.0
  %1380 = vmatprep.subr.mxu0 0.0
  %1381 = vmatpush1.msra.mxu0 0.0
  %1382 = vmatprep.subr.mxu0 0.0
  %1383 = vmatpush1.msra.mxu0 0.0
  %1384 = vmatprep.subr.mxu0 0.0
  %1385 = vmatpush1.msra.mxu0 0.0
  %1386 = vmatprep.subr.mxu0 0.0
  %1387 = vmatpush1.msra.mxu0 0.0
  %1388 = vmatprep.subr.mxu0 0.0
  %1389 = vmatpush1.msra.mxu0 0.0
  %1390 = vmatprep.subr.mxu0 0.0
  %1391 = vmatpush1.msra.mxu0 0.0
  %1392 = vmatprep.subr.mxu0 0.0
  %1393 = vmatpush1.msra.mxu0 0.0
  %1394 = vmatprep.subr.mxu0 0.0
  %1395 = vmatpush1.msra.mxu0 0.0
  %1396 = vmatprep.subr.mxu0 0.0
  %1397 = vmatpush1.msra.mxu0 0.0
  %1398 = vmatprep.subr.mxu0 0.0
  %1399 = vmatpush1.msra.mxu0 0.0
  %1400 = vmatprep.subr.mxu0 0.0
  %1401 = vmatpush1.msra.mxu0 0.0
  %1402 = vmatprep.subr.mxu0 0.0
  %1403 = vmatpush1.msra.mxu0 0.0
  %1404 = vmatprep.subr.mxu0 0.0
  %1405 = vmatpush1.msra.mxu0 0.0
  %1406 = vmatprep.mubr.f32.mxu0 0.0
  %1407 = vmatmul.mubr.f32.gmra.mrb[0].mxu0 %v45
  %v1408 = vpop.f32.mrb[0].mxu0
  %v1409 = vadd.f32 0.0, %v1408
  %v1410 = vpop.f32.mrb[0].mxu0
  %1411 = vmatprep.mubr.f32.mxu0 0.0
  %1412 = vmatmul.mubr.f32.gmra.mrb[0].mxu0 %v48
  %v1413 = vpop.f32.mrb[0].mxu0
  %v1414 = vadd.f32 0.0, %v1413
  %v1415 = vpop.f32.mrb[0].mxu0
  %1416 = vdwg.mxu0
  %1417 = vmatprep.subr.mxu0 0.0
  %1418 = vmatpush1.msra.mxu0 %v1338
  %1419 = vmatprep.subr.mxu0 0.0
  %1420 = vmatpush1.msra.mxu0 %v1339
  %1421 = vmatprep.subr.mxu0 0.0
  %1422 = vmatpush1.msra.mxu0 %v1340
  %1423 = vmatprep.subr.mxu0 0.0
  %1424 = vmatpush1.msra.mxu0 %v1341
  %1425 = vmatprep.subr.mxu0 0.0
  %1426 = vmatpush1.msra.mxu0 0.0
  %1427 = vmatprep.subr.mxu0 0.0
  %1428 = vmatpush1.msra.mxu0 0.0
  %1429 = vmatprep.subr.mxu0 0.0
  %1430 = vmatpush1.msra.mxu0 0.0
  %1431 = vmatprep.subr.mxu0 0.0
  %1432 = vmatpush1.msra.mxu0 0.0
  %1433 = vmatprep.subr.mxu0 0.0
  %1434 = vmatpush1.msra.mxu0 0.0
  %1435 = vmatprep.subr.mxu0 0.0
  %1436 = vmatpush1.msra.mxu0 0.0
  %1437 = vmatprep.subr.mxu0 0.0
  %1438 = vmatpush1.msra.mxu0 0.0
  %1439 = vmatprep.subr.mxu0 0.0
  %1440 = vmatpush1.msra.mxu0 0.0
  %1441 = vmatprep.subr.mxu0 0.0
  %1442 = vmatpush1.msra.mxu0 0.0
  %1443 = vmatprep.subr.mxu0 0.0
  %1444 = vmatpush1.msra.mxu0 0.0
  %1445 = vmatprep.subr.mxu0 0.0
  %1446 = vmatpush1.msra.mxu0 0.0
  %1447 = vmatprep.subr.mxu0 0.0
  %1448 = vmatpush1.msra.mxu0 0.0
  %1449 = vmatprep.subr.mxu0 0.0
  %1450 = vmatpush1.msra.mxu0 0.0
  %1451 = vmatprep.subr.mxu0 0.0
  %1452 = vmatpush1.msra.mxu0 0.0
  %1453 = vmatprep.subr.mxu0 0.0
  %1454 = vmatpush1.msra.mxu0 0.0
  %1455 = vmatprep.subr.mxu0 0.0
  %1456 = vmatpush1.msra.mxu0 0.0
  %1457 = vmatprep.subr.mxu0 0.0
  %1458 = vmatpush1.msra.mxu0 0.0
  %1459 = vmatprep.subr.mxu0 0.0
  %1460 = vmatpush1.msra.mxu0 0.0
  %1461 = vmatprep.subr.mxu0 0.0
  %1462 = vmatpush1.msra.mxu0 0.0
  %1463 = vmatprep.subr.mxu0 0.0
  %1464 = vmatpush1.msra.mxu0 0.0
  %1465 = vmatprep.subr.mxu0 0.0
  %1466 = vmatpush1.msra.mxu0 0.0
  %1467 = vmatprep.subr.mxu0 0.0
  %1468 = vmatpush1.msra.mxu0 0.0
  %1469 = vmatprep.subr.mxu0 0.0
  %1470 = vmatpush1.msra.mxu0 0.0
  %1471 = vmatprep.subr.mxu0 0.0
  %1472 = vmatpush1.msra.mxu0 0.0
  %1473 = vmatprep.subr.mxu0 0.0
  %1474 = vmatpush1.msra.mxu0 0.0
  %1475 = vmatprep.subr.mxu0 0.0
  %1476 = vmatpush1.msra.mxu0 0.0
  %1477 = vmatprep.subr.mxu0 0.0
  %1478 = vmatpush1.msra.mxu0 0.0
  %1479 = vmatprep.subr.mxu0 0.0
  %1480 = vmatpush1.msra.mxu0 0.0
  %1481 = vmatprep.mubr.f32.mxu0 0.0
  %1482 = vmatmul.mubr.f32.gmra.mrb[0].mxu0 %v126
  %v1483 = vpop.f32.mrb[0].mxu0
  %v1484 = vadd.f32 0.0, %v1483
  %v1485 = vpop.f32.mrb[0].mxu0
  %1486 = vmatprep.mubr.f32.mxu0 0.0
  %1487 = vmatmul.mubr.f32.gmra.mrb[0].mxu0 %v129
  %v1488 = vpop.f32.mrb[0].mxu0
  %v1489 = vadd.f32 0.0, %v1488
  %v1490 = vpop.f32.mrb[0].mxu0
  %1491 = vdwg.mxu0
  %1492 = vmatprep.subr.mxu0 0.0
  %1493 = vmatpush1.msra.mxu0 %v1333
  %1494 = vmatprep.subr.mxu0 0.0
  %1495 = vmatpush1.msra.mxu0 %v1334
  %1496 = vmatprep.subr.mxu0 0.0
  %1497 = vmatpush1.msra.mxu0 %v1335
  %1498 = vmatprep.subr.mxu0 0.0
  %1499 = vmatpush1.msra.mxu0 %v1336
  %1500 = vmatprep.subr.mxu0 0.0
  %1501 = vmatpush1.msra.mxu0 0.0
  %1502 = vmatprep.subr.mxu0 0.0
  %1503 = vmatpush1.msra.mxu0 0.0
  %1504 = vmatprep.subr.mxu0 0.0
  %1505 = vmatpush1.msra.mxu0 0.0
  %1506 = vmatprep.subr.mxu0 0.0
  %1507 = vmatpush1.msra.mxu0 0.0
  %1508 = vmatprep.subr.mxu0 0.0
  %1509 = vmatpush1.msra.mxu0 0.0
  %1510 = vmatprep.subr.mxu0 0.0
  %1511 = vmatpush1.msra.mxu0 0.0
  %1512 = vmatprep.subr.mxu0 0.0
  %1513 = vmatpush1.msra.mxu0 0.0
  %1514 = vmatprep.subr.mxu0 0.0
  %1515 = vmatpush1.msra.mxu0 0.0
  %1516 = vmatprep.subr.mxu0 0.0
  %1517 = vmatpush1.msra.mxu0 0.0
  %1518 = vmatprep.subr.mxu0 0.0
  %1519 = vmatpush1.msra.mxu0 0.0
  %1520 = vmatprep.subr.mxu0 0.0
  %1521 = vmatpush1.msra.mxu0 0.0
  %1522 = vmatprep.subr.mxu0 0.0
  %1523 = vmatpush1.msra.mxu0 0.0
  %1524 = vmatprep.subr.mxu0 0.0
  %1525 = vmatpush1.msra.mxu0 0.0
  %1526 = vmatprep.subr.mxu0 0.0
  %1527 = vmatpush1.msra.mxu0 0.0
  %1528 = vmatprep.subr.mxu0 0.0
  %1529 = vmatpush1.msra.mxu0 0.0
  %1530 = vmatprep.subr.mxu0 0.0
  %1531 = vmatpush1.msra.mxu0 0.0
  %1532 = vmatprep.subr.mxu0 0.0
  %1533 = vmatpush1.msra.mxu0 0.0
  %1534 = vmatprep.subr.mxu0 0.0
  %1535 = vmatpush1.msra.mxu0 0.0
  %1536 = vmatprep.subr.mxu0 0.0
  %1537 = vmatpush1.msra.mxu0 0.0
  %1538 = vmatprep.subr.mxu0 0.0
  %1539 = vmatpush1.msra.mxu0 0.0
  %1540 = vmatprep.subr.mxu0 0.0
  %1541 = vmatpush1.msra.mxu0 0.0
  %1542 = vmatprep.subr.mxu0 0.0
  %1543 = vmatpush1.msra.mxu0 0.0
  %1544 = vmatprep.subr.mxu0 0.0
  %1545 = vmatpush1.msra.mxu0 0.0
  %1546 = vmatprep.subr.mxu0 0.0
  %1547 = vmatpush1.msra.mxu0 0.0
  %1548 = vmatprep.subr.mxu0 0.0
  %1549 = vmatpush1.msra.mxu0 0.0
  %1550 = vmatprep.subr.mxu0 0.0
  %1551 = vmatpush1.msra.mxu0 0.0
  %1552 = vmatprep.subr.mxu0 0.0
  %1553 = vmatpush1.msra.mxu0 0.0
  %1554 = vmatprep.subr.mxu0 0.0
  %1555 = vmatpush1.msra.mxu0 0.0
  %1556 = vmatprep.mubr.f32.mxu0 0.0
  %1557 = vmatmul.mubr.f32.gmra.mrb[0].mxu0 %v126
  %v1558 = vpop.f32.mrb[0].mxu0
  %v1559 = vadd.f32 0.0, %v1558
  %v1560 = vpop.f32.mrb[0].mxu0
  %1561 = vmatprep.mubr.f32.mxu0 0.0
  %1562 = vmatmul.mubr.f32.gmra.mrb[0].mxu0 %v129
  %v1563 = vpop.f32.mrb[0].mxu0
  %v1564 = vadd.f32 0.0, %v1563
  %v1565 = vpop.f32.mrb[0].mxu0
  %1566 = vdwg.mxu0
  %v1568 = vsel %vm281, %v1409, 0
  %v1571 = vsel %vm281, %v1484, 0
  %1573 = vmatprep.subr.mxu0 0.0
  %1574 = vmatpush1.xpose.msra.mxu0 %v1571
  %1575 = vmatprep.subr.mxu0 0.0
  %1576 = vmatpush1.xpose.msra.mxu0 0.0
  %1577 = vmatprep.subr.mxu0 0.0
  %1578 = vmatpush1.xpose.msra.mxu0 0.0
  %1579 = vmatprep.subr.mxu0 0.0
  %1580 = vmatpush1.xpose.msra.mxu0 0.0
  %1581 = vmatprep.subr.mxu0 0.0
  %1582 = vmatpush1.xpose.msra.mxu0 0.0
  %1583 = vmatprep.subr.mxu0 0.0
  %1584 = vmatpush1.xpose.msra.mxu0 0.0
  %1585 = vmatprep.subr.mxu0 0.0
  %1586 = vmatpush1.xpose.msra.mxu0 0.0
  %1587 = vmatprep.subr.mxu0 0.0
  %1588 = vmatpush1.xpose.msra.mxu0 0.0
  %1589 = vmatprep.subr.mxu0 0.0
  %1590 = vmatpush1.xpose.msra.mxu0 0.0
  %1591 = vmatprep.subr.mxu0 0.0
  %1592 = vmatpush1.xpose.msra.mxu0 0.0
  %1593 = vmatprep.subr.mxu0 0.0
  %1594 = vmatpush1.xpose.msra.mxu0 0.0
  %1595 = vmatprep.subr.mxu0 0.0
  %1596 = vmatpush1.xpose.msra.mxu0 0.0
  %1597 = vmatprep.subr.mxu0 0.0
  %1598 = vmatpush1.xpose.msra.mxu0 0.0
  %1599 = vmatprep.subr.mxu0 0.0
  %1600 = vmatpush1.xpose.msra.mxu0 0.0
  %1601 = vmatprep.subr.mxu0 0.0
  %1602 = vmatpush1.xpose.msra.mxu0 0.0
  %1603 = vmatprep.subr.mxu0 0.0
  %1604 = vmatpush1.xpose.msra.mxu0 0.0
  %1605 = vmatprep.subr.mxu0 0.0
  %1606 = vmatpush1.xpose.msra.mxu0 0.0
  %1607 = vmatprep.subr.mxu0 0.0
  %1608 = vmatpush1.xpose.msra.mxu0 0.0
  %1609 = vmatprep.subr.mxu0 0.0
  %1610 = vmatpush1.xpose.msra.mxu0 0.0
  %1611 = vmatprep.subr.mxu0 0.0
  %1612 = vmatpush1.xpose.msra.mxu0 0.0
  %1613 = vmatprep.subr.mxu0 0.0
  %1614 = vmatpush1.xpose.msra.mxu0 0.0
  %1615 = vmatprep.subr.mxu0 0.0
  %1616 = vmatpush1.xpose.msra.mxu0 0.0
  %1617 = vmatprep.subr.mxu0 0.0
  %1618 = vmatpush1.xpose.msra.mxu0 0.0
  %1619 = vmatprep.subr.mxu0 0.0
  %1620 = vmatpush1.xpose.msra.mxu0 0.0
  %1621 = vmatprep.subr.mxu0 0.0
  %1622 = vmatpush1.xpose.msra.mxu0 0.0
  %1623 = vmatprep.subr.mxu0 0.0
  %1624 = vmatpush1.xpose.msra.mxu0 0.0
  %1625 = vmatprep.subr.mxu0 0.0
  %1626 = vmatpush1.xpose.msra.mxu0 0.0
  %1627 = vmatprep.subr.mxu0 0.0
  %1628 = vmatpush1.xpose.msra.mxu0 0.0
  %1629 = vmatprep.subr.mxu0 0.0
  %1630 = vmatpush1.xpose.msra.mxu0 0.0
  %1631 = vmatprep.subr.mxu0 0.0
  %1632 = vmatpush1.xpose.msra.mxu0 0.0
  %1633 = vmatprep.subr.mxu0 0.0
  %1634 = vmatpush1.xpose.msra.mxu0 0.0
  %1635 = vmatprep.subr.mxu0 0.0
  %1636 = vmatpush1.xpose.msra.mxu0 0.0
  %1637 = vmatprep.mubr.f32.mxu0 0.0
  %1638 = vmatmul.mubr.f32.gmra.mrb[0].mxu0 %v1568
  %v1639 = vpop.f32.mrb[0].mxu0
  %v1640 = vadd.f32 0.0, %v1639
  %v1641 = vpop.f32.mrb[0].mxu0
  %1642 = vdwg.mxu0
  %v1644 = vsel %vm281, %v1414, 0
  %v1647 = vsel %vm281, %v1489, 0
  %1649 = vmatprep.subr.mxu0 0.0
  %1650 = vmatpush1.xpose.msra.mxu0 %v1647
  %1651 = vmatprep.subr.mxu0 0.0
  %1652 = vmatpush1.xpose.msra.mxu0 0.0
  %1653 = vmatprep.subr.mxu0 0.0
  %1654 = vmatpush1.xpose.msra.mxu0 0.0
  %1655 = vmatprep.subr.mxu0 0.0
  %1656 = vmatpush1.xpose.msra.mxu0 0.0
  %1657 = vmatprep.subr.mxu0 0.0
  %1658 = vmatpush1.xpose.msra.mxu0 0.0
  %1659 = vmatprep.subr.mxu0 0.0
  %1660 = vmatpush1.xpose.msra.mxu0 0.0
  %1661 = vmatprep.subr.mxu0 0.0
  %1662 = vmatpush1.xpose.msra.mxu0 0.0
  %1663 = vmatprep.subr.mxu0 0.0
  %1664 = vmatpush1.xpose.msra.mxu0 0.0
  %1665 = vmatprep.subr.mxu0 0.0
  %1666 = vmatpush1.xpose.msra.mxu0 0.0
  %1667 = vmatprep.subr.mxu0 0.0
  %1668 = vmatpush1.xpose.msra.mxu0 0.0
  %1669 = vmatprep.subr.mxu0 0.0
  %1670 = vmatpush1.xpose.msra.mxu0 0.0
  %1671 = vmatprep.subr.mxu0 0.0
  %1672 = vmatpush1.xpose.msra.mxu0 0.0
  %1673 = vmatprep.subr.mxu0 0.0
  %1674 = vmatpush1.xpose.msra.mxu0 0.0
  %1675 = vmatprep.subr.mxu0 0.0
  %1676 = vmatpush1.xpose.msra.mxu0 0.0
  %1677 = vmatprep.subr.mxu0 0.0
  %1678 = vmatpush1.xpose.msra.mxu0 0.0
  %1679 = vmatprep.subr.mxu0 0.0
  %1680 = vmatpush1.xpose.msra.mxu0 0.0
  %1681 = vmatprep.subr.mxu0 0.0
  %1682 = vmatpush1.xpose.msra.mxu0 0.0
  %1683 = vmatprep.subr.mxu0 0.0
  %1684 = vmatpush1.xpose.msra.mxu0 0.0
  %1685 = vmatprep.subr.mxu0 0.0
  %1686 = vmatpush1.xpose.msra.mxu0 0.0
  %1687 = vmatprep.subr.mxu0 0.0
  %1688 = vmatpush1.xpose.msra.mxu0 0.0
  %1689 = vmatprep.subr.mxu0 0.0
  %1690 = vmatpush1.xpose.msra.mxu0 0.0
  %1691 = vmatprep.subr.mxu0 0.0
  %1692 = vmatpush1.xpose.msra.mxu0 0.0
  %1693 = vmatprep.subr.mxu0 0.0
  %1694 = vmatpush1.xpose.msra.mxu0 0.0
  %1695 = vmatprep.subr.mxu0 0.0
  %1696 = vmatpush1.xpose.msra.mxu0 0.0
  %1697 = vmatprep.subr.mxu0 0.0
  %1698 = vmatpush1.xpose.msra.mxu0 0.0
  %1699 = vmatprep.subr.mxu0 0.0
  %1700 = vmatpush1.xpose.msra.mxu0 0.0
  %1701 = vmatprep.subr.mxu0 0.0
  %1702 = vmatpush1.xpose.msra.mxu0 0.0
  %1703 = vmatprep.subr.mxu0 0.0
  %1704 = vmatpush1.xpose.msra.mxu0 0.0
  %1705 = vmatprep.subr.mxu0 0.0
  %1706 = vmatpush1.xpose.msra.mxu0 0.0
  %1707 = vmatprep.subr.mxu0 0.0
  %1708 = vmatpush1.xpose.msra.mxu0 0.0
  %1709 = vmatprep.subr.mxu0 0.0
  %1710 = vmatpush1.xpose.msra.mxu0 0.0
  %1711 = vmatprep.subr.mxu0 0.0
  %1712 = vmatpush1.xpose.msra.mxu0 0.0
  %1713 = vmatprep.mubr.f32.mxu0 0.0
  %1714 = vmatmul.mubr.f32.gmra.mrb[0].mxu0 %v1644
  %v1715 = vpop.f32.mrb[0].mxu0
  %v1716 = vadd.f32 0.0, %v1715
  %v1717 = vpop.f32.mrb[0].mxu0
  %1718 = vdwg.mxu0
  %v1719 = vmul.f32 %v1640, 0.35355338
  %v1720 = vmul.f32 %v1716, 0.35355338
  %v1721 = vsel %vm436, -1e+30, %v1719
  %v1722 = vsel %vm437, -1e+30, %v1720
  %v1723 = vsel %vm281, %v1721, -inf
  %1724 = vmax.xlane.f32.xlu0 %v1723
  %v1725 = vpop.xlane.xlu0 %1724
  %v1726 = vsel %vm281, %v1722, -inf
  %1727 = vmax.xlane.f32.xlu0 %v1726
  %v1728 = vpop.xlane.xlu0 %1727
  %v1729 = vsub.f32 %v1721, %v1725
  %v1730 = vsub.f32 %v1722, %v1728
  %v1731 = vmul.f32 %v1729, 1.442695
  %v1732 = vpow.pop %v1731
  %v1733 = vmul.f32 %v1730, 1.442695
  %v1734 = vpow.pop %v1733
  %v1735 = vsel %vm281, %v1732, 0.0
  %1736 = vadd.xlane.f32.xlu0 %v1735
  %v1737 = vpop.xlane.xlu0 %1736
  %v1738 = vsel %vm281, %v1734, 0.0
  %1739 = vadd.xlane.f32.xlu0 %v1738
  %v1740 = vpop.xlane.xlu0 %1739
  %v1741 = vrcp.pop %v1737
  %v1742 = vrcp.pop %v1740
  %v1743 = vmul.f32 %v1732, %v1741
  %v1744 = vmul.f32 %v1734, %v1742
  %v1746 = vsel %vm281, %v1743, 0
  %1748 = vmatprep.subr.mxu0 0.0
  %1749 = vmatpush1.msra.mxu0 %v1559
  %1750 = vmatprep.subr.mxu0 0.0
  %1751 = vmatpush1.msra.mxu0 0.0
  %1752 = vmatprep.subr.mxu0 0.0
  %1753 = vmatpush1.msra.mxu0 0.0
  %1754 = vmatprep.subr.mxu0 0.0
  %1755 = vmatpush1.msra.mxu0 0.0
  %1756 = vmatprep.subr.mxu0 0.0
  %1757 = vmatpush1.msra.mxu0 0.0
  %1758 = vmatprep.subr.mxu0 0.0
  %1759 = vmatpush1.msra.mxu0 0.0
  %1760 = vmatprep.subr.mxu0 0.0
  %1761 = vmatpush1.msra.mxu0 0.0
  %1762 = vmatprep.subr.mxu0 0.0
  %1763 = vmatpush1.msra.mxu0 0.0
  %1764 = vmatprep.subr.mxu0 0.0
  %1765 = vmatpush1.msra.mxu0 0.0
  %1766 = vmatprep.subr.mxu0 0.0
  %1767 = vmatpush1.msra.mxu0 0.0
  %1768 = vmatprep.subr.mxu0 0.0
  %1769 = vmatpush1.msra.mxu0 0.0
  %1770 = vmatprep.subr.mxu0 0.0
  %1771 = vmatpush1.msra.mxu0 0.0
  %1772 = vmatprep.subr.mxu0 0.0
  %1773 = vmatpush1.msra.mxu0 0.0
  %1774 = vmatprep.subr.mxu0 0.0
  %1775 = vmatpush1.msra.mxu0 0.0
  %1776 = vmatprep.subr.mxu0 0.0
  %1777 = vmatpush1.msra.mxu0 0.0
  %1778 = vmatprep.subr.mxu0 0.0
  %1779 = vmatpush1.msra.mxu0 0.0
  %1780 = vmatprep.subr.mxu0 0.0
  %1781 = vmatpush1.msra.mxu0 0.0
  %1782 = vmatprep.subr.mxu0 0.0
  %1783 = vmatpush1.msra.mxu0 0.0
  %1784 = vmatprep.subr.mxu0 0.0
  %1785 = vmatpush1.msra.mxu0 0.0
  %1786 = vmatprep.subr.mxu0 0.0
  %1787 = vmatpush1.msra.mxu0 0.0
  %1788 = vmatprep.subr.mxu0 0.0
  %1789 = vmatpush1.msra.mxu0 0.0
  %1790 = vmatprep.subr.mxu0 0.0
  %1791 = vmatpush1.msra.mxu0 0.0
  %1792 = vmatprep.subr.mxu0 0.0
  %1793 = vmatpush1.msra.mxu0 0.0
  %1794 = vmatprep.subr.mxu0 0.0
  %1795 = vmatpush1.msra.mxu0 0.0
  %1796 = vmatprep.subr.mxu0 0.0
  %1797 = vmatpush1.msra.mxu0 0.0
  %1798 = vmatprep.subr.mxu0 0.0
  %1799 = vmatpush1.msra.mxu0 0.0
  %1800 = vmatprep.subr.mxu0 0.0
  %1801 = vmatpush1.msra.mxu0 0.0
  %1802 = vmatprep.subr.mxu0 0.0
  %1803 = vmatpush1.msra.mxu0 0.0
  %1804 = vmatprep.subr.mxu0 0.0
  %1805 = vmatpush1.msra.mxu0 0.0
  %1806 = vmatprep.subr.mxu0 0.0
  %1807 = vmatpush1.msra.mxu0 0.0
  %1808 = vmatprep.subr.mxu0 0.0
  %1809 = vmatpush1.msra.mxu0 0.0
  %1810 = vmatprep.subr.mxu0 0.0
  %1811 = vmatpush1.msra.mxu0 0.0
  %1812 = vmatprep.mubr.f32.mxu0 0.0
  %1813 = vmatmul.mubr.f32.gmra.mrb[0].mxu0 %v1746
  %v1814 = vpop.f32.mrb[0].mxu0
  %v1815 = vadd.f32 0.0, %v1814
  %v1816 = vpop.f32.mrb[0].mxu0
  %1817 = vdwg.mxu0
  %v1819 = vsel %vm281, %v1744, 0
  %1821 = vmatprep.subr.mxu0 0.0
  %1822 = vmatpush1.msra.mxu0 %v1564
  %1823 = vmatprep.subr.mxu0 0.0
  %1824 = vmatpush1.msra.mxu0 0.0
  %1825 = vmatprep.subr.mxu0 0.0
  %1826 = vmatpush1.msra.mxu0 0.0
  %1827 = vmatprep.subr.mxu0 0.0
  %1828 = vmatpush1.msra.mxu0 0.0
  %1829 = vmatprep.subr.mxu0 0.0
  %1830 = vmatpush1.msra.mxu0 0.0
  %1831 = vmatprep.subr.mxu0 0.0
  %1832 = vmatpush1.msra.mxu0 0.0
  %1833 = vmatprep.subr.mxu0 0.0
  %1834 = vmatpush1.msra.mxu0 0.0
  %1835 = vmatprep.subr.mxu0 0.0
  %1836 = vmatpush1.msra.mxu0 0.0
  %1837 = vmatprep.subr.mxu0 0.0
  %1838 = vmatpush1.msra.mxu0 0.0
  %1839 = vmatprep.subr.mxu0 0.0
  %1840 = vmatpush1.msra.mxu0 0.0
  %1841 = vmatprep.subr.mxu0 0.0
  %1842 = vmatpush1.msra.mxu0 0.0
  %1843 = vmatprep.subr.mxu0 0.0
  %1844 = vmatpush1.msra.mxu0 0.0
  %1845 = vmatprep.subr.mxu0 0.0
  %1846 = vmatpush1.msra.mxu0 0.0
  %1847 = vmatprep.subr.mxu0 0.0
  %1848 = vmatpush1.msra.mxu0 0.0
  %1849 = vmatprep.subr.mxu0 0.0
  %1850 = vmatpush1.msra.mxu0 0.0
  %1851 = vmatprep.subr.mxu0 0.0
  %1852 = vmatpush1.msra.mxu0 0.0
  %1853 = vmatprep.subr.mxu0 0.0
  %1854 = vmatpush1.msra.mxu0 0.0
  %1855 = vmatprep.subr.mxu0 0.0
  %1856 = vmatpush1.msra.mxu0 0.0
  %1857 = vmatprep.subr.mxu0 0.0
  %1858 = vmatpush1.msra.mxu0 0.0
  %1859 = vmatprep.subr.mxu0 0.0
  %1860 = vmatpush1.msra.mxu0 0.0
  %1861 = vmatprep.subr.mxu0 0.0
  %1862 = vmatpush1.msra.mxu0 0.0
  %1863 = vmatprep.subr.mxu0 0.0
  %1864 = vmatpush1.msra.mxu0 0.0
  %1865 = vmatprep.subr.mxu0 0.0
  %1866 = vmatpush1.msra.mxu0 0.0
  %1867 = vmatprep.subr.mxu0 0.0
  %1868 = vmatpush1.msra.mxu0 0.0
  %1869 = vmatprep.subr.mxu0 0.0
  %1870 = vmatpush1.msra.mxu0 0.0
  %1871 = vmatprep.subr.mxu0 0.0
  %1872 = vmatpush1.msra.mxu0 0.0
  %1873 = vmatprep.subr.mxu0 0.0
  %1874 = vmatpush1.msra.mxu0 0.0
  %1875 = vmatprep.subr.mxu0 0.0
  %1876 = vmatpush1.msra.mxu0 0.0
  %1877 = vmatprep.subr.mxu0 0.0
  %1878 = vmatpush1.msra.mxu0 0.0
  %1879 = vmatprep.subr.mxu0 0.0
  %1880 = vmatpush1.msra.mxu0 0.0
  %1881 = vmatprep.subr.mxu0 0.0
  %1882 = vmatpush1.msra.mxu0 0.0
  %1883 = vmatprep.subr.mxu0 0.0
  %1884 = vmatpush1.msra.mxu0 0.0
  %1885 = vmatprep.mubr.f32.mxu0 0.0
  %1886 = vmatmul.mubr.f32.gmra.mrb[0].mxu0 %v1819
  %v1887 = vpop.f32.mrb[0].mxu0
  %v1888 = vadd.f32 0.0, %v1887
  %v1889 = vpop.f32.mrb[0].mxu0
  %1890 = vdwg.mxu0
  %s1891 = scalar_lea.vmem %s5, 16
  %v1892 = vld [vmem:[%s1891] sm:$0xff]
  %v1894 = vsel %vm281, %v1815, 0
  %v1897 = vsel %vm281, %v1888, 0
  %1899 = vmatprep.subr.mxu0 0.0
  %1900 = vmatpush1.msra.mxu0 %v1892
  %1901 = vmatprep.subr.mxu0 0.0
  %1902 = vmatpush1.msra.mxu0 0.0
  %1903 = vmatprep.subr.mxu0 0.0
  %1904 = vmatpush1.msra.mxu0 0.0
  %1905 = vmatprep.subr.mxu0 0.0
  %1906 = vmatpush1.msra.mxu0 0.0
  %1907 = vmatprep.subr.mxu0 0.0
  %1908 = vmatpush1.msra.mxu0 0.0
  %1909 = vmatprep.subr.mxu0 0.0
  %1910 = vmatpush1.msra.mxu0 0.0
  %1911 = vmatprep.subr.mxu0 0.0
  %1912 = vmatpush1.msra.mxu0 0.0
  %1913 = vmatprep.subr.mxu0 0.0
  %1914 = vmatpush1.msra.mxu0 0.0
  %1915 = vmatprep.subr.mxu0 0.0
  %1916 = vmatpush1.msra.mxu0 0.0
  %1917 = vmatprep.subr.mxu0 0.0
  %1918 = vmatpush1.msra.mxu0 0.0
  %1919 = vmatprep.subr.mxu0 0.0
  %1920 = vmatpush1.msra.mxu0 0.0
  %1921 = vmatprep.subr.mxu0 0.0
  %1922 = vmatpush1.msra.mxu0 0.0
  %1923 = vmatprep.subr.mxu0 0.0
  %1924 = vmatpush1.msra.mxu0 0.0
  %1925 = vmatprep.subr.mxu0 0.0
  %1926 = vmatpush1.msra.mxu0 0.0
  %1927 = vmatprep.subr.mxu0 0.0
  %1928 = vmatpush1.msra.mxu0 0.0
  %1929 = vmatprep.subr.mxu0 0.0
  %1930 = vmatpush1.msra.mxu0 0.0
  %1931 = vmatprep.subr.mxu0 0.0
  %1932 = vmatpush1.msra.mxu0 0.0
  %1933 = vmatprep.subr.mxu0 0.0
  %1934 = vmatpush1.msra.mxu0 0.0
  %1935 = vmatprep.subr.mxu0 0.0
  %1936 = vmatpush1.msra.mxu0 0.0
  %1937 = vmatprep.subr.mxu0 0.0
  %1938 = vmatpush1.msra.mxu0 0.0
  %1939 = vmatprep.subr.mxu0 0.0
  %1940 = vmatpush1.msra.mxu0 0.0
  %1941 = vmatprep.subr.mxu0 0.0
  %1942 = vmatpush1.msra.mxu0 0.0
  %1943 = vmatprep.subr.mxu0 0.0
  %1944 = vmatpush1.msra.mxu0 0.0
  %1945 = vmatprep.subr.mxu0 0.0
  %1946 = vmatpush1.msra.mxu0 0.0
  %1947 = vmatprep.subr.mxu0 0.0
  %1948 = vmatpush1.msra.mxu0 0.0
  %1949 = vmatprep.subr.mxu0 0.0
  %1950 = vmatpush1.msra.mxu0 0.0
  %1951 = vmatprep.subr.mxu0 0.0
  %1952 = vmatpush1.msra.mxu0 0.0
  %1953 = vmatprep.subr.mxu0 0.0
  %1954 = vmatpush1.msra.mxu0 0.0
  %1955 = vmatprep.subr.mxu0 0.0
  %1956 = vmatpush1.msra.mxu0 0.0
  %1957 = vmatprep.subr.mxu0 0.0
  %1958 = vmatpush1.msra.mxu0 0.0
  %1959 = vmatprep.subr.mxu0 0.0
  %1960 = vmatpush1.msra.mxu0 0.0
  %1961 = vmatprep.subr.mxu0 0.0
  %1962 = vmatpush1.msra.mxu0 0.0
  %1963 = vmatprep.mubr.f32.mxu0 0.0
  %1964 = vmatmul.mubr.f32.gmra.mrb[0].mxu0 %v1894
  %v1965 = vpop.f32.mrb[0].mxu0
  %v1966 = vadd.f32 0.0, %v1965
  %v1967 = vpop.f32.mrb[0].mxu0
  %1968 = vmatprep.mubr.f32.mxu0 0.0
  %1969 = vmatmul.mubr.f32.gmra.mrb[0].mxu0 %v1897
  %v1970 = vpop.f32.mrb[0].mxu0
  %v1971 = vadd.f32 0.0, %v1970
  %v1972 = vpop.f32.mrb[0].mxu0
  %1973 = vdwg.mxu0
  %v1974 = vadd.f32 %v1324, %v1966
  %v1975 = vadd.f32 %v1329, %v1971
  %s1976 = scalar_lea.vmem %s3, 96
  %v1977 = vld [vmem:[%s1976] sm:$0xff]
  %v1978 = vld [vmem:[%s1976 + $0x8] sm:$0xff]
  %v1979 = vld [vmem:[%s1976 + $0x10] sm:$0xff]
  %v1980 = vld [vmem:[%s1976 + $0x18] sm:$0xff]
  %s1981 = scalar_lea.vmem %s4, 96
  %v1982 = vld [vmem:[%s1981] sm:$0xff]
  %v1983 = vld [vmem:[%s1981 + $0x8] sm:$0xff]
  %v1984 = vld [vmem:[%s1981 + $0x10] sm:$0xff]
  %v1985 = vld [vmem:[%s1981 + $0x18] sm:$0xff]
  %1986 = vmatprep.subr.mxu0 0.0
  %1987 = vmatpush1.msra.mxu0 %v1977
  %1988 = vmatprep.subr.mxu0 0.0
  %1989 = vmatpush1.msra.mxu0 %v1978
  %1990 = vmatprep.subr.mxu0 0.0
  %1991 = vmatpush1.msra.mxu0 %v1979
  %1992 = vmatprep.subr.mxu0 0.0
  %1993 = vmatpush1.msra.mxu0 %v1980
  %1994 = vmatprep.subr.mxu0 0.0
  %1995 = vmatpush1.msra.mxu0 0.0
  %1996 = vmatprep.subr.mxu0 0.0
  %1997 = vmatpush1.msra.mxu0 0.0
  %1998 = vmatprep.subr.mxu0 0.0
  %1999 = vmatpush1.msra.mxu0 0.0
  %2000 = vmatprep.subr.mxu0 0.0
  %2001 = vmatpush1.msra.mxu0 0.0
  %2002 = vmatprep.subr.mxu0 0.0
  %2003 = vmatpush1.msra.mxu0 0.0
  %2004 = vmatprep.subr.mxu0 0.0
  %2005 = vmatpush1.msra.mxu0 0.0
  %2006 = vmatprep.subr.mxu0 0.0
  %2007 = vmatpush1.msra.mxu0 0.0
  %2008 = vmatprep.subr.mxu0 0.0
  %2009 = vmatpush1.msra.mxu0 0.0
  %2010 = vmatprep.subr.mxu0 0.0
  %2011 = vmatpush1.msra.mxu0 0.0
  %2012 = vmatprep.subr.mxu0 0.0
  %2013 = vmatpush1.msra.mxu0 0.0
  %2014 = vmatprep.subr.mxu0 0.0
  %2015 = vmatpush1.msra.mxu0 0.0
  %2016 = vmatprep.subr.mxu0 0.0
  %2017 = vmatpush1.msra.mxu0 0.0
  %2018 = vmatprep.subr.mxu0 0.0
  %2019 = vmatpush1.msra.mxu0 0.0
  %2020 = vmatprep.subr.mxu0 0.0
  %2021 = vmatpush1.msra.mxu0 0.0
  %2022 = vmatprep.subr.mxu0 0.0
  %2023 = vmatpush1.msra.mxu0 0.0
  %2024 = vmatprep.subr.mxu0 0.0
  %2025 = vmatpush1.msra.mxu0 0.0
  %2026 = vmatprep.subr.mxu0 0.0
  %2027 = vmatpush1.msra.mxu0 0.0
  %2028 = vmatprep.subr.mxu0 0.0
  %2029 = vmatpush1.msra.mxu0 0.0
  %2030 = vmatprep.subr.mxu0 0.0
  %2031 = vmatpush1.msra.mxu0 0.0
  %2032 = vmatprep.subr.mxu0 0.0
  %2033 = vmatpush1.msra.mxu0 0.0
  %2034 = vmatprep.subr.mxu0 0.0
  %2035 = vmatpush1.msra.mxu0 0.0
  %2036 = vmatprep.subr.mxu0 0.0
  %2037 = vmatpush1.msra.mxu0 0.0
  %2038 = vmatprep.subr.mxu0 0.0
  %2039 = vmatpush1.msra.mxu0 0.0
  %2040 = vmatprep.subr.mxu0 0.0
  %2041 = vmatpush1.msra.mxu0 0.0
  %2042 = vmatprep.subr.mxu0 0.0
  %2043 = vmatpush1.msra.mxu0 0.0
  %2044 = vmatprep.subr.mxu0 0.0
  %2045 = vmatpush1.msra.mxu0 0.0
  %2046 = vmatprep.subr.mxu0 0.0
  %2047 = vmatpush1.msra.mxu0 0.0
  %2048 = vmatprep.subr.mxu0 0.0
  %2049 = vmatpush1.msra.mxu0 0.0
  %2050 = vmatprep.mubr.f32.mxu0 0.0
  %2051 = vmatmul.mubr.f32.gmra.mrb[0].mxu0 %v45
  %v2052 = vpop.f32.mrb[0].mxu0
  %v2053 = vadd.f32 0.0, %v2052
  %v2054 = vpop.f32.mrb[0].mxu0
  %2055 = vmatprep.mubr.f32.mxu0 0.0
  %2056 = vmatmul.mubr.f32.gmra.mrb[0].mxu0 %v48
  %v2057 = vpop.f32.mrb[0].mxu0
  %v2058 = vadd.f32 0.0, %v2057
  %v2059 = vpop.f32.mrb[0].mxu0
  %2060 = vdwg.mxu0
  %2061 = vmatprep.subr.mxu0 0.0
  %2062 = vmatpush1.msra.mxu0 %v1982
  %2063 = vmatprep.subr.mxu0 0.0
  %2064 = vmatpush1.msra.mxu0 %v1983
  %2065 = vmatprep.subr.mxu0 0.0
  %2066 = vmatpush1.msra.mxu0 %v1984
  %2067 = vmatprep.subr.mxu0 0.0
  %2068 = vmatpush1.msra.mxu0 %v1985
  %2069 = vmatprep.subr.mxu0 0.0
  %2070 = vmatpush1.msra.mxu0 0.0
  %2071 = vmatprep.subr.mxu0 0.0
  %2072 = vmatpush1.msra.mxu0 0.0
  %2073 = vmatprep.subr.mxu0 0.0
  %2074 = vmatpush1.msra.mxu0 0.0
  %2075 = vmatprep.subr.mxu0 0.0
  %2076 = vmatpush1.msra.mxu0 0.0
  %2077 = vmatprep.subr.mxu0 0.0
  %2078 = vmatpush1.msra.mxu0 0.0
  %2079 = vmatprep.subr.mxu0 0.0
  %2080 = vmatpush1.msra.mxu0 0.0
  %2081 = vmatprep.subr.mxu0 0.0
  %2082 = vmatpush1.msra.mxu0 0.0
  %2083 = vmatprep.subr.mxu0 0.0
  %2084 = vmatpush1.msra.mxu0 0.0
  %2085 = vmatprep.subr.mxu0 0.0
  %2086 = vmatpush1.msra.mxu0 0.0
  %2087 = vmatprep.subr.mxu0 0.0
  %2088 = vmatpush1.msra.mxu0 0.0
  %2089 = vmatprep.subr.mxu0 0.0
  %2090 = vmatpush1.msra.mxu0 0.0
  %2091 = vmatprep.subr.mxu0 0.0
  %2092 = vmatpush1.msra.mxu0 0.0
  %2093 = vmatprep.subr.mxu0 0.0
  %2094 = vmatpush1.msra.mxu0 0.0
  %2095 = vmatprep.subr.mxu0 0.0
  %2096 = vmatpush1.msra.mxu0 0.0
  %2097 = vmatprep.subr.mxu0 0.0
  %2098 = vmatpush1.msra.mxu0 0.0
  %2099 = vmatprep.subr.mxu0 0.0
  %2100 = vmatpush1.msra.mxu0 0.0
  %2101 = vmatprep.subr.mxu0 0.0
  %2102 = vmatpush1.msra.mxu0 0.0
  %2103 = vmatprep.subr.mxu0 0.0
  %2104 = vmatpush1.msra.mxu0 0.0
  %2105 = vmatprep.subr.mxu0 0.0
  %2106 = vmatpush1.msra.mxu0 0.0
  %2107 = vmatprep.subr.mxu0 0.0
  %2108 = vmatpush1.msra.mxu0 0.0
  %2109 = vmatprep.subr.mxu0 0.0
  %2110 = vmatpush1.msra.mxu0 0.0
  %2111 = vmatprep.subr.mxu0 0.0
  %2112 = vmatpush1.msra.mxu0 0.0
  %2113 = vmatprep.subr.mxu0 0.0
  %2114 = vmatpush1.msra.mxu0 0.0
  %2115 = vmatprep.subr.mxu0 0.0
  %2116 = vmatpush1.msra.mxu0 0.0
  %2117 = vmatprep.subr.mxu0 0.0
  %2118 = vmatpush1.msra.mxu0 0.0
  %2119 = vmatprep.subr.mxu0 0.0
  %2120 = vmatpush1.msra.mxu0 0.0
  %2121 = vmatprep.subr.mxu0 0.0
  %2122 = vmatpush1.msra.mxu0 0.0
  %2123 = vmatprep.subr.mxu0 0.0
  %2124 = vmatpush1.msra.mxu0 0.0
  %2125 = vmatprep.mubr.f32.mxu0 0.0
  %2126 = vmatmul.mubr.f32.gmra.mrb[0].mxu0 %v126
  %v2127 = vpop.f32.mrb[0].mxu0
  %v2128 = vadd.f32 0.0, %v2127
  %v2129 = vpop.f32.mrb[0].mxu0
  %2130 = vmatprep.mubr.f32.mxu0 0.0
  %2131 = vmatmul.mubr.f32.gmra.mrb[0].mxu0 %v129
  %v2132 = vpop.f32.mrb[0].mxu0
  %v2133 = vadd.f32 0.0, %v2132
  %v2134 = vpop.f32.mrb[0].mxu0
  %2135 = vdwg.mxu0
  %2136 = vmatprep.subr.mxu0 0.0
  %2137 = vmatpush1.msra.mxu0 %v1977
  %2138 = vmatprep.subr.mxu0 0.0
  %2139 = vmatpush1.msra.mxu0 %v1978
  %2140 = vmatprep.subr.mxu0 0.0
  %2141 = vmatpush1.msra.mxu0 %v1979
  %2142 = vmatprep.subr.mxu0 0.0
  %2143 = vmatpush1.msra.mxu0 %v1980
  %2144 = vmatprep.subr.mxu0 0.0
  %2145 = vmatpush1.msra.mxu0 0.0
  %2146 = vmatprep.subr.mxu0 0.0
  %2147 = vmatpush1.msra.mxu0 0.0
  %2148 = vmatprep.subr.mxu0 0.0
  %2149 = vmatpush1.msra.mxu0 0.0
  %2150 = vmatprep.subr.mxu0 0.0
  %2151 = vmatpush1.msra.mxu0 0.0
  %2152 = vmatprep.subr.mxu0 0.0
  %2153 = vmatpush1.msra.mxu0 0.0
  %2154 = vmatprep.subr.mxu0 0.0
  %2155 = vmatpush1.msra.mxu0 0.0
  %2156 = vmatprep.subr.mxu0 0.0
  %2157 = vmatpush1.msra.mxu0 0.0
  %2158 = vmatprep.subr.mxu0 0.0
  %2159 = vmatpush1.msra.mxu0 0.0
  %2160 = vmatprep.subr.mxu0 0.0
  %2161 = vmatpush1.msra.mxu0 0.0
  %2162 = vmatprep.subr.mxu0 0.0
  %2163 = vmatpush1.msra.mxu0 0.0
  %2164 = vmatprep.subr.mxu0 0.0
  %2165 = vmatpush1.msra.mxu0 0.0
  %2166 = vmatprep.subr.mxu0 0.0
  %2167 = vmatpush1.msra.mxu0 0.0
  %2168 = vmatprep.subr.mxu0 0.0
  %2169 = vmatpush1.msra.mxu0 0.0
  %2170 = vmatprep.subr.mxu0 0.0
  %2171 = vmatpush1.msra.mxu0 0.0
  %2172 = vmatprep.subr.mxu0 0.0
  %2173 = vmatpush1.msra.mxu0 0.0
  %2174 = vmatprep.subr.mxu0 0.0
  %2175 = vmatpush1.msra.mxu0 0.0
  %2176 = vmatprep.subr.mxu0 0.0
  %2177 = vmatpush1.msra.mxu0 0.0
  %2178 = vmatprep.subr.mxu0 0.0
  %2179 = vmatpush1.msra.mxu0 0.0
  %2180 = vmatprep.subr.mxu0 0.0
  %2181 = vmatpush1.msra.mxu0 0.0
  %2182 = vmatprep.subr.mxu0 0.0
  %2183 = vmatpush1.msra.mxu0 0.0
  %2184 = vmatprep.subr.mxu0 0.0
  %2185 = vmatpush1.msra.mxu0 0.0
  %2186 = vmatprep.subr.mxu0 0.0
  %2187 = vmatpush1.msra.mxu0 0.0
  %2188 = vmatprep.subr.mxu0 0.0
  %2189 = vmatpush1.msra.mxu0 0.0
  %2190 = vmatprep.subr.mxu0 0.0
  %2191 = vmatpush1.msra.mxu0 0.0
  %2192 = vmatprep.subr.mxu0 0.0
  %2193 = vmatpush1.msra.mxu0 0.0
  %2194 = vmatprep.subr.mxu0 0.0
  %2195 = vmatpush1.msra.mxu0 0.0
  %2196 = vmatprep.subr.mxu0 0.0
  %2197 = vmatpush1.msra.mxu0 0.0
  %2198 = vmatprep.subr.mxu0 0.0
  %2199 = vmatpush1.msra.mxu0 0.0
  %2200 = vmatprep.mubr.f32.mxu0 0.0
  %2201 = vmatmul.mubr.f32.gmra.mrb[0].mxu0 %v126
  %v2202 = vpop.f32.mrb[0].mxu0
  %v2203 = vadd.f32 0.0, %v2202
  %v2204 = vpop.f32.mrb[0].mxu0
  %2205 = vmatprep.mubr.f32.mxu0 0.0
  %2206 = vmatmul.mubr.f32.gmra.mrb[0].mxu0 %v129
  %v2207 = vpop.f32.mrb[0].mxu0
  %v2208 = vadd.f32 0.0, %v2207
  %v2209 = vpop.f32.mrb[0].mxu0
  %2210 = vdwg.mxu0
  %v2212 = vsel %vm281, %v2053, 0
  %v2215 = vsel %vm281, %v2128, 0
  %2217 = vmatprep.subr.mxu0 0.0
  %2218 = vmatpush1.xpose.msra.mxu0 %v2215
  %2219 = vmatprep.subr.mxu0 0.0
  %2220 = vmatpush1.xpose.msra.mxu0 0.0
  %2221 = vmatprep.subr.mxu0 0.0
  %2222 = vmatpush1.xpose.msra.mxu0 0.0
  %2223 = vmatprep.subr.mxu0 0.0
  %2224 = vmatpush1.xpose.msra.mxu0 0.0
  %2225 = vmatprep.subr.mxu0 0.0
  %2226 = vmatpush1.xpose.msra.mxu0 0.0
  %2227 = vmatprep.subr.mxu0 0.0
  %2228 = vmatpush1.xpose.msra.mxu0 0.0
  %2229 = vmatprep.subr.mxu0 0.0
  %2230 = vmatpush1.xpose.msra.mxu0 0.0
  %2231 = vmatprep.subr.mxu0 0.0
  %2232 = vmatpush1.xpose.msra.mxu0 0.0
  %2233 = vmatprep.subr.mxu0 0.0
  %2234 = vmatpush1.xpose.msra.mxu0 0.0
  %2235 = vmatprep.subr.mxu0 0.0
  %2236 = vmatpush1.xpose.msra.mxu0 0.0
  %2237 = vmatprep.subr.mxu0 0.0
  %2238 = vmatpush1.xpose.msra.mxu0 0.0
  %2239 = vmatprep.subr.mxu0 0.0
  %2240 = vmatpush1.xpose.msra.mxu0 0.0
  %2241 = vmatprep.subr.mxu0 0.0
  %2242 = vmatpush1.xpose.msra.mxu0 0.0
  %2243 = vmatprep.subr.mxu0 0.0
  %2244 = vmatpush1.xpose.msra.mxu0 0.0
  %2245 = vmatprep.subr.mxu0 0.0
  %2246 = vmatpush1.xpose.msra.mxu0 0.0
  %2247 = vmatprep.subr.mxu0 0.0
  %2248 = vmatpush1.xpose.msra.mxu0 0.0
  %2249 = vmatprep.subr.mxu0 0.0
  %2250 = vmatpush1.xpose.msra.mxu0 0.0
  %2251 = vmatprep.subr.mxu0 0.0
  %2252 = vmatpush1.xpose.msra.mxu0 0.0
  %2253 = vmatprep.subr.mxu0 0.0
  %2254 = vmatpush1.xpose.msra.mxu0 0.0
  %2255 = vmatprep.subr.mxu0 0.0
  %2256 = vmatpush1.xpose.msra.mxu0 0.0
  %2257 = vmatprep.subr.mxu0 0.0
  %2258 = vmatpush1.xpose.msra.mxu0 0.0
  %2259 = vmatprep.subr.mxu0 0.0
  %2260 = vmatpush1.xpose.msra.mxu0 0.0
  %2261 = vmatprep.subr.mxu0 0.0
  %2262 = vmatpush1.xpose.msra.mxu0 0.0
  %2263 = vmatprep.subr.mxu0 0.0
  %2264 = vmatpush1.xpose.msra.mxu0 0.0
  %2265 = vmatprep.subr.mxu0 0.0
  %2266 = vmatpush1.xpose.msra.mxu0 0.0
  %2267 = vmatprep.subr.mxu0 0.0
  %2268 = vmatpush1.xpose.msra.mxu0 0.0
  %2269 = vmatprep.subr.mxu0 0.0
  %2270 = vmatpush1.xpose.msra.mxu0 0.0
  %2271 = vmatprep.subr.mxu0 0.0
  %2272 = vmatpush1.xpose.msra.mxu0 0.0
  %2273 = vmatprep.subr.mxu0 0.0
  %2274 = vmatpush1.xpose.msra.mxu0 0.0
  %2275 = vmatprep.subr.mxu0 0.0
  %2276 = vmatpush1.xpose.msra.mxu0 0.0
  %2277 = vmatprep.subr.mxu0 0.0
  %2278 = vmatpush1.xpose.msra.mxu0 0.0
  %2279 = vmatprep.subr.mxu0 0.0
  %2280 = vmatpush1.xpose.msra.mxu0 0.0
  %2281 = vmatprep.mubr.f32.mxu0 0.0
  %2282 = vmatmul.mubr.f32.gmra.mrb[0].mxu0 %v2212
  %v2283 = vpop.f32.mrb[0].mxu0
  %v2284 = vadd.f32 0.0, %v2283
  %v2285 = vpop.f32.mrb[0].mxu0
  %2286 = vdwg.mxu0
  %v2288 = vsel %vm281, %v2058, 0
  %v2291 = vsel %vm281, %v2133, 0
  %2293 = vmatprep.subr.mxu0 0.0
  %2294 = vmatpush1.xpose.msra.mxu0 %v2291
  %2295 = vmatprep.subr.mxu0 0.0
  %2296 = vmatpush1.xpose.msra.mxu0 0.0
  %2297 = vmatprep.subr.mxu0 0.0
  %2298 = vmatpush1.xpose.msra.mxu0 0.0
  %2299 = vmatprep.subr.mxu0 0.0
  %2300 = vmatpush1.xpose.msra.mxu0 0.0
  %2301 = vmatprep.subr.mxu0 0.0
  %2302 = vmatpush1.xpose.msra.mxu0 0.0
  %2303 = vmatprep.subr.mxu0 0.0
  %2304 = vmatpush1.xpose.msra.mxu0 0.0
  %2305 = vmatprep.subr.mxu0 0.0
  %2306 = vmatpush1.xpose.msra.mxu0 0.0
  %2307 = vmatprep.subr.mxu0 0.0
  %2308 = vmatpush1.xpose.msra.mxu0 0.0
  %2309 = vmatprep.subr.mxu0 0.0
  %2310 = vmatpush1.xpose.msra.mxu0 0.0
  %2311 = vmatprep.subr.mxu0 0.0
  %2312 = vmatpush1.xpose.msra.mxu0 0.0
  %2313 = vmatprep.subr.mxu0 0.0
  %2314 = vmatpush1.xpose.msra.mxu0 0.0
  %2315 = vmatprep.subr.mxu0 0.0
  %2316 = vmatpush1.xpose.msra.mxu0 0.0
  %2317 = vmatprep.subr.mxu0 0.0
  %2318 = vmatpush1.xpose.msra.mxu0 0.0
  %2319 = vmatprep.subr.mxu0 0.0
  %2320 = vmatpush1.xpose.msra.mxu0 0.0
  %2321 = vmatprep.subr.mxu0 0.0
  %2322 = vmatpush1.xpose.msra.mxu0 0.0
  %2323 = vmatprep.subr.mxu0 0.0
  %2324 = vmatpush1.xpose.msra.mxu0 0.0
  %2325 = vmatprep.subr.mxu0 0.0
  %2326 = vmatpush1.xpose.msra.mxu0 0.0
  %2327 = vmatprep.subr.mxu0 0.0
  %2328 = vmatpush1.xpose.msra.mxu0 0.0
  %2329 = vmatprep.subr.mxu0 0.0
  %2330 = vmatpush1.xpose.msra.mxu0 0.0
  %2331 = vmatprep.subr.mxu0 0.0
  %2332 = vmatpush1.xpose.msra.mxu0 0.0
  %2333 = vmatprep.subr.mxu0 0.0
  %2334 = vmatpush1.xpose.msra.mxu0 0.0
  %2335 = vmatprep.subr.mxu0 0.0
  %2336 = vmatpush1.xpose.msra.mxu0 0.0
  %2337 = vmatprep.subr.mxu0 0.0
  %2338 = vmatpush1.xpose.msra.mxu0 0.0
  %2339 = vmatprep.subr.mxu0 0.0
  %2340 = vmatpush1.xpose.msra.mxu0 0.0
  %2341 = vmatprep.subr.mxu0 0.0
  %2342 = vmatpush1.xpose.msra.mxu0 0.0
  %2343 = vmatprep.subr.mxu0 0.0
  %2344 = vmatpush1.xpose.msra.mxu0 0.0
  %2345 = vmatprep.subr.mxu0 0.0
  %2346 = vmatpush1.xpose.msra.mxu0 0.0
  %2347 = vmatprep.subr.mxu0 0.0
  %2348 = vmatpush1.xpose.msra.mxu0 0.0
  %2349 = vmatprep.subr.mxu0 0.0
  %2350 = vmatpush1.xpose.msra.mxu0 0.0
  %2351 = vmatprep.subr.mxu0 0.0
  %2352 = vmatpush1.xpose.msra.mxu0 0.0
  %2353 = vmatprep.subr.mxu0 0.0
  %2354 = vmatpush1.xpose.msra.mxu0 0.0
  %2355 = vmatprep.subr.mxu0 0.0
  %2356 = vmatpush1.xpose.msra.mxu0 0.0
  %2357 = vmatprep.mubr.f32.mxu0 0.0
  %2358 = vmatmul.mubr.f32.gmra.mrb[0].mxu0 %v2288
  %v2359 = vpop.f32.mrb[0].mxu0
  %v2360 = vadd.f32 0.0, %v2359
  %v2361 = vpop.f32.mrb[0].mxu0
  %2362 = vdwg.mxu0
  %v2363 = vmul.f32 %v2284, 0.35355338
  %v2364 = vmul.f32 %v2360, 0.35355338
  %v2365 = vsel %vm436, -1e+30, %v2363
  %v2366 = vsel %vm437, -1e+30, %v2364
  %v2367 = vsel %vm281, %v2365, -inf
  %2368 = vmax.xlane.f32.xlu0 %v2367
  %v2369 = vpop.xlane.xlu0 %2368
  %v2370 = vsel %vm281, %v2366, -inf
  %2371 = vmax.xlane.f32.xlu0 %v2370
  %v2372 = vpop.xlane.xlu0 %2371
  %v2373 = vsub.f32 %v2365, %v2369
  %v2374 = vsub.f32 %v2366, %v2372
  %v2375 = vmul.f32 %v2373, 1.442695
  %v2376 = vpow.pop %v2375
  %v2377 = vmul.f32 %v2374, 1.442695
  %v2378 = vpow.pop %v2377
  %v2379 = vsel %vm281, %v2376, 0.0
  %2380 = vadd.xlane.f32.xlu0 %v2379
  %v2381 = vpop.xlane.xlu0 %2380
  %v2382 = vsel %vm281, %v2378, 0.0
  %2383 = vadd.xlane.f32.xlu0 %v2382
  %v2384 = vpop.xlane.xlu0 %2383
  %v2385 = vrcp.pop %v2381
  %v2386 = vrcp.pop %v2384
  %v2387 = vmul.f32 %v2376, %v2385
  %v2388 = vmul.f32 %v2378, %v2386
  %v2390 = vsel %vm281, %v2387, 0
  %2392 = vmatprep.subr.mxu0 0.0
  %2393 = vmatpush1.msra.mxu0 %v2203
  %2394 = vmatprep.subr.mxu0 0.0
  %2395 = vmatpush1.msra.mxu0 0.0
  %2396 = vmatprep.subr.mxu0 0.0
  %2397 = vmatpush1.msra.mxu0 0.0
  %2398 = vmatprep.subr.mxu0 0.0
  %2399 = vmatpush1.msra.mxu0 0.0
  %2400 = vmatprep.subr.mxu0 0.0
  %2401 = vmatpush1.msra.mxu0 0.0
  %2402 = vmatprep.subr.mxu0 0.0
  %2403 = vmatpush1.msra.mxu0 0.0
  %2404 = vmatprep.subr.mxu0 0.0
  %2405 = vmatpush1.msra.mxu0 0.0
  %2406 = vmatprep.subr.mxu0 0.0
  %2407 = vmatpush1.msra.mxu0 0.0
  %2408 = vmatprep.subr.mxu0 0.0
  %2409 = vmatpush1.msra.mxu0 0.0
  %2410 = vmatprep.subr.mxu0 0.0
  %2411 = vmatpush1.msra.mxu0 0.0
  %2412 = vmatprep.subr.mxu0 0.0
  %2413 = vmatpush1.msra.mxu0 0.0
  %2414 = vmatprep.subr.mxu0 0.0
  %2415 = vmatpush1.msra.mxu0 0.0
  %2416 = vmatprep.subr.mxu0 0.0
  %2417 = vmatpush1.msra.mxu0 0.0
  %2418 = vmatprep.subr.mxu0 0.0
  %2419 = vmatpush1.msra.mxu0 0.0
  %2420 = vmatprep.subr.mxu0 0.0
  %2421 = vmatpush1.msra.mxu0 0.0
  %2422 = vmatprep.subr.mxu0 0.0
  %2423 = vmatpush1.msra.mxu0 0.0
  %2424 = vmatprep.subr.mxu0 0.0
  %2425 = vmatpush1.msra.mxu0 0.0
  %2426 = vmatprep.subr.mxu0 0.0
  %2427 = vmatpush1.msra.mxu0 0.0
  %2428 = vmatprep.subr.mxu0 0.0
  %2429 = vmatpush1.msra.mxu0 0.0
  %2430 = vmatprep.subr.mxu0 0.0
  %2431 = vmatpush1.msra.mxu0 0.0
  %2432 = vmatprep.subr.mxu0 0.0
  %2433 = vmatpush1.msra.mxu0 0.0
  %2434 = vmatprep.subr.mxu0 0.0
  %2435 = vmatpush1.msra.mxu0 0.0
  %2436 = vmatprep.subr.mxu0 0.0
  %2437 = vmatpush1.msra.mxu0 0.0
  %2438 = vmatprep.subr.mxu0 0.0
  %2439 = vmatpush1.msra.mxu0 0.0
  %2440 = vmatprep.subr.mxu0 0.0
  %2441 = vmatpush1.msra.mxu0 0.0
  %2442 = vmatprep.subr.mxu0 0.0
  %2443 = vmatpush1.msra.mxu0 0.0
  %2444 = vmatprep.subr.mxu0 0.0
  %2445 = vmatpush1.msra.mxu0 0.0
  %2446 = vmatprep.subr.mxu0 0.0
  %2447 = vmatpush1.msra.mxu0 0.0
  %2448 = vmatprep.subr.mxu0 0.0
  %2449 = vmatpush1.msra.mxu0 0.0
  %2450 = vmatprep.subr.mxu0 0.0
  %2451 = vmatpush1.msra.mxu0 0.0
  %2452 = vmatprep.subr.mxu0 0.0
  %2453 = vmatpush1.msra.mxu0 0.0
  %2454 = vmatprep.subr.mxu0 0.0
  %2455 = vmatpush1.msra.mxu0 0.0
  %2456 = vmatprep.mubr.f32.mxu0 0.0
  %2457 = vmatmul.mubr.f32.gmra.mrb[0].mxu0 %v2390
  %v2458 = vpop.f32.mrb[0].mxu0
  %v2459 = vadd.f32 0.0, %v2458
  %v2460 = vpop.f32.mrb[0].mxu0
  %2461 = vdwg.mxu0
  %v2463 = vsel %vm281, %v2388, 0
  %2465 = vmatprep.subr.mxu0 0.0
  %2466 = vmatpush1.msra.mxu0 %v2208
  %2467 = vmatprep.subr.mxu0 0.0
  %2468 = vmatpush1.msra.mxu0 0.0
  %2469 = vmatprep.subr.mxu0 0.0
  %2470 = vmatpush1.msra.mxu0 0.0
  %2471 = vmatprep.subr.mxu0 0.0
  %2472 = vmatpush1.msra.mxu0 0.0
  %2473 = vmatprep.subr.mxu0 0.0
  %2474 = vmatpush1.msra.mxu0 0.0
  %2475 = vmatprep.subr.mxu0 0.0
  %2476 = vmatpush1.msra.mxu0 0.0
  %2477 = vmatprep.subr.mxu0 0.0
  %2478 = vmatpush1.msra.mxu0 0.0
  %2479 = vmatprep.subr.mxu0 0.0
  %2480 = vmatpush1.msra.mxu0 0.0
  %2481 = vmatprep.subr.mxu0 0.0
  %2482 = vmatpush1.msra.mxu0 0.0
  %2483 = vmatprep.subr.mxu0 0.0
  %2484 = vmatpush1.msra.mxu0 0.0
  %2485 = vmatprep.subr.mxu0 0.0
  %2486 = vmatpush1.msra.mxu0 0.0
  %2487 = vmatprep.subr.mxu0 0.0
  %2488 = vmatpush1.msra.mxu0 0.0
  %2489 = vmatprep.subr.mxu0 0.0
  %2490 = vmatpush1.msra.mxu0 0.0
  %2491 = vmatprep.subr.mxu0 0.0
  %2492 = vmatpush1.msra.mxu0 0.0
  %2493 = vmatprep.subr.mxu0 0.0
  %2494 = vmatpush1.msra.mxu0 0.0
  %2495 = vmatprep.subr.mxu0 0.0
  %2496 = vmatpush1.msra.mxu0 0.0
  %2497 = vmatprep.subr.mxu0 0.0
  %2498 = vmatpush1.msra.mxu0 0.0
  %2499 = vmatprep.subr.mxu0 0.0
  %2500 = vmatpush1.msra.mxu0 0.0
  %2501 = vmatprep.subr.mxu0 0.0
  %2502 = vmatpush1.msra.mxu0 0.0
  %2503 = vmatprep.subr.mxu0 0.0
  %2504 = vmatpush1.msra.mxu0 0.0
  %2505 = vmatprep.subr.mxu0 0.0
  %2506 = vmatpush1.msra.mxu0 0.0
  %2507 = vmatprep.subr.mxu0 0.0
  %2508 = vmatpush1.msra.mxu0 0.0
  %2509 = vmatprep.subr.mxu0 0.0
  %2510 = vmatpush1.msra.mxu0 0.0
  %2511 = vmatprep.subr.mxu0 0.0
  %2512 = vmatpush1.msra.mxu0 0.0
  %2513 = vmatprep.subr.mxu0 0.0
  %2514 = vmatpush1.msra.mxu0 0.0
  %2515 = vmatprep.subr.mxu0 0.0
  %2516 = vmatpush1.msra.mxu0 0.0
  %2517 = vmatprep.subr.mxu0 0.0
  %2518 = vmatpush1.msra.mxu0 0.0
  %2519 = vmatprep.subr.mxu0 0.0
  %2520 = vmatpush1.msra.mxu0 0.0
  %2521 = vmatprep.subr.mxu0 0.0
  %2522 = vmatpush1.msra.mxu0 0.0
  %2523 = vmatprep.subr.mxu0 0.0
  %2524 = vmatpush1.msra.mxu0 0.0
  %2525 = vmatprep.subr.mxu0 0.0
  %2526 = vmatpush1.msra.mxu0 0.0
  %2527 = vmatprep.subr.mxu0 0.0
  %2528 = vmatpush1.msra.mxu0 0.0
  %2529 = vmatprep.mubr.f32.mxu0 0.0
  %2530 = vmatmul.mubr.f32.gmra.mrb[0].mxu0 %v2463
  %v2531 = vpop.f32.mrb[0].mxu0
  %v2532 = vadd.f32 0.0, %v2531
  %v2533 = vpop.f32.mrb[0].mxu0
  %2534 = vdwg.mxu0
  %s2535 = scalar_lea.vmem %s5, 24
  %v2536 = vld [vmem:[%s2535] sm:$0xff]
  %v2538 = vsel %vm281, %v2459, 0
  %v2541 = vsel %vm281, %v2532, 0
  %2543 = vmatprep.subr.mxu0 0.0
  %2544 = vmatpush1.msra.mxu0 %v2536
  %2545 = vmatprep.subr.mxu0 0.0
  %2546 = vmatpush1.msra.mxu0 0.0
  %2547 = vmatprep.subr.mxu0 0.0
  %2548 = vmatpush1.msra.mxu0 0.0
  %2549 = vmatprep.subr.mxu0 0.0
  %2550 = vmatpush1.msra.mxu0 0.0
  %2551 = vmatprep.subr.mxu0 0.0
  %2552 = vmatpush1.msra.mxu0 0.0
  %2553 = vmatprep.subr.mxu0 0.0
  %2554 = vmatpush1.msra.mxu0 0.0
  %2555 = vmatprep.subr.mxu0 0.0
  %2556 = vmatpush1.msra.mxu0 0.0
  %2557 = vmatprep.subr.mxu0 0.0
  %2558 = vmatpush1.msra.mxu0 0.0
  %2559 = vmatprep.subr.mxu0 0.0
  %2560 = vmatpush1.msra.mxu0 0.0
  %2561 = vmatprep.subr.mxu0 0.0
  %2562 = vmatpush1.msra.mxu0 0.0
  %2563 = vmatprep.subr.mxu0 0.0
  %2564 = vmatpush1.msra.mxu0 0.0
  %2565 = vmatprep.subr.mxu0 0.0
  %2566 = vmatpush1.msra.mxu0 0.0
  %2567 = vmatprep.subr.mxu0 0.0
  %2568 = vmatpush1.msra.mxu0 0.0
  %2569 = vmatprep.subr.mxu0 0.0
  %2570 = vmatpush1.msra.mxu0 0.0
  %2571 = vmatprep.subr.mxu0 0.0
  %2572 = vmatpush1.msra.mxu0 0.0
  %2573 = vmatprep.subr.mxu0 0.0
  %2574 = vmatpush1.msra.mxu0 0.0
  %2575 = vmatprep.subr.mxu0 0.0
  %2576 = vmatpush1.msra.mxu0 0.0
  %2577 = vmatprep.subr.mxu0 0.0
  %2578 = vmatpush1.msra.mxu0 0.0
  %2579 = vmatprep.subr.mxu0 0.0
  %2580 = vmatpush1.msra.mxu0 0.0
  %2581 = vmatprep.subr.mxu0 0.0
  %2582 = vmatpush1.msra.mxu0 0.0
  %2583 = vmatprep.subr.mxu0 0.0
  %2584 = vmatpush1.msra.mxu0 0.0
  %2585 = vmatprep.subr.mxu0 0.0
  %2586 = vmatpush1.msra.mxu0 0.0
  %2587 = vmatprep.subr.mxu0 0.0
  %2588 = vmatpush1.msra.mxu0 0.0
  %2589 = vmatprep.subr.mxu0 0.0
  %2590 = vmatpush1.msra.mxu0 0.0
  %2591 = vmatprep.subr.mxu0 0.0
  %2592 = vmatpush1.msra.mxu0 0.0
  %2593 = vmatprep.subr.mxu0 0.0
  %2594 = vmatpush1.msra.mxu0 0.0
  %2595 = vmatprep.subr.mxu0 0.0
  %2596 = vmatpush1.msra.mxu0 0.0
  %2597 = vmatprep.subr.mxu0 0.0
  %2598 = vmatpush1.msra.mxu0 0.0
  %2599 = vmatprep.subr.mxu0 0.0
  %2600 = vmatpush1.msra.mxu0 0.0
  %2601 = vmatprep.subr.mxu0 0.0
  %2602 = vmatpush1.msra.mxu0 0.0
  %2603 = vmatprep.subr.mxu0 0.0
  %2604 = vmatpush1.msra.mxu0 0.0
  %2605 = vmatprep.subr.mxu0 0.0
  %2606 = vmatpush1.msra.mxu0 0.0
  %2607 = vmatprep.mubr.f32.mxu0 0.0
  %2608 = vmatmul.mubr.f32.gmra.mrb[0].mxu0 %v2538
  %v2609 = vpop.f32.mrb[0].mxu0
  %v2610 = vadd.f32 0.0, %v2609
  %v2611 = vpop.f32.mrb[0].mxu0
  %2612 = vmatprep.mubr.f32.mxu0 0.0
  %2613 = vmatmul.mubr.f32.gmra.mrb[0].mxu0 %v2541
  %v2614 = vpop.f32.mrb[0].mxu0
  %v2615 = vadd.f32 0.0, %v2614
  %v2616 = vpop.f32.mrb[0].mxu0
  %2617 = vdwg.mxu0
  %v2618 = vadd.f32 %v1974, %v2610
  %v2619 = vadd.f32 %v1975, %v2615
  %v2620 = vadd.f32 %v2618, %v29
  %v2621 = vadd.f32 %v2619, %v30
  %v2622 = vsel %vm43, %v2620, 0.0
  %2623 = vadd.xlane.f32.xlu0 %v2622
  %v2624 = vpop.xlane.xlu0 %2623
  %v2625 = vsel %vm43, %v2621, 0.0
  %2626 = vadd.xlane.f32.xlu0 %v2625
  %v2627 = vpop.xlane.xlu0 %2626
  %v2628 = vrcp.pop 32.0
  %v2629 = vmul.f32 %v2624, %v2628
  %v2630 = vmul.f32 %v2627, %v2628
  %v2631 = vsub.f32 %v2620, %v2629
  %v2632 = vsub.f32 %v2621, %v2630
  %v2633 = vmul.f32 %v2631, %v2631
  %v2634 = vmul.f32 %v2632, %v2632
  %v2635 = vsel %vm43, %v2633, 0.0
  %2636 = vadd.xlane.f32.xlu0 %v2635
  %v2637 = vpop.xlane.xlu0 %2636
  %v2638 = vsel %vm43, %v2634, 0.0
  %2639 = vadd.xlane.f32.xlu0 %v2638
  %v2640 = vpop.xlane.xlu0 %2639
  %v2641 = vmul.f32 %v2637, %v2628
  %v2642 = vmul.f32 %v2640, %v2628
  %v2643 = vadd.f32 %v2641, 1e-05
  %v2644 = vadd.f32 %v2642, 1e-05
  %v2645 = vrsqrt.pop %v2643
  %v2646 = vrsqrt.pop %v2644
  %v2647 = vmul.f32 %v2631, %v2645
  %v2648 = vmul.f32 %v2632, %v2646
  %v2649 = vld [vmem:[%s6] sm:$0x1]
  %v2651 = vlaneseq
  %v2652 = vshrl.u32 %v2651, 7
  %v2653 = vsub.s32 0, %v2652
  %v2654 = vrot.slane %v2649, %v2653
  %v2656 = vmul.f32 %v2647, %v2654
  %v2657 = vmul.f32 %v2648, %v2654
  %v2658 = vld [vmem:[%s7] sm:$0x1]
  %v2660 = vlaneseq
  %v2661 = vshrl.u32 %v2660, 7
  %v2662 = vsub.s32 0, %v2661
  %v2663 = vrot.slane %v2658, %v2662
  %v2665 = vadd.f32 %v2656, %v2663
  %v2666 = vadd.f32 %v2657, %v2663
  %2667 = vst.msk [vmem:[%s8] sm:$0xff] %vm43, %v2665
  %2668 = vst.msk [vmem:[%s8 + $0x8] sm:$0xff] %vm43, %v2666
  // Predicated region
  $region34: #{transformer_forward.16} parent=0 // pred_check
    _
  $region35: #{transformer_forward.16} parent=0 // pred_check_branch
    %2670 = sbr.rel (0) target = $region37
  $region36: #{transformer_forward.16} parent=0 // pred_region
    _
  $region37: #{transformer_forward.16} parent=0 // pred_fallthru
    _
  // Predicated region
  $region38: #{transformer_forward.16} parent=0 // pred_check
    _
  $region39: #{transformer_forward.16} parent=0 // pred_check_branch
    %2672 = sbr.rel (0) target = $region41
  $region40: #{transformer_forward.16} parent=0 // pred_region
    _
  $region41: #{transformer_forward.16} parent=0 // pred_fallthru
    _

</llo_original>
